<compile_context>
chip_gen: v5e
topology: v5e:2x2
jax: 0.10.0
libtpu: 0.0.40
codegen_flags: <defaults>
</compile_context>

<pallas_src>
import jax
import jax.numpy as jnp
from jax.experimental import pallas as pl
from jax.experimental.pallas import tpu as pltpu  # noqa: F401  (TPU backend)

NV = 778          # number of MANO vertices
NJ = 16           # number of MANO joints (without finger tips)
NCOMP = 10        # number of PCA pose components used
NEW_ORDER = [0, 13, 14, 15, 16, 1, 2, 3, 17, 4, 5, 6, 18, 10, 11, 12, 19, 7, 8, 9, 20]
PARENT = [-1, 0, 1, 2, 0, 4, 5, 0, 7, 8, 0, 10, 11, 0, 13, 14]  # standard MANO kintree
TIP_VERT_IDX = [745, 317, 444, 556, 673]


# ----------------------------------------------------------------------------
# Pallas kernel 1: fused PCA->axis, shape blend (lane-dense), joint regression
# ----------------------------------------------------------------------------
def _fused_blend_kernel(pose_ref, comps_ref, mean_ref, shape_ref,
                        jsdirs_ref, jzero_ref, sdirs_ref, vtmpl_ref,
                        axis_ref, jtp_ref, vsh_ref):
    sh = shape_ref[...]                                            # (bs, 10)
    # PCA -> axis-angle (bs, 45)
    axis_ref[...] = (
        jnp.dot(pose_ref[...], comps_ref[...], preferred_element_type=jnp.float32)
        + mean_ref[...]
    )
    # T-pose joints via precomputed (J_regressor @ shapedirs): (bs, 48)
    jtp_ref[...] = (
        jnp.dot(sh, jsdirs_ref[...], preferred_element_type=jnp.float32)
        + jzero_ref[...]
    )
    # shape blend, one lane-dense (bs, 778) slab per xyz channel
    for c in range(3):
        vsh_ref[c] = (
            jnp.dot(sh, sdirs_ref[c], preferred_element_type=jnp.float32)
            + vtmpl_ref[c]                                          # (1,778) bcast
        )


def fused_blend(pose, comps, mean2d, shape, jsdirs_T, jzero2d, sdirs_c, vtmpl_c):
    bs, nc = pose.shape
    return pl.pallas_call(
        _fused_blend_kernel,
        out_shape=(
            jax.ShapeDtypeStruct((bs, 45), jnp.float32),        # axis-angle
            jax.ShapeDtypeStruct((bs, NJ * 3), jnp.float32),    # j_tpose flat
            jax.ShapeDtypeStruct((3, bs, NV), jnp.float32),     # v_shaped (xyz-major)
        ),
        grid=(1,),
        in_specs=[
            pl.BlockSpec((bs, nc), lambda i: (0, 0)),
            pl.BlockSpec((nc, 45), lambda i: (0, 0)),
            pl.BlockSpec((1, 45), lambda i: (0, 0)),
            pl.BlockSpec((bs, 10), lambda i: (0, 0)),
            pl.BlockSpec((10, NJ * 3), lambda i: (0, 0)),
            pl.BlockSpec((1, NJ * 3), lambda i: (0, 0)),
            pl.BlockSpec((3, 10, NV), lambda i: (0, 0, 0)),
            pl.BlockSpec((3, 1, NV), lambda i: (0, 0, 0)),
        ],
        out_specs=(
            pl.BlockSpec((bs, 45), lambda i: (0, 0)),
            pl.BlockSpec((bs, NJ * 3), lambda i: (0, 0)),
            pl.BlockSpec((3, bs, NV), lambda i: (0, 0, 0)),
        ),
    )(pose, comps, mean2d, shape, jsdirs_T, jzero2d, sdirs_c, vtmpl_c)


# ----------------------------------------------------------------------------
# Pallas kernel 2: fused pose blend + linear blend skinning (lane-dense 778)
# ----------------------------------------------------------------------------
def _pose_lbs_kernel(pf_ref, pdirs_ref, vsh_ref, wT_ref, se3T_ref, out_ref):
    pf = pf_ref[...]                                               # (bs, 135)
    wT = wT_ref[...]                                               # (16, 778)
    bs = pf.shape[0]

    # v_tpose per xyz channel, lane-dense (bs, 778)
    vt = [
        vsh_ref[c] + jnp.dot(pf, pdirs_ref[c], preferred_element_type=jnp.float32)
        for c in range(3)
    ]

    # blended per-vertex SE3 entries, lane-dense: A[b] has shape (16, 778),
    # row 4*r + c holds entry (r, c) of the blended 4x4 for every vertex.
    A = [
        jnp.dot(se3T_ref[b], wT, preferred_element_type=jnp.float32)
        for b in range(bs)
    ]

    # out[r, b, v] = A[4r+0]*x + A[4r+1]*y + A[4r+2]*z + A[4r+3]
    for r in range(3):
        rows = []
        for b in range(bs):
            rows.append(
                A[b][4 * r + 0:4 * r + 1] * vt[0][b:b + 1]
                + A[b][4 * r + 1:4 * r + 2] * vt[1][b:b + 1]
                + A[b][4 * r + 2:4 * r + 3] * vt[2][b:b + 1]
                + A[b][4 * r + 3:4 * r + 4]
            )
        out_ref[r] = jnp.concatenate(rows, axis=0)                 # (bs, 778)


def pose_blend_lbs(pose_feat, pdirs_c, v_shaped_c, weights_T, se3T):
    bs = pose_feat.shape[0]
    return pl.pallas_call(
        _pose_lbs_kernel,
        out_shape=jax.ShapeDtypeStruct((3, bs, NV), jnp.float32),
        grid=(1,),
        in_specs=[
            pl.BlockSpec((bs, 135), lambda i: (0, 0)),
            pl.BlockSpec((3, 135, NV), lambda i: (0, 0, 0)),
            pl.BlockSpec((3, bs, NV), lambda i: (0, 0, 0)),
            pl.BlockSpec((NJ, NV), lambda i: (0, 0)),
            pl.BlockSpec((bs, NJ, 16), lambda i: (0, 0, 0)),
        ],
        out_specs=pl.BlockSpec((3, bs, NV), lambda i: (0, 0, 0)),
    )(pose_feat, pdirs_c, v_shaped_c, weights_T, se3T)


# ----------------------------------------------------------------------------
# Plain-JAX glue (tiny / sequential pieces)
# ----------------------------------------------------------------------------
def rodrigues_batch(axis):
    # axis: (N, 3) -> (N, 3, 3); mirrors the PyTorch rodrigues_batch exactly.
    angle = jnp.sqrt(jnp.sum(axis * axis, axis=1, keepdims=True)) + 1e-8
    axes = axis / angle
    s = jnp.sin(angle)[:, :, None]
    c = jnp.cos(angle)[:, :, None]
    ax, ay, az = axes[:, 0], axes[:, 1], axes[:, 2]
    zeros = jnp.zeros_like(ax)
    L = jnp.stack(
        [
            jnp.stack([zeros, -az, ay], axis=1),
            jnp.stack([az, zeros, -ax], axis=1),
            jnp.stack([-ay, ax, zeros], axis=1),
        ],
        axis=1,
    )
    I = jnp.eye(3, dtype=axis.dtype)[None]
    return I + s * L + (1.0 - c) * jnp.matmul(L, L)


def build_se3_batch(R, t):
    bs = R.shape[0]
    pad = jnp.zeros((bs, 1, 4), dtype=R.dtype).at[:, 0, 3].set(1.0)
    return jnp.concatenate([jnp.concatenate([R, t], axis=2), pad], axis=1)


def se3_apply(SE3, v):
    bs = v.shape[0]
    vh = jnp.concatenate([v, jnp.ones((bs, 1), dtype=v.dtype)], axis=1)[:, :, None]
    return jnp.matmul(SE3, vh)[:, :3, 0]


# ----------------------------------------------------------------------------
# One-time buffer preparation (constant re-layouts of the MANO params)
# ----------------------------------------------------------------------------
def prepare_mano(params):
    shapedirs = params["shapedirs"]            # (NV, 3, 10)
    posedirs = params["posedirs"]              # (NV, 3, 135)
    v_template = params["v_template"]          # (NV, 3)
    J_regressor = params["J_regressor"]        # (16, NV)
    weights = params["weights"]                # (NV, 16)

    sdirs_c = jnp.transpose(shapedirs, (1, 2, 0))                # (3, 10, NV)
    pdirs_c = jnp.transpose(posedirs, (1, 2, 0))                 # (3, 135, NV)
    vtmpl_c = v_template.T.reshape(3, 1, NV)                     # (3, 1, NV)
    # J_regressor folded into the shape blend (exact, since it is linear):
    jsdirs_T = jnp.einsum("jv,vck->jck", J_regressor, shapedirs)
    jsdirs_T = jsdirs_T.reshape(NJ * 3, 10).T                    # (10, 48)
    jzero = jnp.matmul(J_regressor, v_template).reshape(1, NJ * 3)  # (1, 48)
    weights_T = weights.T                                        # (16, NV)

    return dict(
        hands_components=params["hands_components"],
        hands_mean2d=params["hands_mean"].reshape(1, 45),
        sdirs_c=sdirs_c,
        pdirs_c=pdirs_c,
        vtmpl_c=vtmpl_c,
        jsdirs_T=jsdirs_T,
        jzero=jzero,
        weights_T=weights_T,
    )


# ----------------------------------------------------------------------------
# MANO forward
# ----------------------------------------------------------------------------
def mano_forward(prep, root_rotation, pose, shape, trans=None, scale=None,
                 center_idx=9, use_pca=True, new_skel=False):
    bs = root_rotation.shape[0]

    if use_pca:
        comps = prep["hands_components"][: pose.shape[1]]
        pca_in = pose
    else:
        # rotation matrices supplied directly; feed zeros through the fused
        # kernel's PCA path (output ignored) to keep a single code path.
        comps = prep["hands_components"][:1]
        pca_in = jnp.zeros((bs, 1), jnp.float32)

    # --- fused PCA + shape blend + joint regression (Pallas, 1 launch) ---
    axis, jtp_flat, v_shaped_c = fused_blend(
        pca_in, comps, prep["hands_mean2d"], shape,
        prep["jsdirs_T"], prep["jzero"], prep["sdirs_c"], prep["vtmpl_c"])
    j_tpose = jtp_flat.reshape(bs, NJ, 3)                        # (bs, 16, 3)

    if use_pca:
        rotation_mat = rodrigues_batch(axis.reshape(-1, 3)).reshape(bs, 15, 3, 3)
    else:
        rotation_mat = pose

    I15 = jnp.broadcast_to(jnp.eye(3, dtype=jnp.float32), (bs, 15, 3, 3))
    pose_feat = (rotation_mat - I15).reshape(bs, 135)

    # --- sequential kinematic chain (tiny 4x4 matmuls, plain JAX) ---
    I3 = jnp.eye(3, dtype=jnp.float32)[None]
    SE3_list = []
    R = root_rotation
    t = jnp.matmul(I3 - R, j_tpose[:, 0][:, :, None])
    SE3_list.append(build_se3_batch(R, t))
    for i in range(1, 16):
        R = rotation_mat[:, i - 1]
        t = jnp.matmul(I3 - R, j_tpose[:, i][:, :, None])
        SE3_local = build_se3_batch(R, t)
        SE3_list.append(jnp.matmul(SE3_list[PARENT[i]], SE3_local))
    SE3_j = jnp.stack(SE3_list, axis=1)                          # (bs, 16, 4, 4)

    j_withoutTips = [j_tpose[:, 0]]
    for i in range(1, 16):
        j_withoutTips.append(se3_apply(SE3_j[:, PARENT[i]], j_tpose[:, i]))

    # --- fused pose blend + linear blend skinning (Pallas, 1 launch) ---
    se3T = jnp.swapaxes(SE3_j.reshape(bs, NJ, 16), 1, 2)         # (bs, 16, 16)
    vout_c = pose_blend_lbs(pose_feat, prep["pdirs_c"], v_shaped_c,
                            prep["weights_T"], se3T)             # (3, bs, 778)
    v_output = jnp.transpose(vout_c, (1, 2, 0))                  # (bs, 778, 3)

    # --- joints output ---
    jList = j_withoutTips + [v_output[:, idx] for idx in TIP_VERT_IDX]
    j_output = jnp.stack(jList, axis=1)                          # (bs, 21, 3)
    j_output = j_output[:, jnp.array(NEW_ORDER)]

    if center_idx is not None:
        center = j_output[:, center_idx:center_idx + 1]
        v_output = v_output - center
        j_output = j_output - center
    if scale is not None:
        s = scale[:, None, None]
        v_output = v_output * s
        j_output = j_output * s
    if trans is not None:
        tr = trans[:, None]
        v_output = v_output + tr
        j_output = j_output + tr
    if new_skel:
        j_output = j_output.at[:, 5].set((v_output[:, 63] + v_output[:, 144]) / 2)
        j_output = j_output.at[:, 9].set((v_output[:, 271] + v_output[:, 220]) / 2)
        j_output = j_output.at[:, 13].set((v_output[:, 148] + v_output[:, 290]) / 2)
        j_output = j_output.at[:, 17].set((v_output[:, 770] + v_output[:, 83]) / 2)
    return v_output, j_output


# ----------------------------------------------------------------------------
# Deterministic synthetic "MANO" parameters (shapes match the real pickle).
# ----------------------------------------------------------------------------
def init_mano_params(key):
    ks = jax.random.split(key, 8)
    hands_components = (jax.random.normal(ks[0], (45, 45), jnp.float32) * 0.1
                        + jnp.eye(45, dtype=jnp.float32))
    hands_mean = jax.random.normal(ks[1], (45,), jnp.float32) * 0.1
    shapedirs = jax.random.normal(ks[2], (NV, 3, 10), jnp.float32) * 0.01
    posedirs = jax.random.normal(ks[3], (NV, 3, 135), jnp.float32) * 0.001
    v_template = jax.random.normal(ks[4], (NV, 3), jnp.float32) * 0.05
    weights = jax.nn.softmax(jax.random.normal(ks[5], (NV, NJ), jnp.float32), axis=1)
    jr = jnp.abs(jax.random.normal(ks[6], (NJ, NV), jnp.float32))
    J_regressor = jr / jnp.sum(jr, axis=1, keepdims=True)
    return dict(
        hands_components=hands_components,
        hands_components_inv=jnp.linalg.inv(hands_components),  # unused in forward
        hands_mean=hands_mean,
        shapedirs=shapedirs,
        posedirs=posedirs,
        v_template=v_template,
        weights=weights,
        J_regressor=J_regressor,
        J_zero=jnp.matmul(J_regressor, v_template),              # unused in forward
    )


if __name__ == "__main__":
    key = jax.random.PRNGKey(0)
    keys = jax.random.split(key, 6)
    bs = 2

    params = init_mano_params(keys[0])
    prep = prepare_mano(params)

    root_axis = jax.random.normal(keys[1], (bs, 3), jnp.float32) * 0.3
    root_rotation = rodrigues_batch(root_axis)                   # (bs, 3, 3)
    pose = jax.random.normal(keys[2], (bs, NCOMP), jnp.float32) * 0.5
    shape = jax.random.normal(keys[3], (bs, 10), jnp.float32) * 0.5
    trans = jax.random.normal(keys[4], (bs, 3), jnp.float32) * 0.1
    scale = jax.random.uniform(keys[5], (bs,), jnp.float32, 0.8, 1.2)

    @jax.jit
    def fwd(root_rotation, pose, shape, trans, scale):
        return mano_forward(prep, root_rotation, pose, shape,
                            trans=trans, scale=scale,
                            center_idx=9, use_pca=True, new_skel=False)

    v_out, j_out = fwd(root_rotation, pose, shape, trans, scale)
    jax.block_until_ready((v_out, j_out))

    assert v_out.shape == (bs, NV, 3) and v_out.dtype == jnp.float32
    assert j_out.shape == (bs, 21, 3) and j_out.dtype == jnp.float32
    assert bool(jnp.all(jnp.isfinite(v_out))) and bool(jnp.all(jnp.isfinite(j_out)))
    print("KERNEL_OK")
</pallas_src>

<mosaic_0001>
module attributes {stable_mosaic.version = 11 : i64} {
  func.func @_fused_blend_kernel(%arg0: i32, %arg1: memref<2x10xf32, #tpu.memory_space<vmem>>, %arg2: memref<10x45xf32, #tpu.memory_space<vmem>>, %arg3: memref<1x45xf32, #tpu.memory_space<vmem>>, %arg4: memref<2x10xf32, #tpu.memory_space<vmem>>, %arg5: memref<10x48xf32, #tpu.memory_space<vmem>>, %arg6: memref<1x48xf32, #tpu.memory_space<vmem>>, %arg7: memref<3x10x778xf32, #tpu.memory_space<vmem>>, %arg8: memref<3x1x778xf32, #tpu.memory_space<vmem>>, %arg9: memref<2x45xf32, #tpu.memory_space<vmem>>, %arg10: memref<2x48xf32, #tpu.memory_space<vmem>>, %arg11: memref<3x2x778xf32, #tpu.memory_space<vmem>>) attributes {dimension_semantics = [#tpu.dimension_semantics<arbitrary>], iteration_bounds = array<i64: 1>, scalar_prefetch = 0 : i64, scratch_operands = 0 : i64, tpu.core_type = #tpu.core_type<tc>, window_params = [{pipeline_mode = #tpu.pipeline_mode<synchronous>, transform_indices = @transform_0, window_bounds = array<i64: 2, 10>}, {pipeline_mode = #tpu.pipeline_mode<synchronous>, transform_indices = @transform_1, window_bounds = array<i64: 10, 45>}, {pipeline_mode = #tpu.pipeline_mode<synchronous>, transform_indices = @transform_2, window_bounds = array<i64: 1, 45>}, {pipeline_mode = #tpu.pipeline_mode<synchronous>, transform_indices = @transform_3, window_bounds = array<i64: 2, 10>}, {pipeline_mode = #tpu.pipeline_mode<synchronous>, transform_indices = @transform_4, window_bounds = array<i64: 10, 48>}, {pipeline_mode = #tpu.pipeline_mode<synchronous>, transform_indices = @transform_5, window_bounds = array<i64: 1, 48>}, {pipeline_mode = #tpu.pipeline_mode<synchronous>, transform_indices = @transform_6, window_bounds = array<i64: 3, 10, 778>}, {pipeline_mode = #tpu.pipeline_mode<synchronous>, transform_indices = @transform_7, window_bounds = array<i64: 3, 1, 778>}, {pipeline_mode = #tpu.pipeline_mode<synchronous>, transform_indices = @transform_8, window_bounds = array<i64: 2, 45>}, {pipeline_mode = #tpu.pipeline_mode<synchronous>, transform_indices = @transform_9, window_bounds = array<i64: 2, 48>}, {pipeline_mode = #tpu.pipeline_mode<synchronous>, transform_indices = @transform_10, window_bounds = array<i64: 3, 2, 778>}]} {
    %c0 = arith.constant 0 : index
    %c0_0 = arith.constant 0 : index
    %0 = vector.load %arg4[%c0, %c0_0] : memref<2x10xf32, #tpu.memory_space<vmem>>, vector<2x10xf32>
    %c0_1 = arith.constant 0 : index
    %c0_2 = arith.constant 0 : index
    %1 = vector.load %arg1[%c0_1, %c0_2] : memref<2x10xf32, #tpu.memory_space<vmem>>, vector<2x10xf32>
    %c0_3 = arith.constant 0 : index
    %c0_4 = arith.constant 0 : index
    %2 = vector.load %arg2[%c0_3, %c0_4] : memref<10x45xf32, #tpu.memory_space<vmem>>, vector<10x45xf32>
    %cst = arith.constant dense<0.000000e+00> : vector<2x45xf32>
    %3 = tpu.matmul %1, %2, %cst {dimension_numbers = #tpu.dot_dimension_numbers<[1], [0], [0], [1], [0, 0, 1, 1], [], []>} : vector<2x10xf32>, vector<10x45xf32>, vector<2x45xf32> -> vector<2x45xf32>
    %c0_5 = arith.constant 0 : index
    %c0_6 = arith.constant 0 : index
    %4 = vector.load %arg3[%c0_5, %c0_6] : memref<1x45xf32, #tpu.memory_space<vmem>>, vector<1x45xf32>
    %5 = vector.broadcast %4 : vector<1x45xf32> to vector<2x45xf32>
    %6 = arith.addf %3, %5 : vector<2x45xf32>
    %c0_7 = arith.constant 0 : index
    %c0_8 = arith.constant 0 : index
    %7 = vector.load %arg9[%c0_7, %c0_8] : memref<2x45xf32, #tpu.memory_space<vmem>>, vector<2x45xf32>
    tpu.vector_store %arg9[%c0_7, %c0_8], %6 {strides = array<i32>} : memref<2x45xf32, #tpu.memory_space<vmem>>, vector<2x45xf32>,
    %c0_9 = arith.constant 0 : index
    %c0_10 = arith.constant 0 : index
    %8 = vector.load %arg5[%c0_9, %c0_10] : memref<10x48xf32, #tpu.memory_space<vmem>>, vector<10x48xf32>
    %cst_11 = arith.constant dense<0.000000e+00> : vector<2x48xf32>
    %9 = tpu.matmul %0, %8, %cst_11 {dimension_numbers = #tpu.dot_dimension_numbers<[1], [0], [0], [1], [0, 0, 1, 1], [], []>} : vector<2x10xf32>, vector<10x48xf32>, vector<2x48xf32> -> vector<2x48xf32>
    %c0_12 = arith.constant 0 : index
    %c0_13 = arith.constant 0 : index
    %10 = vector.load %arg6[%c0_12, %c0_13] : memref<1x48xf32, #tpu.memory_space<vmem>>, vector<1x48xf32>
    %11 = vector.broadcast %10 : vector<1x48xf32> to vector<2x48xf32>
    %12 = arith.addf %9, %11 : vector<2x48xf32>
    %c0_14 = arith.constant 0 : index
    %c0_15 = arith.constant 0 : index
    %13 = vector.load %arg10[%c0_14, %c0_15] : memref<2x48xf32, #tpu.memory_space<vmem>>, vector<2x48xf32>
    tpu.vector_store %arg10[%c0_14, %c0_15], %12 {strides = array<i32>} : memref<2x48xf32, #tpu.memory_space<vmem>>, vector<2x48xf32>,
    %c0_16 = arith.constant 0 : index
    %c0_17 = arith.constant 0 : index
    %c0_18 = arith.constant 0 : index
    %14 = vector.load %arg7[%c0_16, %c0_17, %c0_18] : memref<3x10x778xf32, #tpu.memory_space<vmem>>, vector<1x10x778xf32>
    %15 = vector.shape_cast %14 : vector<1x10x778xf32> to vector<10x778xf32>
    %cst_19 = arith.constant dense<0.000000e+00> : vector<2x778xf32>
    %16 = tpu.matmul %0, %15, %cst_19 {dimension_numbers = #tpu.dot_dimension_numbers<[1], [0], [0], [1], [0, 0, 1, 1], [], []>} : vector<2x10xf32>, vector<10x778xf32>, vector<2x778xf32> -> vector<2x778xf32>
    %c0_20 = arith.constant 0 : index
    %c0_21 = arith.constant 0 : index
    %c0_22 = arith.constant 0 : index
    %17 = vector.load %arg8[%c0_20, %c0_21, %c0_22] : memref<3x1x778xf32, #tpu.memory_space<vmem>>, vector<1x1x778xf32>
    %18 = vector.shape_cast %17 : vector<1x1x778xf32> to vector<1x778xf32>
    %19 = vector.broadcast %18 : vector<1x778xf32> to vector<2x778xf32>
    %20 = arith.addf %16, %19 : vector<2x778xf32>
    %c0_23 = arith.constant 0 : index
    %c0_24 = arith.constant 0 : index
    %c0_25 = arith.constant 0 : index
    %21 = vector.load %arg11[%c0_23, %c0_24, %c0_25] : memref<3x2x778xf32, #tpu.memory_space<vmem>>, vector<1x2x778xf32>
    %22 = vector.shape_cast %21 : vector<1x2x778xf32> to vector<2x778xf32>
    %23 = vector.shape_cast %20 : vector<2x778xf32> to vector<1x2x778xf32>
    tpu.vector_store %arg11[%c0_23, %c0_24, %c0_25], %23 {strides = array<i32>} : memref<3x2x778xf32, #tpu.memory_space<vmem>>, vector<1x2x778xf32>,
    %c1 = arith.constant 1 : index
    %c0_26 = arith.constant 0 : index
    %c0_27 = arith.constant 0 : index
    %24 = vector.load %arg7[%c1, %c0_26, %c0_27] : memref<3x10x778xf32, #tpu.memory_space<vmem>>, vector<1x10x778xf32>
    %25 = vector.shape_cast %24 : vector<1x10x778xf32> to vector<10x778xf32>
    %cst_28 = arith.constant dense<0.000000e+00> : vector<2x778xf32>
    %26 = tpu.matmul %0, %25, %cst_28 {dimension_numbers = #tpu.dot_dimension_numbers<[1], [0], [0], [1], [0, 0, 1, 1], [], []>} : vector<2x10xf32>, vector<10x778xf32>, vector<2x778xf32> -> vector<2x778xf32>
    %c1_29 = arith.constant 1 : index
    %c0_30 = arith.constant 0 : index
    %c0_31 = arith.constant 0 : index
    %27 = vector.load %arg8[%c1_29, %c0_30, %c0_31] : memref<3x1x778xf32, #tpu.memory_space<vmem>>, vector<1x1x778xf32>
    %28 = vector.shape_cast %27 : vector<1x1x778xf32> to vector<1x778xf32>
    %29 = vector.broadcast %28 : vector<1x778xf32> to vector<2x778xf32>
    %30 = arith.addf %26, %29 : vector<2x778xf32>
    %c1_32 = arith.constant 1 : index
    %c0_33 = arith.constant 0 : index
    %c0_34 = arith.constant 0 : index
    %31 = vector.load %arg11[%c1_32, %c0_33, %c0_34] : memref<3x2x778xf32, #tpu.memory_space<vmem>>, vector<1x2x778xf32>
    %32 = vector.shape_cast %31 : vector<1x2x778xf32> to vector<2x778xf32>
    %33 = vector.shape_cast %30 : vector<2x778xf32> to vector<1x2x778xf32>
    tpu.vector_store %arg11[%c1_32, %c0_33, %c0_34], %33 {strides = array<i32>} : memref<3x2x778xf32, #tpu.memory_space<vmem>>, vector<1x2x778xf32>,
    %c2 = arith.constant 2 : index
    %c0_35 = arith.constant 0 : index
    %c0_36 = arith.constant 0 : index
    %34 = vector.load %arg7[%c2, %c0_35, %c0_36] : memref<3x10x778xf32, #tpu.memory_space<vmem>>, vector<1x10x778xf32>
    %35 = vector.shape_cast %34 : vector<1x10x778xf32> to vector<10x778xf32>
    %cst_37 = arith.constant dense<0.000000e+00> : vector<2x778xf32>
    %36 = tpu.matmul %0, %35, %cst_37 {dimension_numbers = #tpu.dot_dimension_numbers<[1], [0], [0], [1], [0, 0, 1, 1], [], []>} : vector<2x10xf32>, vector<10x778xf32>, vector<2x778xf32> -> vector<2x778xf32>
    %c2_38 = arith.constant 2 : index
    %c0_39 = arith.constant 0 : index
    %c0_40 = arith.constant 0 : index
    %37 = vector.load %arg8[%c2_38, %c0_39, %c0_40] : memref<3x1x778xf32, #tpu.memory_space<vmem>>, vector<1x1x778xf32>
    %38 = vector.shape_cast %37 : vector<1x1x778xf32> to vector<1x778xf32>
    %39 = vector.broadcast %38 : vector<1x778xf32> to vector<2x778xf32>
    %40 = arith.addf %36, %39 : vector<2x778xf32>
    %c2_41 = arith.constant 2 : index
    %c0_42 = arith.constant 0 : index
    %c0_43 = arith.constant 0 : index
    %41 = vector.load %arg11[%c2_41, %c0_42, %c0_43] : memref<3x2x778xf32, #tpu.memory_space<vmem>>, vector<1x2x778xf32>
    %42 = vector.shape_cast %41 : vector<1x2x778xf32> to vector<2x778xf32>
    %43 = vector.shape_cast %40 : vector<2x778xf32> to vector<1x2x778xf32>
    tpu.vector_store %arg11[%c2_41, %c0_42, %c0_43], %43 {strides = array<i32>} : memref<3x2x778xf32, #tpu.memory_space<vmem>>, vector<1x2x778xf32>,
    return
  }
  func.func @transform_0(%arg0: i32) -> (i32, i32) {
    %c0_i32 = arith.constant 0 : i32
    %c0_i32_0 = arith.constant 0 : i32
    %c0_i32_1 = arith.constant 0 : i32
    return %c0_i32, %c0_i32_0 : i32, i32
  }
  func.func @transform_1(%arg0: i32) -> (i32, i32) {
    %c0_i32 = arith.constant 0 : i32
    %c0_i32_0 = arith.constant 0 : i32
    %c0_i32_1 = arith.constant 0 : i32
    return %c0_i32, %c0_i32_0 : i32, i32
  }
  func.func @transform_2(%arg0: i32) -> (i32, i32) {
    %c0_i32 = arith.constant 0 : i32
    %c0_i32_0 = arith.constant 0 : i32
    %c0_i32_1 = arith.constant 0 : i32
    return %c0_i32, %c0_i32_0 : i32, i32
  }
  func.func @transform_3(%arg0: i32) -> (i32, i32) {
    %c0_i32 = arith.constant 0 : i32
    %c0_i32_0 = arith.constant 0 : i32
    %c0_i32_1 = arith.constant 0 : i32
    return %c0_i32, %c0_i32_0 : i32, i32
  }
  func.func @transform_4(%arg0: i32) -> (i32, i32) {
    %c0_i32 = arith.constant 0 : i32
    %c0_i32_0 = arith.constant 0 : i32
    %c0_i32_1 = arith.constant 0 : i32
    return %c0_i32, %c0_i32_0 : i32, i32
  }
  func.func @transform_5(%arg0: i32) -> (i32, i32) {
    %c0_i32 = arith.constant 0 : i32
    %c0_i32_0 = arith.constant 0 : i32
    %c0_i32_1 = arith.constant 0 : i32
    return %c0_i32, %c0_i32_0 : i32, i32
  }
  func.func @transform_6(%arg0: i32) -> (i32, i32, i32) {
    %c0_i32 = arith.constant 0 : i32
    %c0_i32_0 = arith.constant 0 : i32
    %c0_i32_1 = arith.constant 0 : i32
    %c0_i32_2 = arith.constant 0 : i32
    return %c0_i32, %c0_i32_0, %c0_i32_1 : i32, i32, i32
  }
  func.func @transform_7(%arg0: i32) -> (i32, i32, i32) {
    %c0_i32 = arith.constant 0 : i32
    %c0_i32_0 = arith.constant 0 : i32
    %c0_i32_1 = arith.constant 0 : i32
    %c0_i32_2 = arith.constant 0 : i32
    return %c0_i32, %c0_i32_0, %c0_i32_1 : i32, i32, i32
  }
  func.func @transform_8(%arg0: i32) -> (i32, i32) {
    %c0_i32 = arith.constant 0 : i32
    %c0_i32_0 = arith.constant 0 : i32
    %c0_i32_1 = arith.constant 0 : i32
    return %c0_i32, %c0_i32_0 : i32, i32
  }
  func.func @transform_9(%arg0: i32) -> (i32, i32) {
    %c0_i32 = arith.constant 0 : i32
    %c0_i32_0 = arith.constant 0 : i32
    %c0_i32_1 = arith.constant 0 : i32
    return %c0_i32, %c0_i32_0 : i32, i32
  }
  func.func @transform_10(%arg0: i32) -> (i32, i32, i32) {
    %c0_i32 = arith.constant 0 : i32
    %c0_i32_0 = arith.constant 0 : i32
    %c0_i32_1 = arith.constant 0 : i32
    %c0_i32_2 = arith.constant 0 : i32
    return %c0_i32, %c0_i32_0, %c0_i32_1 : i32, i32, i32
  }
}

module attributes {stable_mosaic.version = 11 : i64} {
  func.func @_pose_lbs_kernel(%arg0: i32, %arg1: memref<2x135xf32, #tpu.memory_space<vmem>>, %arg2: memref<3x135x778xf32, #tpu.memory_space<vmem>>, %arg3: memref<3x2x778xf32, #tpu.memory_space<vmem>>, %arg4: memref<16x778xf32, #tpu.memory_space<vmem>>, %arg5: memref<2x16x16xf32, #tpu.memory_space<vmem>>, %arg6: memref<3x2x778xf32, #tpu.memory_space<vmem>>) attributes {dimension_semantics = [#tpu.dimension_semantics<arbitrary>], iteration_bounds = array<i64: 1>, scalar_prefetch = 0 : i64, scratch_operands = 0 : i64, tpu.core_type = #tpu.core_type<tc>, window_params = [{pipeline_mode = #tpu.pipeline_mode<synchronous>, transform_indices = @transform_0, window_bounds = array<i64: 2, 135>}, {pipeline_mode = #tpu.pipeline_mode<synchronous>, transform_indices = @transform_1, window_bounds = array<i64: 3, 135, 778>}, {pipeline_mode = #tpu.pipeline_mode<synchronous>, transform_indices = @transform_2, window_bounds = array<i64: 3, 2, 778>}, {pipeline_mode = #tpu.pipeline_mode<synchronous>, transform_indices = @transform_3, window_bounds = array<i64: 16, 778>}, {pipeline_mode = #tpu.pipeline_mode<synchronous>, transform_indices = @transform_4, window_bounds = array<i64: 2, 16, 16>}, {pipeline_mode = #tpu.pipeline_mode<synchronous>, transform_indices = @transform_5, window_bounds = array<i64: 3, 2, 778>}]} {
    %c0 = arith.constant 0 : index
    %c0_0 = arith.constant 0 : index
    %0 = vector.load %arg1[%c0, %c0_0] : memref<2x135xf32, #tpu.memory_space<vmem>>, vector<2x135xf32>
    %c0_1 = arith.constant 0 : index
    %c0_2 = arith.constant 0 : index
    %1 = vector.load %arg4[%c0_1, %c0_2] : memref<16x778xf32, #tpu.memory_space<vmem>>, vector<16x778xf32>
    %c0_3 = arith.constant 0 : index
    %c0_4 = arith.constant 0 : index
    %c0_5 = arith.constant 0 : index
    %2 = vector.load %arg3[%c0_3, %c0_4, %c0_5] : memref<3x2x778xf32, #tpu.memory_space<vmem>>, vector<1x2x778xf32>
    %3 = vector.shape_cast %2 : vector<1x2x778xf32> to vector<2x778xf32>
    %c0_6 = arith.constant 0 : index
    %c0_7 = arith.constant 0 : index
    %c0_8 = arith.constant 0 : index
    %4 = vector.load %arg2[%c0_6, %c0_7, %c0_8] : memref<3x135x778xf32, #tpu.memory_space<vmem>>, vector<1x135x778xf32>
    %5 = vector.shape_cast %4 : vector<1x135x778xf32> to vector<135x778xf32>
    %cst = arith.constant dense<0.000000e+00> : vector<2x778xf32>
    %6 = tpu.matmul %0, %5, %cst {dimension_numbers = #tpu.dot_dimension_numbers<[1], [0], [0], [1], [0, 0, 1, 1], [], []>} : vector<2x135xf32>, vector<135x778xf32>, vector<2x778xf32> -> vector<2x778xf32>
    %7 = arith.addf %3, %6 : vector<2x778xf32>
    %c1 = arith.constant 1 : index
    %c0_9 = arith.constant 0 : index
    %c0_10 = arith.constant 0 : index
    %8 = vector.load %arg3[%c1, %c0_9, %c0_10] : memref<3x2x778xf32, #tpu.memory_space<vmem>>, vector<1x2x778xf32>
    %9 = vector.shape_cast %8 : vector<1x2x778xf32> to vector<2x778xf32>
    %c1_11 = arith.constant 1 : index
    %c0_12 = arith.constant 0 : index
    %c0_13 = arith.constant 0 : index
    %10 = vector.load %arg2[%c1_11, %c0_12, %c0_13] : memref<3x135x778xf32, #tpu.memory_space<vmem>>, vector<1x135x778xf32>
    %11 = vector.shape_cast %10 : vector<1x135x778xf32> to vector<135x778xf32>
    %cst_14 = arith.constant dense<0.000000e+00> : vector<2x778xf32>
    %12 = tpu.matmul %0, %11, %cst_14 {dimension_numbers = #tpu.dot_dimension_numbers<[1], [0], [0], [1], [0, 0, 1, 1], [], []>} : vector<2x135xf32>, vector<135x778xf32>, vector<2x778xf32> -> vector<2x778xf32>
    %13 = arith.addf %9, %12 : vector<2x778xf32>
    %c2 = arith.constant 2 : index
    %c0_15 = arith.constant 0 : index
    %c0_16 = arith.constant 0 : index
    %14 = vector.load %arg3[%c2, %c0_15, %c0_16] : memref<3x2x778xf32, #tpu.memory_space<vmem>>, vector<1x2x778xf32>
    %15 = vector.shape_cast %14 : vector<1x2x778xf32> to vector<2x778xf32>
    %c2_17 = arith.constant 2 : index
    %c0_18 = arith.constant 0 : index
    %c0_19 = arith.constant 0 : index
    %16 = vector.load %arg2[%c2_17, %c0_18, %c0_19] : memref<3x135x778xf32, #tpu.memory_space<vmem>>, vector<1x135x778xf32>
    %17 = vector.shape_cast %16 : vector<1x135x778xf32> to vector<135x778xf32>
    %cst_20 = arith.constant dense<0.000000e+00> : vector<2x778xf32>
    %18 = tpu.matmul %0, %17, %cst_20 {dimension_numbers = #tpu.dot_dimension_numbers<[1], [0], [0], [1], [0, 0, 1, 1], [], []>} : vector<2x135xf32>, vector<135x778xf32>, vector<2x778xf32> -> vector<2x778xf32>
    %19 = arith.addf %15, %18 : vector<2x778xf32>
    %c0_21 = arith.constant 0 : index
    %c0_22 = arith.constant 0 : index
    %c0_23 = arith.constant 0 : index
    %20 = vector.load %arg5[%c0_21, %c0_22, %c0_23] : memref<2x16x16xf32, #tpu.memory_space<vmem>>, vector<1x16x16xf32>
    %21 = vector.shape_cast %20 : vector<1x16x16xf32> to vector<16x16xf32>
    %cst_24 = arith.constant dense<0.000000e+00> : vector<16x778xf32>
    %22 = tpu.matmul %21, %1, %cst_24 {dimension_numbers = #tpu.dot_dimension_numbers<[1], [0], [0], [1], [0, 0, 1, 1], [], []>} : vector<16x16xf32>, vector<16x778xf32>, vector<16x778xf32> -> vector<16x778xf32>
    %c1_25 = arith.constant 1 : index
    %c0_26 = arith.constant 0 : index
    %c0_27 = arith.constant 0 : index
    %23 = vector.load %arg5[%c1_25, %c0_26, %c0_27] : memref<2x16x16xf32, #tpu.memory_space<vmem>>, vector<1x16x16xf32>
    %24 = vector.shape_cast %23 : vector<1x16x16xf32> to vector<16x16xf32>
    %cst_28 = arith.constant dense<0.000000e+00> : vector<16x778xf32>
    %25 = tpu.matmul %24, %1, %cst_28 {dimension_numbers = #tpu.dot_dimension_numbers<[1], [0], [0], [1], [0, 0, 1, 1], [], []>} : vector<16x16xf32>, vector<16x778xf32>, vector<16x778xf32> -> vector<16x778xf32>
    %26 = vector.extract_strided_slice %22 {offsets = [0, 0], sizes = [1, 778], strides = [1, 1]} : vector<16x778xf32> to vector<1x778xf32>
    %27 = vector.extract_strided_slice %7 {offsets = [0, 0], sizes = [1, 778], strides = [1, 1]} : vector<2x778xf32> to vector<1x778xf32>
    %28 = arith.mulf %26, %27 : vector<1x778xf32>
    %29 = vector.extract_strided_slice %22 {offsets = [1, 0], sizes = [1, 778], strides = [1, 1]} : vector<16x778xf32> to vector<1x778xf32>
    %30 = vector.extract_strided_slice %13 {offsets = [0, 0], sizes = [1, 778], strides = [1, 1]} : vector<2x778xf32> to vector<1x778xf32>
    %31 = arith.mulf %29, %30 : vector<1x778xf32>
    %32 = arith.addf %28, %31 : vector<1x778xf32>
    %33 = vector.extract_strided_slice %22 {offsets = [2, 0], sizes = [1, 778], strides = [1, 1]} : vector<16x778xf32> to vector<1x778xf32>
    %34 = vector.extract_strided_slice %19 {offsets = [0, 0], sizes = [1, 778], strides = [1, 1]} : vector<2x778xf32> to vector<1x778xf32>
    %35 = arith.mulf %33, %34 : vector<1x778xf32>
    %36 = arith.addf %32, %35 : vector<1x778xf32>
    %37 = vector.extract_strided_slice %22 {offsets = [3, 0], sizes = [1, 778], strides = [1, 1]} : vector<16x778xf32> to vector<1x778xf32>
    %38 = arith.addf %36, %37 : vector<1x778xf32>
    %39 = vector.extract_strided_slice %25 {offsets = [0, 0], sizes = [1, 778], strides = [1, 1]} : vector<16x778xf32> to vector<1x778xf32>
    %40 = vector.extract_strided_slice %7 {offsets = [1, 0], sizes = [1, 778], strides = [1, 1]} : vector<2x778xf32> to vector<1x778xf32>
    %41 = arith.mulf %39, %40 : vector<1x778xf32>
    %42 = vector.extract_strided_slice %25 {offsets = [1, 0], sizes = [1, 778], strides = [1, 1]} : vector<16x778xf32> to vector<1x778xf32>
    %43 = vector.extract_strided_slice %13 {offsets = [1, 0], sizes = [1, 778], strides = [1, 1]} : vector<2x778xf32> to vector<1x778xf32>
    %44 = arith.mulf %42, %43 : vector<1x778xf32>
    %45 = arith.addf %41, %44 : vector<1x778xf32>
    %46 = vector.extract_strided_slice %25 {offsets = [2, 0], sizes = [1, 778], strides = [1, 1]} : vector<16x778xf32> to vector<1x778xf32>
    %47 = vector.extract_strided_slice %19 {offsets = [1, 0], sizes = [1, 778], strides = [1, 1]} : vector<2x778xf32> to vector<1x778xf32>
    %48 = arith.mulf %46, %47 : vector<1x778xf32>
    %49 = arith.addf %45, %48 : vector<1x778xf32>
    %50 = vector.extract_strided_slice %25 {offsets = [3, 0], sizes = [1, 778], strides = [1, 1]} : vector<16x778xf32> to vector<1x778xf32>
    %51 = arith.addf %49, %50 : vector<1x778xf32>
    %52 = tpu.concatenate %38, %51 in 0 : vector<1x778xf32>, vector<1x778xf32> -> vector<2x778xf32>
    %c0_29 = arith.constant 0 : index
    %c0_30 = arith.constant 0 : index
    %c0_31 = arith.constant 0 : index
    %53 = vector.load %arg6[%c0_29, %c0_30, %c0_31] : memref<3x2x778xf32, #tpu.memory_space<vmem>>, vector<1x2x778xf32>
    %54 = vector.shape_cast %53 : vector<1x2x778xf32> to vector<2x778xf32>
    %55 = vector.shape_cast %52 : vector<2x778xf32> to vector<1x2x778xf32>
    tpu.vector_store %arg6[%c0_29, %c0_30, %c0_31], %55 {strides = array<i32>} : memref<3x2x778xf32, #tpu.memory_space<vmem>>, vector<1x2x778xf32>,
    %56 = vector.extract_strided_slice %22 {offsets = [4, 0], sizes = [1, 778], strides = [1, 1]} : vector<16x778xf32> to vector<1x778xf32>
    %57 = vector.extract_strided_slice %7 {offsets = [0, 0], sizes = [1, 778], strides = [1, 1]} : vector<2x778xf32> to vector<1x778xf32>
    %58 = arith.mulf %56, %57 : vector<1x778xf32>
    %59 = vector.extract_strided_slice %22 {offsets = [5, 0], sizes = [1, 778], strides = [1, 1]} : vector<16x778xf32> to vector<1x778xf32>
    %60 = vector.extract_strided_slice %13 {offsets = [0, 0], sizes = [1, 778], strides = [1, 1]} : vector<2x778xf32> to vector<1x778xf32>
    %61 = arith.mulf %59, %60 : vector<1x778xf32>
    %62 = arith.addf %58, %61 : vector<1x778xf32>
    %63 = vector.extract_strided_slice %22 {offsets = [6, 0], sizes = [1, 778], strides = [1, 1]} : vector<16x778xf32> to vector<1x778xf32>
    %64 = vector.extract_strided_slice %19 {offsets = [0, 0], sizes = [1, 778], strides = [1, 1]} : vector<2x778xf32> to vector<1x778xf32>
    %65 = arith.mulf %63, %64 : vector<1x778xf32>
    %66 = arith.addf %62, %65 : vector<1x778xf32>
    %67 = vector.extract_strided_slice %22 {offsets = [7, 0], sizes = [1, 778], strides = [1, 1]} : vector<16x778xf32> to vector<1x778xf32>
    %68 = arith.addf %66, %67 : vector<1x778xf32>
    %69 = vector.extract_strided_slice %25 {offsets = [4, 0], sizes = [1, 778], strides = [1, 1]} : vector<16x778xf32> to vector<1x778xf32>
    %70 = vector.extract_strided_slice %7 {offsets = [1, 0], sizes = [1, 778], strides = [1, 1]} : vector<2x778xf32> to vector<1x778xf32>
    %71 = arith.mulf %69, %70 : vector<1x778xf32>
    %72 = vector.extract_strided_slice %25 {offsets = [5, 0], sizes = [1, 778], strides = [1, 1]} : vector<16x778xf32> to vector<1x778xf32>
    %73 = vector.extract_strided_slice %13 {offsets = [1, 0], sizes = [1, 778], strides = [1, 1]} : vector<2x778xf32> to vector<1x778xf32>
    %74 = arith.mulf %72, %73 : vector<1x778xf32>
    %75 = arith.addf %71, %74 : vector<1x778xf32>
    %76 = vector.extract_strided_slice %25 {offsets = [6, 0], sizes = [1, 778], strides = [1, 1]} : vector<16x778xf32> to vector<1x778xf32>
    %77 = vector.extract_strided_slice %19 {offsets = [1, 0], sizes = [1, 778], strides = [1, 1]} : vector<2x778xf32> to vector<1x778xf32>
    %78 = arith.mulf %76, %77 : vector<1x778xf32>
    %79 = arith.addf %75, %78 : vector<1x778xf32>
    %80 = vector.extract_strided_slice %25 {offsets = [7, 0], sizes = [1, 778], strides = [1, 1]} : vector<16x778xf32> to vector<1x778xf32>
    %81 = arith.addf %79, %80 : vector<1x778xf32>
    %82 = tpu.concatenate %68, %81 in 0 : vector<1x778xf32>, vector<1x778xf32> -> vector<2x778xf32>
    %c1_32 = arith.constant 1 : index
    %c0_33 = arith.constant 0 : index
    %c0_34 = arith.constant 0 : index
    %83 = vector.load %arg6[%c1_32, %c0_33, %c0_34] : memref<3x2x778xf32, #tpu.memory_space<vmem>>, vector<1x2x778xf32>
    %84 = vector.shape_cast %83 : vector<1x2x778xf32> to vector<2x778xf32>
    %85 = vector.shape_cast %82 : vector<2x778xf32> to vector<1x2x778xf32>
    tpu.vector_store %arg6[%c1_32, %c0_33, %c0_34], %85 {strides = array<i32>} : memref<3x2x778xf32, #tpu.memory_space<vmem>>, vector<1x2x778xf32>,
    %86 = vector.extract_strided_slice %22 {offsets = [8, 0], sizes = [1, 778], strides = [1, 1]} : vector<16x778xf32> to vector<1x778xf32>
    %87 = vector.extract_strided_slice %7 {offsets = [0, 0], sizes = [1, 778], strides = [1, 1]} : vector<2x778xf32> to vector<1x778xf32>
    %88 = arith.mulf %86, %87 : vector<1x778xf32>
    %89 = vector.extract_strided_slice %22 {offsets = [9, 0], sizes = [1, 778], strides = [1, 1]} : vector<16x778xf32> to vector<1x778xf32>
    %90 = vector.extract_strided_slice %13 {offsets = [0, 0], sizes = [1, 778], strides = [1, 1]} : vector<2x778xf32> to vector<1x778xf32>
    %91 = arith.mulf %89, %90 : vector<1x778xf32>
    %92 = arith.addf %88, %91 : vector<1x778xf32>
    %93 = vector.extract_strided_slice %22 {offsets = [10, 0], sizes = [1, 778], strides = [1, 1]} : vector<16x778xf32> to vector<1x778xf32>
    %94 = vector.extract_strided_slice %19 {offsets = [0, 0], sizes = [1, 778], strides = [1, 1]} : vector<2x778xf32> to vector<1x778xf32>
    %95 = arith.mulf %93, %94 : vector<1x778xf32>
    %96 = arith.addf %92, %95 : vector<1x778xf32>
    %97 = vector.extract_strided_slice %22 {offsets = [11, 0], sizes = [1, 778], strides = [1, 1]} : vector<16x778xf32> to vector<1x778xf32>
    %98 = arith.addf %96, %97 : vector<1x778xf32>
    %99 = vector.extract_strided_slice %25 {offsets = [8, 0], sizes = [1, 778], strides = [1, 1]} : vector<16x778xf32> to vector<1x778xf32>
    %100 = vector.extract_strided_slice %7 {offsets = [1, 0], sizes = [1, 778], strides = [1, 1]} : vector<2x778xf32> to vector<1x778xf32>
    %101 = arith.mulf %99, %100 : vector<1x778xf32>
    %102 = vector.extract_strided_slice %25 {offsets = [9, 0], sizes = [1, 778], strides = [1, 1]} : vector<16x778xf32> to vector<1x778xf32>
    %103 = vector.extract_strided_slice %13 {offsets = [1, 0], sizes = [1, 778], strides = [1, 1]} : vector<2x778xf32> to vector<1x778xf32>
    %104 = arith.mulf %102, %103 : vector<1x778xf32>
    %105 = arith.addf %101, %104 : vector<1x778xf32>
    %106 = vector.extract_strided_slice %25 {offsets = [10, 0], sizes = [1, 778], strides = [1, 1]} : vector<16x778xf32> to vector<1x778xf32>
    %107 = vector.extract_strided_slice %19 {offsets = [1, 0], sizes = [1, 778], strides = [1, 1]} : vector<2x778xf32> to vector<1x778xf32>
    %108 = arith.mulf %106, %107 : vector<1x778xf32>
    %109 = arith.addf %105, %108 : vector<1x778xf32>
    %110 = vector.extract_strided_slice %25 {offsets = [11, 0], sizes = [1, 778], strides = [1, 1]} : vector<16x778xf32> to vector<1x778xf32>
    %111 = arith.addf %109, %110 : vector<1x778xf32>
    %112 = tpu.concatenate %98, %111 in 0 : vector<1x778xf32>, vector<1x778xf32> -> vector<2x778xf32>
    %c2_35 = arith.constant 2 : index
    %c0_36 = arith.constant 0 : index
    %c0_37 = arith.constant 0 : index
    %113 = vector.load %arg6[%c2_35, %c0_36, %c0_37] : memref<3x2x778xf32, #tpu.memory_space<vmem>>, vector<1x2x778xf32>
    %114 = vector.shape_cast %113 : vector<1x2x778xf32> to vector<2x778xf32>
    %115 = vector.shape_cast %112 : vector<2x778xf32> to vector<1x2x778xf32>
    tpu.vector_store %arg6[%c2_35, %c0_36, %c0_37], %115 {strides = array<i32>} : memref<3x2x778xf32, #tpu.memory_space<vmem>>, vector<1x2x778xf32>,
    return
  }
  func.func @transform_0(%arg0: i32) -> (i32, i32) {
    %c0_i32 = arith.constant 0 : i32
    %c0_i32_0 = arith.constant 0 : i32
    %c0_i32_1 = arith.constant 0 : i32
    return %c0_i32, %c0_i32_0 : i32, i32
  }
  func.func @transform_1(%arg0: i32) -> (i32, i32, i32) {
    %c0_i32 = arith.constant 0 : i32
    %c0_i32_0 = arith.constant 0 : i32
    %c0_i32_1 = arith.constant 0 : i32
    %c0_i32_2 = arith.constant 0 : i32
    return %c0_i32, %c0_i32_0, %c0_i32_1 : i32, i32, i32
  }
  func.func @transform_2(%arg0: i32) -> (i32, i32, i32) {
    %c0_i32 = arith.constant 0 : i32
    %c0_i32_0 = arith.constant 0 : i32
    %c0_i32_1 = arith.constant 0 : i32
    %c0_i32_2 = arith.constant 0 : i32
    return %c0_i32, %c0_i32_0, %c0_i32_1 : i32, i32, i32
  }
  func.func @transform_3(%arg0: i32) -> (i32, i32) {
    %c0_i32 = arith.constant 0 : i32
    %c0_i32_0 = arith.constant 0 : i32
    %c0_i32_1 = arith.constant 0 : i32
    return %c0_i32, %c0_i32_0 : i32, i32
  }
  func.func @transform_4(%arg0: i32) -> (i32, i32, i32) {
    %c0_i32 = arith.constant 0 : i32
    %c0_i32_0 = arith.constant 0 : i32
    %c0_i32_1 = arith.constant 0 : i32
    %c0_i32_2 = arith.constant 0 : i32
    return %c0_i32, %c0_i32_0, %c0_i32_1 : i32, i32, i32
  }
  func.func @transform_5(%arg0: i32) -> (i32, i32, i32) {
    %c0_i32 = arith.constant 0 : i32
    %c0_i32_0 = arith.constant 0 : i32
    %c0_i32_1 = arith.constant 0 : i32
    %c0_i32_2 = arith.constant 0 : i32
    return %c0_i32, %c0_i32_0, %c0_i32_1 : i32, i32, i32
  }
}

</mosaic_0001>

<llo_original>
// kernel: fwd.2
$region0: #{fwd.2}
  #allocation0 [shape = 'u32[]', space=smem, size = 0x4, offset = 0x4, fixed_abs, tag = 'smem constant byte address 0x4 - core index']
  #allocation1 [shape = 'u32[72,128]{1,0:T(1,128)}', space=vmem, size = 0x9000, scoped, tag = 'internal scratch']
  %s0 = inlined_call_operand.hbm [shape: f32[2,10], index: 0, kind: input, shape index: {}]
  %s1 = inlined_call_operand.hbm [shape: f32[10,45], index: 1, kind: input, shape index: {}]
  %s2 = inlined_call_operand.hbm [shape: f32[1,45], index: 2, kind: input, shape index: {}]
  %s3 = inlined_call_operand.hbm [shape: f32[2,10], index: 3, kind: input, shape index: {}]
  %s4 = inlined_call_operand.hbm [shape: f32[10,48], index: 4, kind: input, shape index: {}]
  %s5 = inlined_call_operand.hbm [shape: f32[1,48], index: 5, kind: input, shape index: {}]
  %s6 = inlined_call_operand.hbm [shape: f32[3,10,778], index: 6, kind: input, shape index: {}]
  %s7 = inlined_call_operand.hbm [shape: f32[3,1,778], index: 7, kind: input, shape index: {}]
  %s8 = inlined_call_operand.vmem [shape: f32[2,45], index: 8, kind: output, shape index: {0}]
  %s9 = inlined_call_operand.vmem [shape: f32[2,48], index: 9, kind: output, shape index: {1}]
  %s10 = inlined_call_operand.vmem [shape: f32[3,2,778], index: 10, kind: output, shape index: {2}]
  %11 = xla_tuple %s8, %s9, %s10
  %s12 = sld [smem:[#allocation0]]
  $region90: #{fwd.2} parent=0
    _
  %s14 = ssub.s32 1, %s12
  %s15 = scalar_select 0, %s14, %s12
  $region1: #{fwd.2} parent=0
    #allocation2 [shape = 'u8[1024]{0}', space=vmem, size = 0x400, scoped, tag = 'input window, operand 0, single buffered']
    #allocation3 [shape = 's32[1]{0}', space=sflag, size = 0x4, scoped, tag = 'scoped memory for fwd.2']
    #allocation4 [shape = 'u8[8192]{0}', space=vmem, size = 0x2000, scoped, tag = 'input window, operand 1, single buffered']
    #allocation5 [shape = 's32[1]{0}', space=sflag, size = 0x4, scoped, tag = 'scoped memory for fwd.2']
    #allocation6 [shape = 'u8[512]{0}', space=vmem, size = 0x400, scoped, tag = 'input window, operand 2, single buffered']
    #allocation7 [shape = 'u8[1024]{0}', space=vmem, size = 0x400, scoped, tag = 'input window, operand 3, single buffered']
    #allocation8 [shape = 's32[1]{0}', space=sflag, size = 0x4, scoped, tag = 'scoped memory for fwd.2']
    #allocation9 [shape = 'u8[8192]{0}', space=vmem, size = 0x2000, scoped, tag = 'input window, operand 4, single buffered']
    #allocation10 [shape = 'u8[512]{0}', space=vmem, size = 0x400, scoped, tag = 'input window, operand 5, single buffered']
    #allocation11 [shape = 's32[1]{0}', space=sflag, size = 0x4, scoped, tag = 'scoped memory for fwd.2']
    #allocation12 [shape = 'u8[172032]{0}', space=vmem, size = 0x2a000, scoped, tag = 'input window, operand 6, single buffered']
    #allocation13 [shape = 'u8[10752]{0}', space=vmem, size = 0x2c00, scoped, tag = 'input window, operand 7, single buffered']
    #allocation14 [shape = 's32[1]{0}', space=sflag, size = 0x4, scoped, tag = 'scoped memory for fwd.2']
    %16 = vsyncpa [#allocation3], 0
    %17 = vsyncpa [#allocation5], 0
    %18 = vsyncpa [#allocation8], 0
    %19 = vsyncpa [#allocation11], 0
    %20 = vsyncpa [#allocation14], 0
    // Predicated region
    $region2: #{fwd.2} parent=1 // pred_check
      _
    $region3: #{fwd.2} parent=1 // pred_check_branch
      %22 = sbr.rel (0) target = $region5
    $region4: #{fwd.2} parent=1 // pred_region
      %24 = vsyncadd [#allocation3], 0
      %s26 = sshll.u32 %s0, 4
      %s27 = int_to_ptr.hbm [resolvable:$true] %s26
      %s28 = sshll.u32 [#allocation2], 4
      %s29 = int_to_ptr.vmem [resolvable:$true] %s28
      %31 = dma.hbm_to_vmem [thread:$0]  %s27, 32, %s29, [#allocation3]
    $region5: #{fwd.2} parent=1 // pred_fallthru
      _
    // Predicated region
    $region6: #{fwd.2} parent=1 // pred_check
      _
    $region7: #{fwd.2} parent=1 // pred_check_branch
      %33 = sbr.rel (0) target = $region9
    $region8: #{fwd.2} parent=1 // pred_region
      %35 = vsyncadd [#allocation5], 0
      %s36 = sshll.u32 %s1, 4
      %s37 = int_to_ptr.hbm [resolvable:$true] %s36
      %s38 = sshll.u32 [#allocation4], 4
      %s39 = int_to_ptr.vmem [resolvable:$true] %s38
      %44 = dma.hbm_to_vmem [thread:$0]  %s37, 256, %s39, [#allocation5], 128, 128, 8
    $region9: #{fwd.2} parent=1 // pred_fallthru
      _
    // Predicated region
    $region10: #{fwd.2} parent=1 // pred_check
      _
    $region11: #{fwd.2} parent=1 // pred_check_branch
      %46 = sbr.rel (0) target = $region13
    $region12: #{fwd.2} parent=1 // pred_region
      %48 = vsyncadd [#allocation5], 0
      %s50 = sshll.u32 %s2, 4
      %s51 = int_to_ptr.hbm [resolvable:$true] %s50
      %s52 = sshll.u32 [#allocation6], 4
      %s53 = int_to_ptr.vmem [resolvable:$true] %s52
      %55 = dma.hbm_to_vmem [thread:$0]  %s51, 16, %s53, [#allocation5]
    $region13: #{fwd.2} parent=1 // pred_fallthru
      _
    // Predicated region
    $region14: #{fwd.2} parent=1 // pred_check
      _
    $region15: #{fwd.2} parent=1 // pred_check_branch
      %57 = sbr.rel (0) target = $region17
    $region16: #{fwd.2} parent=1 // pred_region
      %59 = vsyncadd [#allocation8], 0
      %s61 = sshll.u32 %s3, 4
      %s62 = int_to_ptr.hbm [resolvable:$true] %s61
      %s63 = sshll.u32 [#allocation7], 4
      %s64 = int_to_ptr.vmem [resolvable:$true] %s63
      %66 = dma.hbm_to_vmem [thread:$0]  %s62, 32, %s64, [#allocation8]
    $region17: #{fwd.2} parent=1 // pred_fallthru
      _
    // Predicated region
    $region18: #{fwd.2} parent=1 // pred_check
      _
    $region19: #{fwd.2} parent=1 // pred_check_branch
      %68 = sbr.rel (0) target = $region21
    $region20: #{fwd.2} parent=1 // pred_region
      %70 = vsyncadd [#allocation8], 0
      %s71 = sshll.u32 %s4, 4
      %s72 = int_to_ptr.hbm [resolvable:$true] %s71
      %s73 = sshll.u32 [#allocation9], 4
      %s74 = int_to_ptr.vmem [resolvable:$true] %s73
      %79 = dma.hbm_to_vmem [thread:$0]  %s72, 256, %s74, [#allocation8], 128, 128, 8
    $region21: #{fwd.2} parent=1 // pred_fallthru
      _
    // Predicated region
    $region22: #{fwd.2} parent=1 // pred_check
      _
    $region23: #{fwd.2} parent=1 // pred_check_branch
      %81 = sbr.rel (0) target = $region25
    $region24: #{fwd.2} parent=1 // pred_region
      %83 = vsyncadd [#allocation11], 0
      %s85 = sshll.u32 %s5, 4
      %s86 = int_to_ptr.hbm [resolvable:$true] %s85
      %s87 = sshll.u32 [#allocation10], 4
      %s88 = int_to_ptr.vmem [resolvable:$true] %s87
      %90 = dma.hbm_to_vmem [thread:$0]  %s86, 16, %s88, [#allocation11]
    $region25: #{fwd.2} parent=1 // pred_fallthru
      _
    // Predicated region
    $region26: #{fwd.2} parent=1 // pred_check
      _
    $region27: #{fwd.2} parent=1 // pred_check_branch
      %92 = sbr.rel (0) target = $region29
    $region28: #{fwd.2} parent=1 // pred_region
      %94 = vsyncadd [#allocation11], 0
      %s95 = sshll.u32 %s6, 4
      %s96 = int_to_ptr.hbm [resolvable:$true] %s95
      %s97 = sshll.u32 [#allocation12], 4
      %s98 = int_to_ptr.vmem [resolvable:$true] %s97
      %103 = dma.hbm_to_vmem [thread:$0]  %s96, 5376, %s98, [#allocation11], 896, 896, 56
    $region29: #{fwd.2} parent=1 // pred_fallthru
      _
    // Predicated region
    $region30: #{fwd.2} parent=1 // pred_check
      _
    $region31: #{fwd.2} parent=1 // pred_check_branch
      %105 = sbr.rel (0) target = $region33
    $region32: #{fwd.2} parent=1 // pred_region
      %107 = vsyncadd [#allocation14], 0
      %s108 = sshll.u32 %s7, 4
      %s109 = int_to_ptr.hbm [resolvable:$true] %s108
      %s110 = sshll.u32 [#allocation13], 4
      %s111 = int_to_ptr.vmem [resolvable:$true] %s110
      %116 = dma.hbm_to_vmem [thread:$0]  %s109, 336, %s111, [#allocation14], 112, 112, 7
    $region33: #{fwd.2} parent=1 // pred_fallthru
      _
    // Predicated region
    $region34: #{fwd.2} parent=1 // pred_check
      _
    $region35: #{fwd.2} parent=1 // pred_check_branch
      %118 = sbr.rel (0) target = $region37
    $region36: #{fwd.2} parent=1 // pred_region
      %120 = dma.done [#allocation3], 32
    $region37: #{fwd.2} parent=1 // pred_fallthru
      _
    // Predicated region
    $region38: #{fwd.2} parent=1 // pred_check
      _
    $region39: #{fwd.2} parent=1 // pred_check_branch
      %122 = sbr.rel (0) target = $region41
    $region40: #{fwd.2} parent=1 // pred_region
      %124 = dma.done [#allocation5], 256
    $region41: #{fwd.2} parent=1 // pred_fallthru
      _
    // Predicated region
    $region42: #{fwd.2} parent=1 // pred_check
      _
    $region43: #{fwd.2} parent=1 // pred_check_branch
      %126 = sbr.rel (0) target = $region45
    $region44: #{fwd.2} parent=1 // pred_region
      %128 = dma.done [#allocation5], 16
    $region45: #{fwd.2} parent=1 // pred_fallthru
      _
    // Predicated region
    $region46: #{fwd.2} parent=1 // pred_check
      _
    $region47: #{fwd.2} parent=1 // pred_check_branch
      %130 = sbr.rel (0) target = $region49
    $region48: #{fwd.2} parent=1 // pred_region
      %132 = dma.done [#allocation8], 32
    $region49: #{fwd.2} parent=1 // pred_fallthru
      _
    // Predicated region
    $region50: #{fwd.2} parent=1 // pred_check
      _
    $region51: #{fwd.2} parent=1 // pred_check_branch
      %134 = sbr.rel (0) target = $region53
    $region52: #{fwd.2} parent=1 // pred_region
      %136 = dma.done [#allocation8], 256
    $region53: #{fwd.2} parent=1 // pred_fallthru
      _
    // Predicated region
    $region54: #{fwd.2} parent=1 // pred_check
      _
    $region55: #{fwd.2} parent=1 // pred_check_branch
      %138 = sbr.rel (0) target = $region57
    $region56: #{fwd.2} parent=1 // pred_region
      %140 = dma.done [#allocation11], 16
    $region57: #{fwd.2} parent=1 // pred_fallthru
      _
    // Predicated region
    $region58: #{fwd.2} parent=1 // pred_check
      _
    $region59: #{fwd.2} parent=1 // pred_check_branch
      %142 = sbr.rel (0) target = $region61
    $region60: #{fwd.2} parent=1 // pred_region
      %144 = dma.done [#allocation11], 5376
    $region61: #{fwd.2} parent=1 // pred_fallthru
      _
    // Predicated region
    $region62: #{fwd.2} parent=1 // pred_check
      _
    $region63: #{fwd.2} parent=1 // pred_check_branch
      %146 = sbr.rel (0) target = $region65
    $region64: #{fwd.2} parent=1 // pred_region
      %148 = dma.done [#allocation14], 336
    $region65: #{fwd.2} parent=1 // pred_fallthru
      _
    %v149 = vld [vmem:[#allocation7] sm:$0x3]
    %v150 = vld [vmem:[#allocation2] sm:$0x3]
    %v151 = vld [vmem:[#allocation4] sm:$0xff]
    %v152 = vld [vmem:[#allocation4 + $0x8] sm:$0x3]
    %v153 = vld [vmem:[#allocation6] sm:$0x1]
    %v155 = vperm.slane %v153, 0
    %vm157 = vcmask 80896
    %v159 = vsel %vm157, %v150, 0
    %vm161 = vcmask 1041408
    %v163 = vsel %vm161, %v152, 0
    %165 = vmatpush.msra.mxu0 0.0
    %166 = vmatpush.msra.mxu0 0.0
    %167 = vmatpush.msra.mxu0 0.0
    %168 = vmatpush.msra.mxu0 0.0
    %169 = vmatpush.msra.mxu0 0.0
    %170 = vmatpush.msra.mxu0 0.0
    %171 = vmatpush.msra.mxu0 0.0
    %172 = vmatpush.msra.mxu0 0.0
    %173 = vmatpush.msra.mxu0 0.0
    %174 = vmatpush.msra.mxu0 0.0
    %175 = vmatpush.msra.mxu0 0.0
    %176 = vmatpush.msra.mxu0 0.0
    %177 = vmatpush.msra.mxu0 0.0
    %178 = vmatpush.msra.mxu0 0.0
    %179 = vmatpush.msra.mxu0 %v163
    %180 = vmatpush.msra.mxu0 %v151
    %181 = vmatmul.f32.gmra.mxu0 %v159
    %v182 = vpop.f32.mrf.mxu0
    %v183 = vadd.f32 %v155, %v182
    %184 = vdwg.mxu0
    %vm185 = vcmask 361472
    %186 = vst.msk [vmem:[%s8] sm:$0x3] %vm185, %v183
    %v187 = vld [vmem:[#allocation9] sm:$0xff]
    %v188 = vld [vmem:[#allocation9 + $0x8] sm:$0x3]
    %v189 = vld [vmem:[#allocation10] sm:$0x1]
    %v191 = vperm.slane %v189, 0
    %v194 = vsel %vm157, %v149, 0
    %v197 = vsel %vm161, %v188, 0
    %199 = vmatpush.msra.mxu0 0.0
    %200 = vmatpush.msra.mxu0 0.0
    %201 = vmatpush.msra.mxu0 0.0
    %202 = vmatpush.msra.mxu0 0.0
    %203 = vmatpush.msra.mxu0 0.0
    %204 = vmatpush.msra.mxu0 0.0
    %205 = vmatpush.msra.mxu0 0.0
    %206 = vmatpush.msra.mxu0 0.0
    %207 = vmatpush.msra.mxu0 0.0
    %208 = vmatpush.msra.mxu0 0.0
    %209 = vmatpush.msra.mxu0 0.0
    %210 = vmatpush.msra.mxu0 0.0
    %211 = vmatpush.msra.mxu0 0.0
    %212 = vmatpush.msra.mxu0 0.0
    %213 = vmatpush.msra.mxu0 %v197
    %214 = vmatpush.msra.mxu0 %v187
    %215 = vmatmul.f32.gmra.mxu0 %v194
    %v216 = vpop.f32.mrf.mxu0
    %v217 = vadd.f32 %v191, %v216
    %218 = vdwg.mxu0
    %vm219 = vcmask 386048
    %220 = vst.msk [vmem:[%s9] sm:$0x3] %vm219, %v217
    %v221 = vld [vmem:[#allocation12] sm:$0xff]
    %v222 = vld [vmem:[#allocation12 + $0x8] sm:$0xff]
    %v223 = vld [vmem:[#allocation12 + $0x10] sm:$0xff]
    %v224 = vld [vmem:[#allocation12 + $0x18] sm:$0xff]
    %v225 = vld [vmem:[#allocation12 + $0x20] sm:$0xff]
    %v226 = vld [vmem:[#allocation12 + $0x28] sm:$0xff]
    %v227 = vld [vmem:[#allocation12 + $0x30] sm:$0xff]
    %v228 = vld [vmem:[#allocation12 + $0x38] sm:$0x3]
    %v229 = vld [vmem:[#allocation12 + $0x40] sm:$0x3]
    %v230 = vld [vmem:[#allocation12 + $0x48] sm:$0x3]
    %v231 = vld [vmem:[#allocation12 + $0x50] sm:$0x3]
    %v232 = vld [vmem:[#allocation12 + $0x58] sm:$0x3]
    %v233 = vld [vmem:[#allocation12 + $0x60] sm:$0x3]
    %v234 = vld [vmem:[#allocation12 + $0x68] sm:$0x3]
    %v235 = vld [vmem:[#allocation13] sm:$0x7f]
    %v237 = vperm.slane %v235, 0
    %v238 = vperm.slane %v235, 1
    %v239 = vperm.slane %v235, 2
    %v240 = vperm.slane %v235, 3
    %v241 = vperm.slane %v235, 4
    %v242 = vperm.slane %v235, 5
    %v243 = vperm.slane %v235, 6
    %v252 = vsel %vm161, %v228, 0
    %v255 = vsel %vm161, %v229, 0
    %v258 = vsel %vm161, %v230, 0
    %v261 = vsel %vm161, %v231, 0
    %v264 = vsel %vm161, %v232, 0
    %v267 = vsel %vm161, %v233, 0
    %v270 = vsel %vm161, %v234, 0
    %272 = vmatpush.msra.mxu0 0.0
    %273 = vmatpush.msra.mxu0 0.0
    %274 = vmatpush.msra.mxu0 0.0
    %275 = vmatpush.msra.mxu0 0.0
    %276 = vmatpush.msra.mxu0 0.0
    %277 = vmatpush.msra.mxu0 0.0
    %278 = vmatpush.msra.mxu0 0.0
    %279 = vmatpush.msra.mxu0 0.0
    %280 = vmatpush.msra.mxu0 0.0
    %281 = vmatpush.msra.mxu0 0.0
    %282 = vmatpush.msra.mxu0 0.0
    %283 = vmatpush.msra.mxu0 0.0
    %284 = vmatpush.msra.mxu0 0.0
    %285 = vmatpush.msra.mxu0 0.0
    %286 = vmatpush.msra.mxu0 %v252
    %287 = vmatpush.msra.mxu0 %v221
    %288 = vmatmul.f32.gmra.mxu0 %v194
    %v289 = vpop.f32.mrf.mxu0
    %v290 = vadd.f32 %v237, %v289
    %291 = vdwg.mxu0
    %292 = vmatpush.msra.mxu0 0.0
    %293 = vmatpush.msra.mxu0 0.0
    %294 = vmatpush.msra.mxu0 0.0
    %295 = vmatpush.msra.mxu0 0.0
    %296 = vmatpush.msra.mxu0 0.0
    %297 = vmatpush.msra.mxu0 0.0
    %298 = vmatpush.msra.mxu0 0.0
    %299 = vmatpush.msra.mxu0 0.0
    %300 = vmatpush.msra.mxu0 0.0
    %301 = vmatpush.msra.mxu0 0.0
    %302 = vmatpush.msra.mxu0 0.0
    %303 = vmatpush.msra.mxu0 0.0
    %304 = vmatpush.msra.mxu0 0.0
    %305 = vmatpush.msra.mxu0 0.0
    %306 = vmatpush.msra.mxu0 %v255
    %307 = vmatpush.msra.mxu0 %v222
    %308 = vmatmul.f32.gmra.mxu0 %v194
    %v309 = vpop.f32.mrf.mxu0
    %v310 = vadd.f32 %v238, %v309
    %311 = vdwg.mxu0
    %312 = vmatpush.msra.mxu0 0.0
    %313 = vmatpush.msra.mxu0 0.0
    %314 = vmatpush.msra.mxu0 0.0
    %315 = vmatpush.msra.mxu0 0.0
    %316 = vmatpush.msra.mxu0 0.0
    %317 = vmatpush.msra.mxu0 0.0
    %318 = vmatpush.msra.mxu0 0.0
    %319 = vmatpush.msra.mxu0 0.0
    %320 = vmatpush.msra.mxu0 0.0
    %321 = vmatpush.msra.mxu0 0.0
    %322 = vmatpush.msra.mxu0 0.0
    %323 = vmatpush.msra.mxu0 0.0
    %324 = vmatpush.msra.mxu0 0.0
    %325 = vmatpush.msra.mxu0 0.0
    %326 = vmatpush.msra.mxu0 %v258
    %327 = vmatpush.msra.mxu0 %v223
    %328 = vmatmul.f32.gmra.mxu0 %v194
    %v329 = vpop.f32.mrf.mxu0
    %v330 = vadd.f32 %v239, %v329
    %331 = vdwg.mxu0
    %332 = vmatpush.msra.mxu0 0.0
    %333 = vmatpush.msra.mxu0 0.0
    %334 = vmatpush.msra.mxu0 0.0
    %335 = vmatpush.msra.mxu0 0.0
    %336 = vmatpush.msra.mxu0 0.0
    %337 = vmatpush.msra.mxu0 0.0
    %338 = vmatpush.msra.mxu0 0.0
    %339 = vmatpush.msra.mxu0 0.0
    %340 = vmatpush.msra.mxu0 0.0
    %341 = vmatpush.msra.mxu0 0.0
    %342 = vmatpush.msra.mxu0 0.0
    %343 = vmatpush.msra.mxu0 0.0
    %344 = vmatpush.msra.mxu0 0.0
    %345 = vmatpush.msra.mxu0 0.0
    %346 = vmatpush.msra.mxu0 %v261
    %347 = vmatpush.msra.mxu0 %v224
    %348 = vmatmul.f32.gmra.mxu0 %v194
    %v349 = vpop.f32.mrf.mxu0
    %v350 = vadd.f32 %v240, %v349
    %351 = vdwg.mxu0
    %352 = vmatpush.msra.mxu0 0.0
    %353 = vmatpush.msra.mxu0 0.0
    %354 = vmatpush.msra.mxu0 0.0
    %355 = vmatpush.msra.mxu0 0.0
    %356 = vmatpush.msra.mxu0 0.0
    %357 = vmatpush.msra.mxu0 0.0
    %358 = vmatpush.msra.mxu0 0.0
    %359 = vmatpush.msra.mxu0 0.0
    %360 = vmatpush.msra.mxu0 0.0
    %361 = vmatpush.msra.mxu0 0.0
    %362 = vmatpush.msra.mxu0 0.0
    %363 = vmatpush.msra.mxu0 0.0
    %364 = vmatpush.msra.mxu0 0.0
    %365 = vmatpush.msra.mxu0 0.0
    %366 = vmatpush.msra.mxu0 %v264
    %367 = vmatpush.msra.mxu0 %v225
    %368 = vmatmul.f32.gmra.mxu0 %v194
    %v369 = vpop.f32.mrf.mxu0
    %v370 = vadd.f32 %v241, %v369
    %371 = vdwg.mxu0
    %372 = vmatpush.msra.mxu0 0.0
    %373 = vmatpush.msra.mxu0 0.0
    %374 = vmatpush.msra.mxu0 0.0
    %375 = vmatpush.msra.mxu0 0.0
    %376 = vmatpush.msra.mxu0 0.0
    %377 = vmatpush.msra.mxu0 0.0
    %378 = vmatpush.msra.mxu0 0.0
    %379 = vmatpush.msra.mxu0 0.0
    %380 = vmatpush.msra.mxu0 0.0
    %381 = vmatpush.msra.mxu0 0.0
    %382 = vmatpush.msra.mxu0 0.0
    %383 = vmatpush.msra.mxu0 0.0
    %384 = vmatpush.msra.mxu0 0.0
    %385 = vmatpush.msra.mxu0 0.0
    %386 = vmatpush.msra.mxu0 %v267
    %387 = vmatpush.msra.mxu0 %v226
    %388 = vmatmul.f32.gmra.mxu0 %v194
    %v389 = vpop.f32.mrf.mxu0
    %v390 = vadd.f32 %v242, %v389
    %391 = vdwg.mxu0
    %392 = vmatpush.msra.mxu0 0.0
    %393 = vmatpush.msra.mxu0 0.0
    %394 = vmatpush.msra.mxu0 0.0
    %395 = vmatpush.msra.mxu0 0.0
    %396 = vmatpush.msra.mxu0 0.0
    %397 = vmatpush.msra.mxu0 0.0
    %398 = vmatpush.msra.mxu0 0.0
    %399 = vmatpush.msra.mxu0 0.0
    %400 = vmatpush.msra.mxu0 0.0
    %401 = vmatpush.msra.mxu0 0.0
    %402 = vmatpush.msra.mxu0 0.0
    %403 = vmatpush.msra.mxu0 0.0
    %404 = vmatpush.msra.mxu0 0.0
    %405 = vmatpush.msra.mxu0 0.0
    %406 = vmatpush.msra.mxu0 %v270
    %407 = vmatpush.msra.mxu0 %v227
    %408 = vmatmul.f32.gmra.mxu0 %v194
    %v409 = vpop.f32.mrf.mxu0
    %v410 = vadd.f32 %v243, %v409
    %411 = vdwg.mxu0
    %v419 = vrot.slane %v310, 6
    %v420 = vrot.slane %v330, 4
    %v421 = vrot.slane %v350, 2
    %v422 = vrot.slane %v390, 6
    %v423 = vrot.slane %v410, 4
    %v424 = vsel %vm161, %v290, %v419
    %vm425 = vcmask 1045508
    %v426 = vsel %vm425, %v420, %v421
    %vm427 = vcmask 1043456
    %v428 = vsel %vm427, %v424, %v426
    %v429 = vsel %vm161, %v370, %v422
    %v430 = vsel %vm427, %v429, %v423
    %433 = vst [vmem:[%s10] sm:$0xff] %v428
    %vm434 = vcmask 1043458
    %vm435 = vmor %vm434, %vm161
    %vm436 = vcmask 78852
    %vm437 = vmor %vm436, %vm435
    %438 = vst.msk [vmem:[%s10 + $0x8] sm:$0x3f] %vm437, %v430
    %s439 = scalar_lea.vmem [#allocation12], 112
    %v440 = vld [vmem:[%s439] sm:$0xff]
    %v441 = vld [vmem:[%s439 + $0x8] sm:$0xff]
    %v442 = vld [vmem:[%s439 + $0x10] sm:$0xff]
    %v443 = vld [vmem:[%s439 + $0x18] sm:$0xff]
    %v444 = vld [vmem:[%s439 + $0x20] sm:$0xff]
    %v445 = vld [vmem:[%s439 + $0x28] sm:$0xff]
    %v446 = vld [vmem:[%s439 + $0x30] sm:$0xff]
    %v447 = vld [vmem:[%s439 + $0x38] sm:$0x3]
    %v448 = vld [vmem:[%s439 + $0x40] sm:$0x3]
    %v449 = vld [vmem:[%s439 + $0x48] sm:$0x3]
    %v450 = vld [vmem:[%s439 + $0x50] sm:$0x3]
    %v451 = vld [vmem:[%s439 + $0x58] sm:$0x3]
    %v452 = vld [vmem:[%s439 + $0x60] sm:$0x3]
    %v453 = vld [vmem:[%s439 + $0x68] sm:$0x3]
    %s454 = scalar_lea.vmem [#allocation13], 7
    %v455 = vld [vmem:[%s454] sm:$0x7f]
    %v457 = vperm.slane %v455, 0
    %v458 = vperm.slane %v455, 1
    %v459 = vperm.slane %v455, 2
    %v460 = vperm.slane %v455, 3
    %v461 = vperm.slane %v455, 4
    %v462 = vperm.slane %v455, 5
    %v463 = vperm.slane %v455, 6
    %v472 = vsel %vm161, %v447, 0
    %v475 = vsel %vm161, %v448, 0
    %v478 = vsel %vm161, %v449, 0
    %v481 = vsel %vm161, %v450, 0
    %v484 = vsel %vm161, %v451, 0
    %v487 = vsel %vm161, %v452, 0
    %v490 = vsel %vm161, %v453, 0
    %492 = vmatpush.msra.mxu0 0.0
    %493 = vmatpush.msra.mxu0 0.0
    %494 = vmatpush.msra.mxu0 0.0
    %495 = vmatpush.msra.mxu0 0.0
    %496 = vmatpush.msra.mxu0 0.0
    %497 = vmatpush.msra.mxu0 0.0
    %498 = vmatpush.msra.mxu0 0.0
    %499 = vmatpush.msra.mxu0 0.0
    %500 = vmatpush.msra.mxu0 0.0
    %501 = vmatpush.msra.mxu0 0.0
    %502 = vmatpush.msra.mxu0 0.0
    %503 = vmatpush.msra.mxu0 0.0
    %504 = vmatpush.msra.mxu0 0.0
    %505 = vmatpush.msra.mxu0 0.0
    %506 = vmatpush.msra.mxu0 %v472
    %507 = vmatpush.msra.mxu0 %v440
    %508 = vmatmul.f32.gmra.mxu0 %v194
    %v509 = vpop.f32.mrf.mxu0
    %v510 = vadd.f32 %v457, %v509
    %511 = vdwg.mxu0
    %512 = vmatpush.msra.mxu0 0.0
    %513 = vmatpush.msra.mxu0 0.0
    %514 = vmatpush.msra.mxu0 0.0
    %515 = vmatpush.msra.mxu0 0.0
    %516 = vmatpush.msra.mxu0 0.0
    %517 = vmatpush.msra.mxu0 0.0
    %518 = vmatpush.msra.mxu0 0.0
    %519 = vmatpush.msra.mxu0 0.0
    %520 = vmatpush.msra.mxu0 0.0
    %521 = vmatpush.msra.mxu0 0.0
    %522 = vmatpush.msra.mxu0 0.0
    %523 = vmatpush.msra.mxu0 0.0
    %524 = vmatpush.msra.mxu0 0.0
    %525 = vmatpush.msra.mxu0 0.0
    %526 = vmatpush.msra.mxu0 %v475
    %527 = vmatpush.msra.mxu0 %v441
    %528 = vmatmul.f32.gmra.mxu0 %v194
    %v529 = vpop.f32.mrf.mxu0
    %v530 = vadd.f32 %v458, %v529
    %531 = vdwg.mxu0
    %532 = vmatpush.msra.mxu0 0.0
    %533 = vmatpush.msra.mxu0 0.0
    %534 = vmatpush.msra.mxu0 0.0
    %535 = vmatpush.msra.mxu0 0.0
    %536 = vmatpush.msra.mxu0 0.0
    %537 = vmatpush.msra.mxu0 0.0
    %538 = vmatpush.msra.mxu0 0.0
    %539 = vmatpush.msra.mxu0 0.0
    %540 = vmatpush.msra.mxu0 0.0
    %541 = vmatpush.msra.mxu0 0.0
    %542 = vmatpush.msra.mxu0 0.0
    %543 = vmatpush.msra.mxu0 0.0
    %544 = vmatpush.msra.mxu0 0.0
    %545 = vmatpush.msra.mxu0 0.0
    %546 = vmatpush.msra.mxu0 %v478
    %547 = vmatpush.msra.mxu0 %v442
    %548 = vmatmul.f32.gmra.mxu0 %v194
    %v549 = vpop.f32.mrf.mxu0
    %v550 = vadd.f32 %v459, %v549
    %551 = vdwg.mxu0
    %552 = vmatpush.msra.mxu0 0.0
    %553 = vmatpush.msra.mxu0 0.0
    %554 = vmatpush.msra.mxu0 0.0
    %555 = vmatpush.msra.mxu0 0.0
    %556 = vmatpush.msra.mxu0 0.0
    %557 = vmatpush.msra.mxu0 0.0
    %558 = vmatpush.msra.mxu0 0.0
    %559 = vmatpush.msra.mxu0 0.0
    %560 = vmatpush.msra.mxu0 0.0
    %561 = vmatpush.msra.mxu0 0.0
    %562 = vmatpush.msra.mxu0 0.0
    %563 = vmatpush.msra.mxu0 0.0
    %564 = vmatpush.msra.mxu0 0.0
    %565 = vmatpush.msra.mxu0 0.0
    %566 = vmatpush.msra.mxu0 %v481
    %567 = vmatpush.msra.mxu0 %v443
    %568 = vmatmul.f32.gmra.mxu0 %v194
    %v569 = vpop.f32.mrf.mxu0
    %v570 = vadd.f32 %v460, %v569
    %571 = vdwg.mxu0
    %572 = vmatpush.msra.mxu0 0.0
    %573 = vmatpush.msra.mxu0 0.0
    %574 = vmatpush.msra.mxu0 0.0
    %575 = vmatpush.msra.mxu0 0.0
    %576 = vmatpush.msra.mxu0 0.0
    %577 = vmatpush.msra.mxu0 0.0
    %578 = vmatpush.msra.mxu0 0.0
    %579 = vmatpush.msra.mxu0 0.0
    %580 = vmatpush.msra.mxu0 0.0
    %581 = vmatpush.msra.mxu0 0.0
    %582 = vmatpush.msra.mxu0 0.0
    %583 = vmatpush.msra.mxu0 0.0
    %584 = vmatpush.msra.mxu0 0.0
    %585 = vmatpush.msra.mxu0 0.0
    %586 = vmatpush.msra.mxu0 %v484
    %587 = vmatpush.msra.mxu0 %v444
    %588 = vmatmul.f32.gmra.mxu0 %v194
    %v589 = vpop.f32.mrf.mxu0
    %v590 = vadd.f32 %v461, %v589
    %591 = vdwg.mxu0
    %592 = vmatpush.msra.mxu0 0.0
    %593 = vmatpush.msra.mxu0 0.0
    %594 = vmatpush.msra.mxu0 0.0
    %595 = vmatpush.msra.mxu0 0.0
    %596 = vmatpush.msra.mxu0 0.0
    %597 = vmatpush.msra.mxu0 0.0
    %598 = vmatpush.msra.mxu0 0.0
    %599 = vmatpush.msra.mxu0 0.0
    %600 = vmatpush.msra.mxu0 0.0
    %601 = vmatpush.msra.mxu0 0.0
    %602 = vmatpush.msra.mxu0 0.0
    %603 = vmatpush.msra.mxu0 0.0
    %604 = vmatpush.msra.mxu0 0.0
    %605 = vmatpush.msra.mxu0 0.0
    %606 = vmatpush.msra.mxu0 %v487
    %607 = vmatpush.msra.mxu0 %v445
    %608 = vmatmul.f32.gmra.mxu0 %v194
    %v609 = vpop.f32.mrf.mxu0
    %v610 = vadd.f32 %v462, %v609
    %611 = vdwg.mxu0
    %612 = vmatpush.msra.mxu0 0.0
    %613 = vmatpush.msra.mxu0 0.0
    %614 = vmatpush.msra.mxu0 0.0
    %615 = vmatpush.msra.mxu0 0.0
    %616 = vmatpush.msra.mxu0 0.0
    %617 = vmatpush.msra.mxu0 0.0
    %618 = vmatpush.msra.mxu0 0.0
    %619 = vmatpush.msra.mxu0 0.0
    %620 = vmatpush.msra.mxu0 0.0
    %621 = vmatpush.msra.mxu0 0.0
    %622 = vmatpush.msra.mxu0 0.0
    %623 = vmatpush.msra.mxu0 0.0
    %624 = vmatpush.msra.mxu0 0.0
    %625 = vmatpush.msra.mxu0 0.0
    %626 = vmatpush.msra.mxu0 %v490
    %627 = vmatpush.msra.mxu0 %v446
    %628 = vmatmul.f32.gmra.mxu0 %v194
    %v629 = vpop.f32.mrf.mxu0
    %v630 = vadd.f32 %v463, %v629
    %631 = vdwg.mxu0
    %v639 = vrot.slane %v530, 6
    %v640 = vrot.slane %v550, 4
    %v641 = vrot.slane %v570, 2
    %v642 = vrot.slane %v610, 6
    %v643 = vrot.slane %v630, 4
    %v644 = vsel %vm161, %v510, %v639
    %v645 = vsel %vm425, %v640, %v641
    %v646 = vsel %vm427, %v644, %v645
    %v647 = vsel %vm161, %v590, %v642
    %v648 = vsel %vm427, %v647, %v643
    %s651 = scalar_lea.vmem %s10, 14
    %652 = vst [vmem:[%s651] sm:$0xff] %v646
    %653 = vst.msk [vmem:[%s651 + $0x8] sm:$0x3f] %vm437, %v648
    %s654 = scalar_lea.vmem [#allocation12], 224
    %v655 = vld [vmem:[%s654] sm:$0xff]
    %v656 = vld [vmem:[%s654 + $0x8] sm:$0xff]
    %v657 = vld [vmem:[%s654 + $0x10] sm:$0xff]
    %v658 = vld [vmem:[%s654 + $0x18] sm:$0xff]
    %v659 = vld [vmem:[%s654 + $0x20] sm:$0xff]
    %v660 = vld [vmem:[%s654 + $0x28] sm:$0xff]
    %v661 = vld [vmem:[%s654 + $0x30] sm:$0xff]
    %v662 = vld [vmem:[%s654 + $0x38] sm:$0x3]
    %v663 = vld [vmem:[%s654 + $0x40] sm:$0x3]
    %v664 = vld [vmem:[%s654 + $0x48] sm:$0x3]
    %v665 = vld [vmem:[%s654 + $0x50] sm:$0x3]
    %v666 = vld [vmem:[%s654 + $0x58] sm:$0x3]
    %v667 = vld [vmem:[%s654 + $0x60] sm:$0x3]
    %v668 = vld [vmem:[%s654 + $0x68] sm:$0x3]
    %s669 = scalar_lea.vmem [#allocation13], 14
    %v670 = vld [vmem:[%s669] sm:$0x7f]
    %v672 = vperm.slane %v670, 0
    %v673 = vperm.slane %v670, 1
    %v674 = vperm.slane %v670, 2
    %v675 = vperm.slane %v670, 3
    %v676 = vperm.slane %v670, 4
    %v677 = vperm.slane %v670, 5
    %v678 = vperm.slane %v670, 6
    %v687 = vsel %vm161, %v662, 0
    %v690 = vsel %vm161, %v663, 0
    %v693 = vsel %vm161, %v664, 0
    %v696 = vsel %vm161, %v665, 0
    %v699 = vsel %vm161, %v666, 0
    %v702 = vsel %vm161, %v667, 0
    %v705 = vsel %vm161, %v668, 0
    %707 = vmatpush.msra.mxu0 0.0
    %708 = vmatpush.msra.mxu0 0.0
    %709 = vmatpush.msra.mxu0 0.0
    %710 = vmatpush.msra.mxu0 0.0
    %711 = vmatpush.msra.mxu0 0.0
    %712 = vmatpush.msra.mxu0 0.0
    %713 = vmatpush.msra.mxu0 0.0
    %714 = vmatpush.msra.mxu0 0.0
    %715 = vmatpush.msra.mxu0 0.0
    %716 = vmatpush.msra.mxu0 0.0
    %717 = vmatpush.msra.mxu0 0.0
    %718 = vmatpush.msra.mxu0 0.0
    %719 = vmatpush.msra.mxu0 0.0
    %720 = vmatpush.msra.mxu0 0.0
    %721 = vmatpush.msra.mxu0 %v687
    %722 = vmatpush.msra.mxu0 %v655
    %723 = vmatmul.f32.gmra.mxu0 %v194
    %v724 = vpop.f32.mrf.mxu0
    %v725 = vadd.f32 %v672, %v724
    %726 = vdwg.mxu0
    %727 = vmatpush.msra.mxu0 0.0
    %728 = vmatpush.msra.mxu0 0.0
    %729 = vmatpush.msra.mxu0 0.0
    %730 = vmatpush.msra.mxu0 0.0
    %731 = vmatpush.msra.mxu0 0.0
    %732 = vmatpush.msra.mxu0 0.0
    %733 = vmatpush.msra.mxu0 0.0
    %734 = vmatpush.msra.mxu0 0.0
    %735 = vmatpush.msra.mxu0 0.0
    %736 = vmatpush.msra.mxu0 0.0
    %737 = vmatpush.msra.mxu0 0.0
    %738 = vmatpush.msra.mxu0 0.0
    %739 = vmatpush.msra.mxu0 0.0
    %740 = vmatpush.msra.mxu0 0.0
    %741 = vmatpush.msra.mxu0 %v690
    %742 = vmatpush.msra.mxu0 %v656
    %743 = vmatmul.f32.gmra.mxu0 %v194
    %v744 = vpop.f32.mrf.mxu0
    %v745 = vadd.f32 %v673, %v744
    %746 = vdwg.mxu0
    %747 = vmatpush.msra.mxu0 0.0
    %748 = vmatpush.msra.mxu0 0.0
    %749 = vmatpush.msra.mxu0 0.0
    %750 = vmatpush.msra.mxu0 0.0
    %751 = vmatpush.msra.mxu0 0.0
    %752 = vmatpush.msra.mxu0 0.0
    %753 = vmatpush.msra.mxu0 0.0
    %754 = vmatpush.msra.mxu0 0.0
    %755 = vmatpush.msra.mxu0 0.0
    %756 = vmatpush.msra.mxu0 0.0
    %757 = vmatpush.msra.mxu0 0.0
    %758 = vmatpush.msra.mxu0 0.0
    %759 = vmatpush.msra.mxu0 0.0
    %760 = vmatpush.msra.mxu0 0.0
    %761 = vmatpush.msra.mxu0 %v693
    %762 = vmatpush.msra.mxu0 %v657
    %763 = vmatmul.f32.gmra.mxu0 %v194
    %v764 = vpop.f32.mrf.mxu0
    %v765 = vadd.f32 %v674, %v764
    %766 = vdwg.mxu0
    %767 = vmatpush.msra.mxu0 0.0
    %768 = vmatpush.msra.mxu0 0.0
    %769 = vmatpush.msra.mxu0 0.0
    %770 = vmatpush.msra.mxu0 0.0
    %771 = vmatpush.msra.mxu0 0.0
    %772 = vmatpush.msra.mxu0 0.0
    %773 = vmatpush.msra.mxu0 0.0
    %774 = vmatpush.msra.mxu0 0.0
    %775 = vmatpush.msra.mxu0 0.0
    %776 = vmatpush.msra.mxu0 0.0
    %777 = vmatpush.msra.mxu0 0.0
    %778 = vmatpush.msra.mxu0 0.0
    %779 = vmatpush.msra.mxu0 0.0
    %780 = vmatpush.msra.mxu0 0.0
    %781 = vmatpush.msra.mxu0 %v696
    %782 = vmatpush.msra.mxu0 %v658
    %783 = vmatmul.f32.gmra.mxu0 %v194
    %v784 = vpop.f32.mrf.mxu0
    %v785 = vadd.f32 %v675, %v784
    %786 = vdwg.mxu0
    %787 = vmatpush.msra.mxu0 0.0
    %788 = vmatpush.msra.mxu0 0.0
    %789 = vmatpush.msra.mxu0 0.0
    %790 = vmatpush.msra.mxu0 0.0
    %791 = vmatpush.msra.mxu0 0.0
    %792 = vmatpush.msra.mxu0 0.0
    %793 = vmatpush.msra.mxu0 0.0
    %794 = vmatpush.msra.mxu0 0.0
    %795 = vmatpush.msra.mxu0 0.0
    %796 = vmatpush.msra.mxu0 0.0
    %797 = vmatpush.msra.mxu0 0.0
    %798 = vmatpush.msra.mxu0 0.0
    %799 = vmatpush.msra.mxu0 0.0
    %800 = vmatpush.msra.mxu0 0.0
    %801 = vmatpush.msra.mxu0 %v699
    %802 = vmatpush.msra.mxu0 %v659
    %803 = vmatmul.f32.gmra.mxu0 %v194
    %v804 = vpop.f32.mrf.mxu0
    %v805 = vadd.f32 %v676, %v804
    %806 = vdwg.mxu0
    %807 = vmatpush.msra.mxu0 0.0
    %808 = vmatpush.msra.mxu0 0.0
    %809 = vmatpush.msra.mxu0 0.0
    %810 = vmatpush.msra.mxu0 0.0
    %811 = vmatpush.msra.mxu0 0.0
    %812 = vmatpush.msra.mxu0 0.0
    %813 = vmatpush.msra.mxu0 0.0
    %814 = vmatpush.msra.mxu0 0.0
    %815 = vmatpush.msra.mxu0 0.0
    %816 = vmatpush.msra.mxu0 0.0
    %817 = vmatpush.msra.mxu0 0.0
    %818 = vmatpush.msra.mxu0 0.0
    %819 = vmatpush.msra.mxu0 0.0
    %820 = vmatpush.msra.mxu0 0.0
    %821 = vmatpush.msra.mxu0 %v702
    %822 = vmatpush.msra.mxu0 %v660
    %823 = vmatmul.f32.gmra.mxu0 %v194
    %v824 = vpop.f32.mrf.mxu0
    %v825 = vadd.f32 %v677, %v824
    %826 = vdwg.mxu0
    %827 = vmatpush.msra.mxu0 0.0
    %828 = vmatpush.msra.mxu0 0.0
    %829 = vmatpush.msra.mxu0 0.0
    %830 = vmatpush.msra.mxu0 0.0
    %831 = vmatpush.msra.mxu0 0.0
    %832 = vmatpush.msra.mxu0 0.0
    %833 = vmatpush.msra.mxu0 0.0
    %834 = vmatpush.msra.mxu0 0.0
    %835 = vmatpush.msra.mxu0 0.0
    %836 = vmatpush.msra.mxu0 0.0
    %837 = vmatpush.msra.mxu0 0.0
    %838 = vmatpush.msra.mxu0 0.0
    %839 = vmatpush.msra.mxu0 0.0
    %840 = vmatpush.msra.mxu0 0.0
    %841 = vmatpush.msra.mxu0 %v705
    %842 = vmatpush.msra.mxu0 %v661
    %843 = vmatmul.f32.gmra.mxu0 %v194
    %v844 = vpop.f32.mrf.mxu0
    %v845 = vadd.f32 %v678, %v844
    %846 = vdwg.mxu0
    %v854 = vrot.slane %v745, 6
    %v855 = vrot.slane %v765, 4
    %v856 = vrot.slane %v785, 2
    %v857 = vrot.slane %v825, 6
    %v858 = vrot.slane %v845, 4
    %v859 = vsel %vm161, %v725, %v854
    %v860 = vsel %vm425, %v855, %v856
    %v861 = vsel %vm427, %v859, %v860
    %v862 = vsel %vm161, %v805, %v857
    %v863 = vsel %vm427, %v862, %v858
    %s866 = scalar_lea.vmem %s10, 28
    %867 = vst [vmem:[%s866] sm:$0xff] %v861
    %868 = vst.msk [vmem:[%s866 + $0x8] sm:$0x3f] %vm437, %v863
    // Predicated region
    $region66: #{fwd.2} parent=1 // pred_check
      _
    $region67: #{fwd.2} parent=1 // pred_check_branch
      %870 = sbr.rel (0) target = $region69
    $region68: #{fwd.2} parent=1 // pred_region
      _
    $region69: #{fwd.2} parent=1 // pred_fallthru
      _
    // Predicated region
    $region70: #{fwd.2} parent=1 // pred_check
      _
    $region71: #{fwd.2} parent=1 // pred_check_branch
      %872 = sbr.rel (0) target = $region73
    $region72: #{fwd.2} parent=1 // pred_region
      _
    $region73: #{fwd.2} parent=1 // pred_fallthru
      _
    // Predicated region
    $region74: #{fwd.2} parent=1 // pred_check
      _
    $region75: #{fwd.2} parent=1 // pred_check_branch
      %874 = sbr.rel (0) target = $region77
    $region76: #{fwd.2} parent=1 // pred_region
      _
    $region77: #{fwd.2} parent=1 // pred_fallthru
      _
    // Predicated region
    $region78: #{fwd.2} parent=1 // pred_check
      _
    $region79: #{fwd.2} parent=1 // pred_check_branch
      %876 = sbr.rel (0) target = $region81
    $region80: #{fwd.2} parent=1 // pred_region
      _
    $region81: #{fwd.2} parent=1 // pred_fallthru
      _
    // Predicated region
    $region82: #{fwd.2} parent=1 // pred_check
      _
    $region83: #{fwd.2} parent=1 // pred_check_branch
      %878 = sbr.rel (0) target = $region85
    $region84: #{fwd.2} parent=1 // pred_region
      _
    $region85: #{fwd.2} parent=1 // pred_fallthru
      _
    // Predicated region
    $region86: #{fwd.2} parent=1 // pred_check
      _
    $region87: #{fwd.2} parent=1 // pred_check_branch
      %880 = sbr.rel (0) target = $region89
    $region88: #{fwd.2} parent=1 // pred_region
      _
    $region89: #{fwd.2} parent=1 // pred_fallthru
      _
    %881 = vsyncpa [#allocation3], 1
    %882 = vsyncpa [#allocation5], 1
    %883 = vsyncpa [#allocation8], 1
    %884 = vsyncpa [#allocation11], 1
    %885 = vsyncpa [#allocation14], 1

// kernel: fwd.3
$region0: #{fwd.3}
  #allocation0 [shape = 'u32[]', space=smem, size = 0x4, offset = 0x4, fixed_abs, tag = 'smem constant byte address 0x4 - core index']
  #allocation1 [shape = 'u32[72,128]{1,0:T(1,128)}', space=vmem, size = 0x9000, scoped, tag = 'internal scratch']
  %s0 = inlined_call_operand.vmem [shape: f32[2,135], index: 0, kind: input, shape index: {}]
  %s1 = inlined_call_operand.vmem [shape: f32[3,135,778], index: 1, kind: input, shape index: {}]
  %s2 = inlined_call_operand.vmem [shape: f32[3,2,778], index: 2, kind: input, shape index: {}]
  %s3 = inlined_call_operand.vmem [shape: f32[16,778], index: 3, kind: input, shape index: {}]
  %s4 = inlined_call_operand.vmem [shape: f32[2,16,16], index: 4, kind: input, shape index: {}]
  %s5 = inlined_call_operand.vmem [shape: f32[3,2,778], index: 5, kind: output, shape index: {}]
  %s6 = sld [smem:[#allocation0]]
  $region30: #{fwd.3} parent=0
    _
  %s8 = ssub.s32 1, %s6
  %s9 = scalar_select 0, %s8, %s6
  // Predicated region
  $region2: #{fwd.3} parent=0 // pred_check
    _
  $region3: #{fwd.3} parent=0 // pred_check_branch
    %11 = sbr.rel (0) target = $region5
  $region4: #{fwd.3} parent=0 // pred_region
    _
  $region5: #{fwd.3} parent=0 // pred_fallthru
    _
  // Predicated region
  $region6: #{fwd.3} parent=0 // pred_check
    _
  $region7: #{fwd.3} parent=0 // pred_check_branch
    %13 = sbr.rel (0) target = $region9
  $region8: #{fwd.3} parent=0 // pred_region
    _
  $region9: #{fwd.3} parent=0 // pred_fallthru
    _
  // Predicated region
  $region10: #{fwd.3} parent=0 // pred_check
    _
  $region11: #{fwd.3} parent=0 // pred_check_branch
    %15 = sbr.rel (0) target = $region13
  $region12: #{fwd.3} parent=0 // pred_region
    _
  $region13: #{fwd.3} parent=0 // pred_fallthru
    _
  // Predicated region
  $region14: #{fwd.3} parent=0 // pred_check
    _
  $region15: #{fwd.3} parent=0 // pred_check_branch
    %17 = sbr.rel (0) target = $region17
  $region16: #{fwd.3} parent=0 // pred_region
    _
  $region17: #{fwd.3} parent=0 // pred_fallthru
    _
  // Predicated region
  $region18: #{fwd.3} parent=0 // pred_check
    _
  $region19: #{fwd.3} parent=0 // pred_check_branch
    %19 = sbr.rel (0) target = $region21
  $region20: #{fwd.3} parent=0 // pred_region
    _
  $region21: #{fwd.3} parent=0 // pred_fallthru
    _
  %v20 = vld [vmem:[%s0] sm:$0xf]
  %v21 = vld [vmem:[%s3] sm:$0xff]
  %v22 = vld [vmem:[%s3 + $0x8] sm:$0xff]
  %v23 = vld [vmem:[%s3 + $0x10] sm:$0xff]
  %v24 = vld [vmem:[%s3 + $0x18] sm:$0xff]
  %v25 = vld [vmem:[%s3 + $0x20] sm:$0xff]
  %v26 = vld [vmem:[%s3 + $0x28] sm:$0xff]
  %v27 = vld [vmem:[%s3 + $0x30] sm:$0xff]
  %v28 = vld [vmem:[%s3 + $0x38] sm:$0xff]
  %v29 = vld [vmem:[%s3 + $0x40] sm:$0xff]
  %v30 = vld [vmem:[%s3 + $0x48] sm:$0xff]
  %v31 = vld [vmem:[%s3 + $0x50] sm:$0xff]
  %v32 = vld [vmem:[%s3 + $0x58] sm:$0xff]
  %v33 = vld [vmem:[%s3 + $0x60] sm:$0xff]
  %v34 = vld [vmem:[%s3 + $0x68] sm:$0xff]
  %v35 = vld [vmem:[%s2] sm:$0xff]
  %v36 = vld [vmem:[%s2 + $0x8] sm:$0x3f]
  %v37 = vld [vmem:[%s1] sm:$0xff]
  %v38 = vld [vmem:[%s1 + $0x8] sm:$0xff]
  %v39 = vld [vmem:[%s1 + $0x10] sm:$0xff]
  %v40 = vld [vmem:[%s1 + $0x18] sm:$0xff]
  %v41 = vld [vmem:[%s1 + $0x20] sm:$0xff]
  %v42 = vld [vmem:[%s1 + $0x28] sm:$0xff]
  %v43 = vld [vmem:[%s1 + $0x30] sm:$0xff]
  %v44 = vld [vmem:[%s1 + $0x38] sm:$0xff]
  %v45 = vld [vmem:[%s1 + $0x40] sm:$0xff]
  %v46 = vld [vmem:[%s1 + $0x48] sm:$0xff]
  %v47 = vld [vmem:[%s1 + $0x50] sm:$0xff]
  %v48 = vld [vmem:[%s1 + $0x58] sm:$0xff]
  %v49 = vld [vmem:[%s1 + $0x60] sm:$0xff]
  %v50 = vld [vmem:[%s1 + $0x68] sm:$0xff]
  %v51 = vld [vmem:[%s1 + $0x70] sm:$0xff]
  %v52 = vld [vmem:[%s1 + $0x78] sm:$0xff]
  %v53 = vld [vmem:[%s1 + $0x80] sm:$0xff]
  %v54 = vld [vmem:[%s1 + $0x88] sm:$0xff]
  %v55 = vld [vmem:[%s1 + $0x90] sm:$0xff]
  %v56 = vld [vmem:[%s1 + $0x98] sm:$0xff]
  %v57 = vld [vmem:[%s1 + $0xa0] sm:$0xff]
  %v58 = vld [vmem:[%s1 + $0xa8] sm:$0xff]
  %v59 = vld [vmem:[%s1 + $0xb0] sm:$0xff]
  %v60 = vld [vmem:[%s1 + $0xb8] sm:$0xff]
  %v61 = vld [vmem:[%s1 + $0xc0] sm:$0xff]
  %v62 = vld [vmem:[%s1 + $0xc8] sm:$0xff]
  %v63 = vld [vmem:[%s1 + $0xd0] sm:$0xff]
  %v64 = vld [vmem:[%s1 + $0xd8] sm:$0xff]
  %v65 = vld [vmem:[%s1 + $0xe0] sm:$0xff]
  %v66 = vld [vmem:[%s1 + $0xe8] sm:$0xff]
  %v67 = vld [vmem:[%s1 + $0xf0] sm:$0xff]
  %v68 = vld [vmem:[%s1 + $0xf8] sm:$0xff]
  %v69 = vld [vmem:[%s1 + $0x100] sm:$0xff]
  %v70 = vld [vmem:[%s1 + $0x108] sm:$0xff]
  %v71 = vld [vmem:[%s1 + $0x110] sm:$0xff]
  %v72 = vld [vmem:[%s1 + $0x118] sm:$0xff]
  %v73 = vld [vmem:[%s1 + $0x120] sm:$0xff]
  %v74 = vld [vmem:[%s1 + $0x128] sm:$0xff]
  %v75 = vld [vmem:[%s1 + $0x130] sm:$0xff]
  %v76 = vld [vmem:[%s1 + $0x138] sm:$0xff]
  %v77 = vld [vmem:[%s1 + $0x140] sm:$0xff]
  %v78 = vld [vmem:[%s1 + $0x148] sm:$0xff]
  %v79 = vld [vmem:[%s1 + $0x150] sm:$0xff]
  %v80 = vld [vmem:[%s1 + $0x158] sm:$0xff]
  %v81 = vld [vmem:[%s1 + $0x160] sm:$0xff]
  %v82 = vld [vmem:[%s1 + $0x168] sm:$0xff]
  %v83 = vld [vmem:[%s1 + $0x170] sm:$0xff]
  %v84 = vld [vmem:[%s1 + $0x178] sm:$0xff]
  %v85 = vld [vmem:[%s1 + $0x180] sm:$0xff]
  %v86 = vld [vmem:[%s1 + $0x188] sm:$0xff]
  %v87 = vld [vmem:[%s1 + $0x190] sm:$0xff]
  %v88 = vld [vmem:[%s1 + $0x198] sm:$0xff]
  %v89 = vld [vmem:[%s1 + $0x1a0] sm:$0xff]
  %v90 = vld [vmem:[%s1 + $0x1a8] sm:$0xff]
  %v91 = vld [vmem:[%s1 + $0x1b0] sm:$0xff]
  %v92 = vld [vmem:[%s1 + $0x1b8] sm:$0xff]
  %v93 = vld [vmem:[%s1 + $0x1c0] sm:$0xff]
  %v94 = vld [vmem:[%s1 + $0x1c8] sm:$0xff]
  %v95 = vld [vmem:[%s1 + $0x1d0] sm:$0xff]
  %v96 = vld [vmem:[%s1 + $0x1d8] sm:$0xff]
  %v97 = vld [vmem:[%s1 + $0x1e0] sm:$0xff]
  %v98 = vld [vmem:[%s1 + $0x1e8] sm:$0xff]
  %v99 = vld [vmem:[%s1 + $0x1f0] sm:$0xff]
  %v100 = vld [vmem:[%s1 + $0x1f8] sm:$0xff]
  %v101 = vld [vmem:[%s1 + $0x200] sm:$0xff]
  %v102 = vld [vmem:[%s1 + $0x208] sm:$0xff]
  %v103 = vld [vmem:[%s1 + $0x210] sm:$0xff]
  %v104 = vld [vmem:[%s1 + $0x218] sm:$0xff]
  %v105 = vld [vmem:[%s1 + $0x220] sm:$0xff]
  %v106 = vld [vmem:[%s1 + $0x228] sm:$0xff]
  %v107 = vld [vmem:[%s1 + $0x230] sm:$0xff]
  %v108 = vld [vmem:[%s1 + $0x238] sm:$0xff]
  %v109 = vld [vmem:[%s1 + $0x240] sm:$0xff]
  %v110 = vld [vmem:[%s1 + $0x248] sm:$0xff]
  %v111 = vld [vmem:[%s1 + $0x250] sm:$0xff]
  %v112 = vld [vmem:[%s1 + $0x258] sm:$0xff]
  %v113 = vld [vmem:[%s1 + $0x260] sm:$0xff]
  %v114 = vld [vmem:[%s1 + $0x268] sm:$0xff]
  %v115 = vld [vmem:[%s1 + $0x270] sm:$0xff]
  %v116 = vld [vmem:[%s1 + $0x278] sm:$0xff]
  %v117 = vld [vmem:[%s1 + $0x280] sm:$0xff]
  %v118 = vld [vmem:[%s1 + $0x288] sm:$0xff]
  %v119 = vld [vmem:[%s1 + $0x290] sm:$0xff]
  %v120 = vld [vmem:[%s1 + $0x298] sm:$0xff]
  %v121 = vld [vmem:[%s1 + $0x2a0] sm:$0xff]
  %v122 = vld [vmem:[%s1 + $0x2a8] sm:$0xff]
  %v123 = vld [vmem:[%s1 + $0x2b0] sm:$0xff]
  %v124 = vld [vmem:[%s1 + $0x2b8] sm:$0xff]
  %v125 = vld [vmem:[%s1 + $0x2c0] sm:$0xff]
  %v126 = vld [vmem:[%s1 + $0x2c8] sm:$0xff]
  %v127 = vld [vmem:[%s1 + $0x2d0] sm:$0xff]
  %v128 = vld [vmem:[%s1 + $0x2d8] sm:$0xff]
  %v129 = vld [vmem:[%s1 + $0x2e0] sm:$0xff]
  %v130 = vld [vmem:[%s1 + $0x2e8] sm:$0xff]
  %v131 = vld [vmem:[%s1 + $0x2f0] sm:$0xff]
  %v132 = vld [vmem:[%s1 + $0x2f8] sm:$0xff]
  %v133 = vld [vmem:[%s1 + $0x300] sm:$0xff]
  %v134 = vld [vmem:[%s1 + $0x308] sm:$0xff]
  %v135 = vld [vmem:[%s1 + $0x310] sm:$0xff]
  %v136 = vld [vmem:[%s1 + $0x318] sm:$0xff]
  %v137 = vld [vmem:[%s1 + $0x320] sm:$0xff]
  %v138 = vld [vmem:[%s1 + $0x328] sm:$0xff]
  %v139 = vld [vmem:[%s1 + $0x330] sm:$0xff]
  %v140 = vld [vmem:[%s1 + $0x338] sm:$0xff]
  %v141 = vld [vmem:[%s1 + $0x340] sm:$0xff]
  %v142 = vld [vmem:[%s1 + $0x348] sm:$0xff]
  %v143 = vld [vmem:[%s1 + $0x350] sm:$0xff]
  %v144 = vld [vmem:[%s1 + $0x358] sm:$0xff]
  %v145 = vld [vmem:[%s1 + $0x360] sm:$0xff]
  %v146 = vld [vmem:[%s1 + $0x368] sm:$0xff]
  %v147 = vld [vmem:[%s1 + $0x370] sm:$0xff]
  %v148 = vld [vmem:[%s1 + $0x378] sm:$0xff]
  %v149 = vld [vmem:[%s1 + $0x380] sm:$0x7f]
  %v150 = vld [vmem:[%s1 + $0x388] sm:$0x7f]
  %v151 = vld [vmem:[%s1 + $0x390] sm:$0x7f]
  %v152 = vld [vmem:[%s1 + $0x398] sm:$0x7f]
  %v153 = vld [vmem:[%s1 + $0x3a0] sm:$0x7f]
  %v154 = vld [vmem:[%s1 + $0x3a8] sm:$0x7f]
  %v155 = vld [vmem:[%s1 + $0x3b0] sm:$0x7f]
  %157 = vst [vmem:[#allocation1] ss:$4 sm:$0xff] %v20
  %v158 = vld.sshfl [vmem:[#allocation1] sm:$0xff pattern:$0x73625140]
  %v159 = vld.sshfl [vmem:[#allocation1 + $0x8] sm:$0xff pattern:$0x73625140]
  %vm161 = vcmask 56320
  %v162 = vsel %vm161, %v159, 0
  %vm164 = vcmask 1046528
  %v166 = vsel %vm164, %v149, 0
  %v169 = vsel %vm164, %v150, 0
  %v172 = vsel %vm164, %v151, 0
  %v175 = vsel %vm164, %v152, 0
  %v178 = vsel %vm164, %v153, 0
  %v181 = vsel %vm164, %v154, 0
  %v184 = vsel %vm164, %v155, 0
  %186 = vmatpush.msra.mxu0 %v142
  %187 = vmatpush.msra.mxu0 %v135
  %188 = vmatpush.msra.mxu0 %v128
  %189 = vmatpush.msra.mxu0 %v121
  %190 = vmatpush.msra.mxu0 %v114
  %191 = vmatpush.msra.mxu0 %v107
  %192 = vmatpush.msra.mxu0 %v100
  %193 = vmatpush.msra.mxu0 %v93
  %194 = vmatpush.msra.mxu0 %v86
  %195 = vmatpush.msra.mxu0 %v79
  %196 = vmatpush.msra.mxu0 %v72
  %197 = vmatpush.msra.mxu0 %v65
  %198 = vmatpush.msra.mxu0 %v58
  %199 = vmatpush.msra.mxu0 %v51
  %200 = vmatpush.msra.mxu0 %v44
  %201 = vmatpush.msra.mxu0 %v37
  %202 = vmatmul.f32.gmra.mxu0 %v158
  %v203 = vpop.f32.mrf.mxu0
  %v204 = vadd.f32 0.0, %v203
  %205 = vdwg.mxu0
  %206 = vmatpush.msra.mxu0 0.0
  %207 = vmatpush.msra.mxu0 0.0
  %208 = vmatpush.msra.mxu0 0.0
  %209 = vmatpush.msra.mxu0 0.0
  %210 = vmatpush.msra.mxu0 0.0
  %211 = vmatpush.msra.mxu0 0.0
  %212 = vmatpush.msra.mxu0 0.0
  %213 = vmatpush.msra.mxu0 0.0
  %214 = vmatpush.msra.mxu0 0.0
  %215 = vmatpush.msra.mxu0 0.0
  %216 = vmatpush.msra.mxu0 0.0
  %217 = vmatpush.msra.mxu0 0.0
  %218 = vmatpush.msra.mxu0 0.0
  %219 = vmatpush.msra.mxu0 0.0
  %220 = vmatpush.msra.mxu0 0.0
  %221 = vmatpush.msra.mxu0 %v166
  %222 = vmatmul.f32.gmra.mxu0 %v162
  %v223 = vpop.f32.mrf.mxu0
  %v224 = vadd.f32 %v204, %v223
  %225 = vdwg.mxu0
  %226 = vmatpush.msra.mxu0 %v143
  %227 = vmatpush.msra.mxu0 %v136
  %228 = vmatpush.msra.mxu0 %v129
  %229 = vmatpush.msra.mxu0 %v122
  %230 = vmatpush.msra.mxu0 %v115
  %231 = vmatpush.msra.mxu0 %v108
  %232 = vmatpush.msra.mxu0 %v101
  %233 = vmatpush.msra.mxu0 %v94
  %234 = vmatpush.msra.mxu0 %v87
  %235 = vmatpush.msra.mxu0 %v80
  %236 = vmatpush.msra.mxu0 %v73
  %237 = vmatpush.msra.mxu0 %v66
  %238 = vmatpush.msra.mxu0 %v59
  %239 = vmatpush.msra.mxu0 %v52
  %240 = vmatpush.msra.mxu0 %v45
  %241 = vmatpush.msra.mxu0 %v38
  %242 = vmatmul.f32.gmra.mxu0 %v158
  %v243 = vpop.f32.mrf.mxu0
  %v244 = vadd.f32 0.0, %v243
  %245 = vdwg.mxu0
  %246 = vmatpush.msra.mxu0 0.0
  %247 = vmatpush.msra.mxu0 0.0
  %248 = vmatpush.msra.mxu0 0.0
  %249 = vmatpush.msra.mxu0 0.0
  %250 = vmatpush.msra.mxu0 0.0
  %251 = vmatpush.msra.mxu0 0.0
  %252 = vmatpush.msra.mxu0 0.0
  %253 = vmatpush.msra.mxu0 0.0
  %254 = vmatpush.msra.mxu0 0.0
  %255 = vmatpush.msra.mxu0 0.0
  %256 = vmatpush.msra.mxu0 0.0
  %257 = vmatpush.msra.mxu0 0.0
  %258 = vmatpush.msra.mxu0 0.0
  %259 = vmatpush.msra.mxu0 0.0
  %260 = vmatpush.msra.mxu0 0.0
  %261 = vmatpush.msra.mxu0 %v169
  %262 = vmatmul.f32.gmra.mxu0 %v162
  %v263 = vpop.f32.mrf.mxu0
  %v264 = vadd.f32 %v244, %v263
  %265 = vdwg.mxu0
  %266 = vmatpush.msra.mxu0 %v144
  %267 = vmatpush.msra.mxu0 %v137
  %268 = vmatpush.msra.mxu0 %v130
  %269 = vmatpush.msra.mxu0 %v123
  %270 = vmatpush.msra.mxu0 %v116
  %271 = vmatpush.msra.mxu0 %v109
  %272 = vmatpush.msra.mxu0 %v102
  %273 = vmatpush.msra.mxu0 %v95
  %274 = vmatpush.msra.mxu0 %v88
  %275 = vmatpush.msra.mxu0 %v81
  %276 = vmatpush.msra.mxu0 %v74
  %277 = vmatpush.msra.mxu0 %v67
  %278 = vmatpush.msra.mxu0 %v60
  %279 = vmatpush.msra.mxu0 %v53
  %280 = vmatpush.msra.mxu0 %v46
  %281 = vmatpush.msra.mxu0 %v39
  %282 = vmatmul.f32.gmra.mxu0 %v158
  %v283 = vpop.f32.mrf.mxu0
  %v284 = vadd.f32 0.0, %v283
  %285 = vdwg.mxu0
  %286 = vmatpush.msra.mxu0 0.0
  %287 = vmatpush.msra.mxu0 0.0
  %288 = vmatpush.msra.mxu0 0.0
  %289 = vmatpush.msra.mxu0 0.0
  %290 = vmatpush.msra.mxu0 0.0
  %291 = vmatpush.msra.mxu0 0.0
  %292 = vmatpush.msra.mxu0 0.0
  %293 = vmatpush.msra.mxu0 0.0
  %294 = vmatpush.msra.mxu0 0.0
  %295 = vmatpush.msra.mxu0 0.0
  %296 = vmatpush.msra.mxu0 0.0
  %297 = vmatpush.msra.mxu0 0.0
  %298 = vmatpush.msra.mxu0 0.0
  %299 = vmatpush.msra.mxu0 0.0
  %300 = vmatpush.msra.mxu0 0.0
  %301 = vmatpush.msra.mxu0 %v172
  %302 = vmatmul.f32.gmra.mxu0 %v162
  %v303 = vpop.f32.mrf.mxu0
  %v304 = vadd.f32 %v284, %v303
  %305 = vdwg.mxu0
  %306 = vmatpush.msra.mxu0 %v145
  %307 = vmatpush.msra.mxu0 %v138
  %308 = vmatpush.msra.mxu0 %v131
  %309 = vmatpush.msra.mxu0 %v124
  %310 = vmatpush.msra.mxu0 %v117
  %311 = vmatpush.msra.mxu0 %v110
  %312 = vmatpush.msra.mxu0 %v103
  %313 = vmatpush.msra.mxu0 %v96
  %314 = vmatpush.msra.mxu0 %v89
  %315 = vmatpush.msra.mxu0 %v82
  %316 = vmatpush.msra.mxu0 %v75
  %317 = vmatpush.msra.mxu0 %v68
  %318 = vmatpush.msra.mxu0 %v61
  %319 = vmatpush.msra.mxu0 %v54
  %320 = vmatpush.msra.mxu0 %v47
  %321 = vmatpush.msra.mxu0 %v40
  %322 = vmatmul.f32.gmra.mxu0 %v158
  %v323 = vpop.f32.mrf.mxu0
  %v324 = vadd.f32 0.0, %v323
  %325 = vdwg.mxu0
  %326 = vmatpush.msra.mxu0 0.0
  %327 = vmatpush.msra.mxu0 0.0
  %328 = vmatpush.msra.mxu0 0.0
  %329 = vmatpush.msra.mxu0 0.0
  %330 = vmatpush.msra.mxu0 0.0
  %331 = vmatpush.msra.mxu0 0.0
  %332 = vmatpush.msra.mxu0 0.0
  %333 = vmatpush.msra.mxu0 0.0
  %334 = vmatpush.msra.mxu0 0.0
  %335 = vmatpush.msra.mxu0 0.0
  %336 = vmatpush.msra.mxu0 0.0
  %337 = vmatpush.msra.mxu0 0.0
  %338 = vmatpush.msra.mxu0 0.0
  %339 = vmatpush.msra.mxu0 0.0
  %340 = vmatpush.msra.mxu0 0.0
  %341 = vmatpush.msra.mxu0 %v175
  %342 = vmatmul.f32.gmra.mxu0 %v162
  %v343 = vpop.f32.mrf.mxu0
  %v344 = vadd.f32 %v324, %v343
  %345 = vdwg.mxu0
  %346 = vmatpush.msra.mxu0 %v146
  %347 = vmatpush.msra.mxu0 %v139
  %348 = vmatpush.msra.mxu0 %v132
  %349 = vmatpush.msra.mxu0 %v125
  %350 = vmatpush.msra.mxu0 %v118
  %351 = vmatpush.msra.mxu0 %v111
  %352 = vmatpush.msra.mxu0 %v104
  %353 = vmatpush.msra.mxu0 %v97
  %354 = vmatpush.msra.mxu0 %v90
  %355 = vmatpush.msra.mxu0 %v83
  %356 = vmatpush.msra.mxu0 %v76
  %357 = vmatpush.msra.mxu0 %v69
  %358 = vmatpush.msra.mxu0 %v62
  %359 = vmatpush.msra.mxu0 %v55
  %360 = vmatpush.msra.mxu0 %v48
  %361 = vmatpush.msra.mxu0 %v41
  %362 = vmatmul.f32.gmra.mxu0 %v158
  %v363 = vpop.f32.mrf.mxu0
  %v364 = vadd.f32 0.0, %v363
  %365 = vdwg.mxu0
  %366 = vmatpush.msra.mxu0 0.0
  %367 = vmatpush.msra.mxu0 0.0
  %368 = vmatpush.msra.mxu0 0.0
  %369 = vmatpush.msra.mxu0 0.0
  %370 = vmatpush.msra.mxu0 0.0
  %371 = vmatpush.msra.mxu0 0.0
  %372 = vmatpush.msra.mxu0 0.0
  %373 = vmatpush.msra.mxu0 0.0
  %374 = vmatpush.msra.mxu0 0.0
  %375 = vmatpush.msra.mxu0 0.0
  %376 = vmatpush.msra.mxu0 0.0
  %377 = vmatpush.msra.mxu0 0.0
  %378 = vmatpush.msra.mxu0 0.0
  %379 = vmatpush.msra.mxu0 0.0
  %380 = vmatpush.msra.mxu0 0.0
  %381 = vmatpush.msra.mxu0 %v178
  %382 = vmatmul.f32.gmra.mxu0 %v162
  %v383 = vpop.f32.mrf.mxu0
  %v384 = vadd.f32 %v364, %v383
  %385 = vdwg.mxu0
  %386 = vmatpush.msra.mxu0 %v147
  %387 = vmatpush.msra.mxu0 %v140
  %388 = vmatpush.msra.mxu0 %v133
  %389 = vmatpush.msra.mxu0 %v126
  %390 = vmatpush.msra.mxu0 %v119
  %391 = vmatpush.msra.mxu0 %v112
  %392 = vmatpush.msra.mxu0 %v105
  %393 = vmatpush.msra.mxu0 %v98
  %394 = vmatpush.msra.mxu0 %v91
  %395 = vmatpush.msra.mxu0 %v84
  %396 = vmatpush.msra.mxu0 %v77
  %397 = vmatpush.msra.mxu0 %v70
  %398 = vmatpush.msra.mxu0 %v63
  %399 = vmatpush.msra.mxu0 %v56
  %400 = vmatpush.msra.mxu0 %v49
  %401 = vmatpush.msra.mxu0 %v42
  %402 = vmatmul.f32.gmra.mxu0 %v158
  %v403 = vpop.f32.mrf.mxu0
  %v404 = vadd.f32 0.0, %v403
  %405 = vdwg.mxu0
  %406 = vmatpush.msra.mxu0 0.0
  %407 = vmatpush.msra.mxu0 0.0
  %408 = vmatpush.msra.mxu0 0.0
  %409 = vmatpush.msra.mxu0 0.0
  %410 = vmatpush.msra.mxu0 0.0
  %411 = vmatpush.msra.mxu0 0.0
  %412 = vmatpush.msra.mxu0 0.0
  %413 = vmatpush.msra.mxu0 0.0
  %414 = vmatpush.msra.mxu0 0.0
  %415 = vmatpush.msra.mxu0 0.0
  %416 = vmatpush.msra.mxu0 0.0
  %417 = vmatpush.msra.mxu0 0.0
  %418 = vmatpush.msra.mxu0 0.0
  %419 = vmatpush.msra.mxu0 0.0
  %420 = vmatpush.msra.mxu0 0.0
  %421 = vmatpush.msra.mxu0 %v181
  %422 = vmatmul.f32.gmra.mxu0 %v162
  %v423 = vpop.f32.mrf.mxu0
  %v424 = vadd.f32 %v404, %v423
  %425 = vdwg.mxu0
  %426 = vmatpush.msra.mxu0 %v148
  %427 = vmatpush.msra.mxu0 %v141
  %428 = vmatpush.msra.mxu0 %v134
  %429 = vmatpush.msra.mxu0 %v127
  %430 = vmatpush.msra.mxu0 %v120
  %431 = vmatpush.msra.mxu0 %v113
  %432 = vmatpush.msra.mxu0 %v106
  %433 = vmatpush.msra.mxu0 %v99
  %434 = vmatpush.msra.mxu0 %v92
  %435 = vmatpush.msra.mxu0 %v85
  %436 = vmatpush.msra.mxu0 %v78
  %437 = vmatpush.msra.mxu0 %v71
  %438 = vmatpush.msra.mxu0 %v64
  %439 = vmatpush.msra.mxu0 %v57
  %440 = vmatpush.msra.mxu0 %v50
  %441 = vmatpush.msra.mxu0 %v43
  %442 = vmatmul.f32.gmra.mxu0 %v158
  %v443 = vpop.f32.mrf.mxu0
  %v444 = vadd.f32 0.0, %v443
  %445 = vdwg.mxu0
  %446 = vmatpush.msra.mxu0 0.0
  %447 = vmatpush.msra.mxu0 0.0
  %448 = vmatpush.msra.mxu0 0.0
  %449 = vmatpush.msra.mxu0 0.0
  %450 = vmatpush.msra.mxu0 0.0
  %451 = vmatpush.msra.mxu0 0.0
  %452 = vmatpush.msra.mxu0 0.0
  %453 = vmatpush.msra.mxu0 0.0
  %454 = vmatpush.msra.mxu0 0.0
  %455 = vmatpush.msra.mxu0 0.0
  %456 = vmatpush.msra.mxu0 0.0
  %457 = vmatpush.msra.mxu0 0.0
  %458 = vmatpush.msra.mxu0 0.0
  %459 = vmatpush.msra.mxu0 0.0
  %460 = vmatpush.msra.mxu0 0.0
  %461 = vmatpush.msra.mxu0 %v184
  %462 = vmatmul.f32.gmra.mxu0 %v162
  %v463 = vpop.f32.mrf.mxu0
  %v464 = vadd.f32 %v444, %v463
  %465 = vdwg.mxu0
  %v473 = vrot.slane %v264, 6
  %v474 = vrot.slane %v304, 4
  %v475 = vrot.slane %v344, 2
  %v476 = vrot.slane %v424, 6
  %v477 = vrot.slane %v464, 4
  %vm478 = vcmask 1041408
  %v479 = vsel %vm478, %v224, %v473
  %vm480 = vcmask 1045508
  %v481 = vsel %vm480, %v474, %v475
  %vm482 = vcmask 1043456
  %v483 = vsel %vm482, %v479, %v481
  %v484 = vsel %vm478, %v384, %v476
  %v485 = vsel %vm482, %v484, %v477
  %v488 = vadd.f32 %v35, %v483
  %v489 = vadd.f32 %v36, %v485
  %s490 = scalar_lea.vmem %s2, 14
  %v491 = vld [vmem:[%s490] sm:$0xff]
  %v492 = vld [vmem:[%s490 + $0x8] sm:$0x3f]
  %s493 = scalar_lea.vmem %s1, 952
  %v494 = vld [vmem:[%s493] sm:$0xff]
  %v495 = vld [vmem:[%s493 + $0x8] sm:$0xff]
  %v496 = vld [vmem:[%s493 + $0x10] sm:$0xff]
  %v497 = vld [vmem:[%s493 + $0x18] sm:$0xff]
  %v498 = vld [vmem:[%s493 + $0x20] sm:$0xff]
  %v499 = vld [vmem:[%s493 + $0x28] sm:$0xff]
  %v500 = vld [vmem:[%s493 + $0x30] sm:$0xff]
  %v501 = vld [vmem:[%s493 + $0x38] sm:$0xff]
  %v502 = vld [vmem:[%s493 + $0x40] sm:$0xff]
  %v503 = vld [vmem:[%s493 + $0x48] sm:$0xff]
  %v504 = vld [vmem:[%s493 + $0x50] sm:$0xff]
  %v505 = vld [vmem:[%s493 + $0x58] sm:$0xff]
  %v506 = vld [vmem:[%s493 + $0x60] sm:$0xff]
  %v507 = vld [vmem:[%s493 + $0x68] sm:$0xff]
  %v508 = vld [vmem:[%s493 + $0x70] sm:$0xff]
  %v509 = vld [vmem:[%s493 + $0x78] sm:$0xff]
  %v510 = vld [vmem:[%s493 + $0x80] sm:$0xff]
  %v511 = vld [vmem:[%s493 + $0x88] sm:$0xff]
  %v512 = vld [vmem:[%s493 + $0x90] sm:$0xff]
  %v513 = vld [vmem:[%s493 + $0x98] sm:$0xff]
  %v514 = vld [vmem:[%s493 + $0xa0] sm:$0xff]
  %v515 = vld [vmem:[%s493 + $0xa8] sm:$0xff]
  %v516 = vld [vmem:[%s493 + $0xb0] sm:$0xff]
  %v517 = vld [vmem:[%s493 + $0xb8] sm:$0xff]
  %v518 = vld [vmem:[%s493 + $0xc0] sm:$0xff]
  %v519 = vld [vmem:[%s493 + $0xc8] sm:$0xff]
  %v520 = vld [vmem:[%s493 + $0xd0] sm:$0xff]
  %v521 = vld [vmem:[%s493 + $0xd8] sm:$0xff]
  %v522 = vld [vmem:[%s493 + $0xe0] sm:$0xff]
  %v523 = vld [vmem:[%s493 + $0xe8] sm:$0xff]
  %v524 = vld [vmem:[%s493 + $0xf0] sm:$0xff]
  %v525 = vld [vmem:[%s493 + $0xf8] sm:$0xff]
  %v526 = vld [vmem:[%s493 + $0x100] sm:$0xff]
  %v527 = vld [vmem:[%s493 + $0x108] sm:$0xff]
  %v528 = vld [vmem:[%s493 + $0x110] sm:$0xff]
  %v529 = vld [vmem:[%s493 + $0x118] sm:$0xff]
  %v530 = vld [vmem:[%s493 + $0x120] sm:$0xff]
  %v531 = vld [vmem:[%s493 + $0x128] sm:$0xff]
  %v532 = vld [vmem:[%s493 + $0x130] sm:$0xff]
  %v533 = vld [vmem:[%s493 + $0x138] sm:$0xff]
  %v534 = vld [vmem:[%s493 + $0x140] sm:$0xff]
  %v535 = vld [vmem:[%s493 + $0x148] sm:$0xff]
  %v536 = vld [vmem:[%s493 + $0x150] sm:$0xff]
  %v537 = vld [vmem:[%s493 + $0x158] sm:$0xff]
  %v538 = vld [vmem:[%s493 + $0x160] sm:$0xff]
  %v539 = vld [vmem:[%s493 + $0x168] sm:$0xff]
  %v540 = vld [vmem:[%s493 + $0x170] sm:$0xff]
  %v541 = vld [vmem:[%s493 + $0x178] sm:$0xff]
  %v542 = vld [vmem:[%s493 + $0x180] sm:$0xff]
  %v543 = vld [vmem:[%s493 + $0x188] sm:$0xff]
  %v544 = vld [vmem:[%s493 + $0x190] sm:$0xff]
  %v545 = vld [vmem:[%s493 + $0x198] sm:$0xff]
  %v546 = vld [vmem:[%s493 + $0x1a0] sm:$0xff]
  %v547 = vld [vmem:[%s493 + $0x1a8] sm:$0xff]
  %v548 = vld [vmem:[%s493 + $0x1b0] sm:$0xff]
  %v549 = vld [vmem:[%s493 + $0x1b8] sm:$0xff]
  %v550 = vld [vmem:[%s493 + $0x1c0] sm:$0xff]
  %v551 = vld [vmem:[%s493 + $0x1c8] sm:$0xff]
  %v552 = vld [vmem:[%s493 + $0x1d0] sm:$0xff]
  %v553 = vld [vmem:[%s493 + $0x1d8] sm:$0xff]
  %v554 = vld [vmem:[%s493 + $0x1e0] sm:$0xff]
  %v555 = vld [vmem:[%s493 + $0x1e8] sm:$0xff]
  %v556 = vld [vmem:[%s493 + $0x1f0] sm:$0xff]
  %v557 = vld [vmem:[%s493 + $0x1f8] sm:$0xff]
  %v558 = vld [vmem:[%s493 + $0x200] sm:$0xff]
  %v559 = vld [vmem:[%s493 + $0x208] sm:$0xff]
  %v560 = vld [vmem:[%s493 + $0x210] sm:$0xff]
  %v561 = vld [vmem:[%s493 + $0x218] sm:$0xff]
  %v562 = vld [vmem:[%s493 + $0x220] sm:$0xff]
  %v563 = vld [vmem:[%s493 + $0x228] sm:$0xff]
  %v564 = vld [vmem:[%s493 + $0x230] sm:$0xff]
  %v565 = vld [vmem:[%s493 + $0x238] sm:$0xff]
  %v566 = vld [vmem:[%s493 + $0x240] sm:$0xff]
  %v567 = vld [vmem:[%s493 + $0x248] sm:$0xff]
  %v568 = vld [vmem:[%s493 + $0x250] sm:$0xff]
  %v569 = vld [vmem:[%s493 + $0x258] sm:$0xff]
  %v570 = vld [vmem:[%s493 + $0x260] sm:$0xff]
  %v571 = vld [vmem:[%s493 + $0x268] sm:$0xff]
  %v572 = vld [vmem:[%s493 + $0x270] sm:$0xff]
  %v573 = vld [vmem:[%s493 + $0x278] sm:$0xff]
  %v574 = vld [vmem:[%s493 + $0x280] sm:$0xff]
  %v575 = vld [vmem:[%s493 + $0x288] sm:$0xff]
  %v576 = vld [vmem:[%s493 + $0x290] sm:$0xff]
  %v577 = vld [vmem:[%s493 + $0x298] sm:$0xff]
  %v578 = vld [vmem:[%s493 + $0x2a0] sm:$0xff]
  %v579 = vld [vmem:[%s493 + $0x2a8] sm:$0xff]
  %v580 = vld [vmem:[%s493 + $0x2b0] sm:$0xff]
  %v581 = vld [vmem:[%s493 + $0x2b8] sm:$0xff]
  %v582 = vld [vmem:[%s493 + $0x2c0] sm:$0xff]
  %v583 = vld [vmem:[%s493 + $0x2c8] sm:$0xff]
  %v584 = vld [vmem:[%s493 + $0x2d0] sm:$0xff]
  %v585 = vld [vmem:[%s493 + $0x2d8] sm:$0xff]
  %v586 = vld [vmem:[%s493 + $0x2e0] sm:$0xff]
  %v587 = vld [vmem:[%s493 + $0x2e8] sm:$0xff]
  %v588 = vld [vmem:[%s493 + $0x2f0] sm:$0xff]
  %v589 = vld [vmem:[%s493 + $0x2f8] sm:$0xff]
  %v590 = vld [vmem:[%s493 + $0x300] sm:$0xff]
  %v591 = vld [vmem:[%s493 + $0x308] sm:$0xff]
  %v592 = vld [vmem:[%s493 + $0x310] sm:$0xff]
  %v593 = vld [vmem:[%s493 + $0x318] sm:$0xff]
  %v594 = vld [vmem:[%s493 + $0x320] sm:$0xff]
  %v595 = vld [vmem:[%s493 + $0x328] sm:$0xff]
  %v596 = vld [vmem:[%s493 + $0x330] sm:$0xff]
  %v597 = vld [vmem:[%s493 + $0x338] sm:$0xff]
  %v598 = vld [vmem:[%s493 + $0x340] sm:$0xff]
  %v599 = vld [vmem:[%s493 + $0x348] sm:$0xff]
  %v600 = vld [vmem:[%s493 + $0x350] sm:$0xff]
  %v601 = vld [vmem:[%s493 + $0x358] sm:$0xff]
  %v602 = vld [vmem:[%s493 + $0x360] sm:$0xff]
  %v603 = vld [vmem:[%s493 + $0x368] sm:$0xff]
  %v604 = vld [vmem:[%s493 + $0x370] sm:$0xff]
  %v605 = vld [vmem:[%s493 + $0x378] sm:$0xff]
  %v606 = vld [vmem:[%s493 + $0x380] sm:$0x7f]
  %v607 = vld [vmem:[%s493 + $0x388] sm:$0x7f]
  %v608 = vld [vmem:[%s493 + $0x390] sm:$0x7f]
  %v609 = vld [vmem:[%s493 + $0x398] sm:$0x7f]
  %v610 = vld [vmem:[%s493 + $0x3a0] sm:$0x7f]
  %v611 = vld [vmem:[%s493 + $0x3a8] sm:$0x7f]
  %v612 = vld [vmem:[%s493 + $0x3b0] sm:$0x7f]
  %613 = vst [vmem:[#allocation1] ss:$4 sm:$0xff] %v20
  %v614 = vld.sshfl [vmem:[#allocation1] sm:$0xff pattern:$0x73625140]
  %v615 = vld.sshfl [vmem:[#allocation1 + $0x8] sm:$0xff pattern:$0x73625140]
  %v617 = vsel %vm161, %v615, 0
  %v620 = vsel %vm164, %v606, 0
  %v623 = vsel %vm164, %v607, 0
  %v626 = vsel %vm164, %v608, 0
  %v629 = vsel %vm164, %v609, 0
  %v632 = vsel %vm164, %v610, 0
  %v635 = vsel %vm164, %v611, 0
  %v638 = vsel %vm164, %v612, 0
  %640 = vmatpush.msra.mxu0 %v599
  %641 = vmatpush.msra.mxu0 %v592
  %642 = vmatpush.msra.mxu0 %v585
  %643 = vmatpush.msra.mxu0 %v578
  %644 = vmatpush.msra.mxu0 %v571
  %645 = vmatpush.msra.mxu0 %v564
  %646 = vmatpush.msra.mxu0 %v557
  %647 = vmatpush.msra.mxu0 %v550
  %648 = vmatpush.msra.mxu0 %v543
  %649 = vmatpush.msra.mxu0 %v536
  %650 = vmatpush.msra.mxu0 %v529
  %651 = vmatpush.msra.mxu0 %v522
  %652 = vmatpush.msra.mxu0 %v515
  %653 = vmatpush.msra.mxu0 %v508
  %654 = vmatpush.msra.mxu0 %v501
  %655 = vmatpush.msra.mxu0 %v494
  %656 = vmatmul.f32.gmra.mxu0 %v614
  %v657 = vpop.f32.mrf.mxu0
  %v658 = vadd.f32 0.0, %v657
  %659 = vdwg.mxu0
  %660 = vmatpush.msra.mxu0 0.0
  %661 = vmatpush.msra.mxu0 0.0
  %662 = vmatpush.msra.mxu0 0.0
  %663 = vmatpush.msra.mxu0 0.0
  %664 = vmatpush.msra.mxu0 0.0
  %665 = vmatpush.msra.mxu0 0.0
  %666 = vmatpush.msra.mxu0 0.0
  %667 = vmatpush.msra.mxu0 0.0
  %668 = vmatpush.msra.mxu0 0.0
  %669 = vmatpush.msra.mxu0 0.0
  %670 = vmatpush.msra.mxu0 0.0
  %671 = vmatpush.msra.mxu0 0.0
  %672 = vmatpush.msra.mxu0 0.0
  %673 = vmatpush.msra.mxu0 0.0
  %674 = vmatpush.msra.mxu0 0.0
  %675 = vmatpush.msra.mxu0 %v620
  %676 = vmatmul.f32.gmra.mxu0 %v617
  %v677 = vpop.f32.mrf.mxu0
  %v678 = vadd.f32 %v658, %v677
  %679 = vdwg.mxu0
  %680 = vmatpush.msra.mxu0 %v600
  %681 = vmatpush.msra.mxu0 %v593
  %682 = vmatpush.msra.mxu0 %v586
  %683 = vmatpush.msra.mxu0 %v579
  %684 = vmatpush.msra.mxu0 %v572
  %685 = vmatpush.msra.mxu0 %v565
  %686 = vmatpush.msra.mxu0 %v558
  %687 = vmatpush.msra.mxu0 %v551
  %688 = vmatpush.msra.mxu0 %v544
  %689 = vmatpush.msra.mxu0 %v537
  %690 = vmatpush.msra.mxu0 %v530
  %691 = vmatpush.msra.mxu0 %v523
  %692 = vmatpush.msra.mxu0 %v516
  %693 = vmatpush.msra.mxu0 %v509
  %694 = vmatpush.msra.mxu0 %v502
  %695 = vmatpush.msra.mxu0 %v495
  %696 = vmatmul.f32.gmra.mxu0 %v614
  %v697 = vpop.f32.mrf.mxu0
  %v698 = vadd.f32 0.0, %v697
  %699 = vdwg.mxu0
  %700 = vmatpush.msra.mxu0 0.0
  %701 = vmatpush.msra.mxu0 0.0
  %702 = vmatpush.msra.mxu0 0.0
  %703 = vmatpush.msra.mxu0 0.0
  %704 = vmatpush.msra.mxu0 0.0
  %705 = vmatpush.msra.mxu0 0.0
  %706 = vmatpush.msra.mxu0 0.0
  %707 = vmatpush.msra.mxu0 0.0
  %708 = vmatpush.msra.mxu0 0.0
  %709 = vmatpush.msra.mxu0 0.0
  %710 = vmatpush.msra.mxu0 0.0
  %711 = vmatpush.msra.mxu0 0.0
  %712 = vmatpush.msra.mxu0 0.0
  %713 = vmatpush.msra.mxu0 0.0
  %714 = vmatpush.msra.mxu0 0.0
  %715 = vmatpush.msra.mxu0 %v623
  %716 = vmatmul.f32.gmra.mxu0 %v617
  %v717 = vpop.f32.mrf.mxu0
  %v718 = vadd.f32 %v698, %v717
  %719 = vdwg.mxu0
  %720 = vmatpush.msra.mxu0 %v601
  %721 = vmatpush.msra.mxu0 %v594
  %722 = vmatpush.msra.mxu0 %v587
  %723 = vmatpush.msra.mxu0 %v580
  %724 = vmatpush.msra.mxu0 %v573
  %725 = vmatpush.msra.mxu0 %v566
  %726 = vmatpush.msra.mxu0 %v559
  %727 = vmatpush.msra.mxu0 %v552
  %728 = vmatpush.msra.mxu0 %v545
  %729 = vmatpush.msra.mxu0 %v538
  %730 = vmatpush.msra.mxu0 %v531
  %731 = vmatpush.msra.mxu0 %v524
  %732 = vmatpush.msra.mxu0 %v517
  %733 = vmatpush.msra.mxu0 %v510
  %734 = vmatpush.msra.mxu0 %v503
  %735 = vmatpush.msra.mxu0 %v496
  %736 = vmatmul.f32.gmra.mxu0 %v614
  %v737 = vpop.f32.mrf.mxu0
  %v738 = vadd.f32 0.0, %v737
  %739 = vdwg.mxu0
  %740 = vmatpush.msra.mxu0 0.0
  %741 = vmatpush.msra.mxu0 0.0
  %742 = vmatpush.msra.mxu0 0.0
  %743 = vmatpush.msra.mxu0 0.0
  %744 = vmatpush.msra.mxu0 0.0
  %745 = vmatpush.msra.mxu0 0.0
  %746 = vmatpush.msra.mxu0 0.0
  %747 = vmatpush.msra.mxu0 0.0
  %748 = vmatpush.msra.mxu0 0.0
  %749 = vmatpush.msra.mxu0 0.0
  %750 = vmatpush.msra.mxu0 0.0
  %751 = vmatpush.msra.mxu0 0.0
  %752 = vmatpush.msra.mxu0 0.0
  %753 = vmatpush.msra.mxu0 0.0
  %754 = vmatpush.msra.mxu0 0.0
  %755 = vmatpush.msra.mxu0 %v626
  %756 = vmatmul.f32.gmra.mxu0 %v617
  %v757 = vpop.f32.mrf.mxu0
  %v758 = vadd.f32 %v738, %v757
  %759 = vdwg.mxu0
  %760 = vmatpush.msra.mxu0 %v602
  %761 = vmatpush.msra.mxu0 %v595
  %762 = vmatpush.msra.mxu0 %v588
  %763 = vmatpush.msra.mxu0 %v581
  %764 = vmatpush.msra.mxu0 %v574
  %765 = vmatpush.msra.mxu0 %v567
  %766 = vmatpush.msra.mxu0 %v560
  %767 = vmatpush.msra.mxu0 %v553
  %768 = vmatpush.msra.mxu0 %v546
  %769 = vmatpush.msra.mxu0 %v539
  %770 = vmatpush.msra.mxu0 %v532
  %771 = vmatpush.msra.mxu0 %v525
  %772 = vmatpush.msra.mxu0 %v518
  %773 = vmatpush.msra.mxu0 %v511
  %774 = vmatpush.msra.mxu0 %v504
  %775 = vmatpush.msra.mxu0 %v497
  %776 = vmatmul.f32.gmra.mxu0 %v614
  %v777 = vpop.f32.mrf.mxu0
  %v778 = vadd.f32 0.0, %v777
  %779 = vdwg.mxu0
  %780 = vmatpush.msra.mxu0 0.0
  %781 = vmatpush.msra.mxu0 0.0
  %782 = vmatpush.msra.mxu0 0.0
  %783 = vmatpush.msra.mxu0 0.0
  %784 = vmatpush.msra.mxu0 0.0
  %785 = vmatpush.msra.mxu0 0.0
  %786 = vmatpush.msra.mxu0 0.0
  %787 = vmatpush.msra.mxu0 0.0
  %788 = vmatpush.msra.mxu0 0.0
  %789 = vmatpush.msra.mxu0 0.0
  %790 = vmatpush.msra.mxu0 0.0
  %791 = vmatpush.msra.mxu0 0.0
  %792 = vmatpush.msra.mxu0 0.0
  %793 = vmatpush.msra.mxu0 0.0
  %794 = vmatpush.msra.mxu0 0.0
  %795 = vmatpush.msra.mxu0 %v629
  %796 = vmatmul.f32.gmra.mxu0 %v617
  %v797 = vpop.f32.mrf.mxu0
  %v798 = vadd.f32 %v778, %v797
  %799 = vdwg.mxu0
  %800 = vmatpush.msra.mxu0 %v603
  %801 = vmatpush.msra.mxu0 %v596
  %802 = vmatpush.msra.mxu0 %v589
  %803 = vmatpush.msra.mxu0 %v582
  %804 = vmatpush.msra.mxu0 %v575
  %805 = vmatpush.msra.mxu0 %v568
  %806 = vmatpush.msra.mxu0 %v561
  %807 = vmatpush.msra.mxu0 %v554
  %808 = vmatpush.msra.mxu0 %v547
  %809 = vmatpush.msra.mxu0 %v540
  %810 = vmatpush.msra.mxu0 %v533
  %811 = vmatpush.msra.mxu0 %v526
  %812 = vmatpush.msra.mxu0 %v519
  %813 = vmatpush.msra.mxu0 %v512
  %814 = vmatpush.msra.mxu0 %v505
  %815 = vmatpush.msra.mxu0 %v498
  %816 = vmatmul.f32.gmra.mxu0 %v614
  %v817 = vpop.f32.mrf.mxu0
  %v818 = vadd.f32 0.0, %v817
  %819 = vdwg.mxu0
  %820 = vmatpush.msra.mxu0 0.0
  %821 = vmatpush.msra.mxu0 0.0
  %822 = vmatpush.msra.mxu0 0.0
  %823 = vmatpush.msra.mxu0 0.0
  %824 = vmatpush.msra.mxu0 0.0
  %825 = vmatpush.msra.mxu0 0.0
  %826 = vmatpush.msra.mxu0 0.0
  %827 = vmatpush.msra.mxu0 0.0
  %828 = vmatpush.msra.mxu0 0.0
  %829 = vmatpush.msra.mxu0 0.0
  %830 = vmatpush.msra.mxu0 0.0
  %831 = vmatpush.msra.mxu0 0.0
  %832 = vmatpush.msra.mxu0 0.0
  %833 = vmatpush.msra.mxu0 0.0
  %834 = vmatpush.msra.mxu0 0.0
  %835 = vmatpush.msra.mxu0 %v632
  %836 = vmatmul.f32.gmra.mxu0 %v617
  %v837 = vpop.f32.mrf.mxu0
  %v838 = vadd.f32 %v818, %v837
  %839 = vdwg.mxu0
  %840 = vmatpush.msra.mxu0 %v604
  %841 = vmatpush.msra.mxu0 %v597
  %842 = vmatpush.msra.mxu0 %v590
  %843 = vmatpush.msra.mxu0 %v583
  %844 = vmatpush.msra.mxu0 %v576
  %845 = vmatpush.msra.mxu0 %v569
  %846 = vmatpush.msra.mxu0 %v562
  %847 = vmatpush.msra.mxu0 %v555
  %848 = vmatpush.msra.mxu0 %v548
  %849 = vmatpush.msra.mxu0 %v541
  %850 = vmatpush.msra.mxu0 %v534
  %851 = vmatpush.msra.mxu0 %v527
  %852 = vmatpush.msra.mxu0 %v520
  %853 = vmatpush.msra.mxu0 %v513
  %854 = vmatpush.msra.mxu0 %v506
  %855 = vmatpush.msra.mxu0 %v499
  %856 = vmatmul.f32.gmra.mxu0 %v614
  %v857 = vpop.f32.mrf.mxu0
  %v858 = vadd.f32 0.0, %v857
  %859 = vdwg.mxu0
  %860 = vmatpush.msra.mxu0 0.0
  %861 = vmatpush.msra.mxu0 0.0
  %862 = vmatpush.msra.mxu0 0.0
  %863 = vmatpush.msra.mxu0 0.0
  %864 = vmatpush.msra.mxu0 0.0
  %865 = vmatpush.msra.mxu0 0.0
  %866 = vmatpush.msra.mxu0 0.0
  %867 = vmatpush.msra.mxu0 0.0
  %868 = vmatpush.msra.mxu0 0.0
  %869 = vmatpush.msra.mxu0 0.0
  %870 = vmatpush.msra.mxu0 0.0
  %871 = vmatpush.msra.mxu0 0.0
  %872 = vmatpush.msra.mxu0 0.0
  %873 = vmatpush.msra.mxu0 0.0
  %874 = vmatpush.msra.mxu0 0.0
  %875 = vmatpush.msra.mxu0 %v635
  %876 = vmatmul.f32.gmra.mxu0 %v617
  %v877 = vpop.f32.mrf.mxu0
  %v878 = vadd.f32 %v858, %v877
  %879 = vdwg.mxu0
  %880 = vmatpush.msra.mxu0 %v605
  %881 = vmatpush.msra.mxu0 %v598
  %882 = vmatpush.msra.mxu0 %v591
  %883 = vmatpush.msra.mxu0 %v584
  %884 = vmatpush.msra.mxu0 %v577
  %885 = vmatpush.msra.mxu0 %v570
  %886 = vmatpush.msra.mxu0 %v563
  %887 = vmatpush.msra.mxu0 %v556
  %888 = vmatpush.msra.mxu0 %v549
  %889 = vmatpush.msra.mxu0 %v542
  %890 = vmatpush.msra.mxu0 %v535
  %891 = vmatpush.msra.mxu0 %v528
  %892 = vmatpush.msra.mxu0 %v521
  %893 = vmatpush.msra.mxu0 %v514
  %894 = vmatpush.msra.mxu0 %v507
  %895 = vmatpush.msra.mxu0 %v500
  %896 = vmatmul.f32.gmra.mxu0 %v614
  %v897 = vpop.f32.mrf.mxu0
  %v898 = vadd.f32 0.0, %v897
  %899 = vdwg.mxu0
  %900 = vmatpush.msra.mxu0 0.0
  %901 = vmatpush.msra.mxu0 0.0
  %902 = vmatpush.msra.mxu0 0.0
  %903 = vmatpush.msra.mxu0 0.0
  %904 = vmatpush.msra.mxu0 0.0
  %905 = vmatpush.msra.mxu0 0.0
  %906 = vmatpush.msra.mxu0 0.0
  %907 = vmatpush.msra.mxu0 0.0
  %908 = vmatpush.msra.mxu0 0.0
  %909 = vmatpush.msra.mxu0 0.0
  %910 = vmatpush.msra.mxu0 0.0
  %911 = vmatpush.msra.mxu0 0.0
  %912 = vmatpush.msra.mxu0 0.0
  %913 = vmatpush.msra.mxu0 0.0
  %914 = vmatpush.msra.mxu0 0.0
  %915 = vmatpush.msra.mxu0 %v638
  %916 = vmatmul.f32.gmra.mxu0 %v617
  %v917 = vpop.f32.mrf.mxu0
  %v918 = vadd.f32 %v898, %v917
  %919 = vdwg.mxu0
  %v927 = vrot.slane %v718, 6
  %v928 = vrot.slane %v758, 4
  %v929 = vrot.slane %v798, 2
  %v930 = vrot.slane %v878, 6
  %v931 = vrot.slane %v918, 4
  %v932 = vsel %vm478, %v678, %v927
  %v933 = vsel %vm480, %v928, %v929
  %v934 = vsel %vm482, %v932, %v933
  %v935 = vsel %vm478, %v838, %v930
  %v936 = vsel %vm482, %v935, %v931
  %v939 = vadd.f32 %v491, %v934
  %v940 = vadd.f32 %v492, %v936
  %s941 = scalar_lea.vmem %s2, 28
  %v942 = vld [vmem:[%s941] sm:$0xff]
  %v943 = vld [vmem:[%s941 + $0x8] sm:$0x3f]
  %s944 = scalar_lea.vmem %s1, 1904
  %v945 = vld [vmem:[%s944] sm:$0xff]
  %v946 = vld [vmem:[%s944 + $0x8] sm:$0xff]
  %v947 = vld [vmem:[%s944 + $0x10] sm:$0xff]
  %v948 = vld [vmem:[%s944 + $0x18] sm:$0xff]
  %v949 = vld [vmem:[%s944 + $0x20] sm:$0xff]
  %v950 = vld [vmem:[%s944 + $0x28] sm:$0xff]
  %v951 = vld [vmem:[%s944 + $0x30] sm:$0xff]
  %v952 = vld [vmem:[%s944 + $0x38] sm:$0xff]
  %v953 = vld [vmem:[%s944 + $0x40] sm:$0xff]
  %v954 = vld [vmem:[%s944 + $0x48] sm:$0xff]
  %v955 = vld [vmem:[%s944 + $0x50] sm:$0xff]
  %v956 = vld [vmem:[%s944 + $0x58] sm:$0xff]
  %v957 = vld [vmem:[%s944 + $0x60] sm:$0xff]
  %v958 = vld [vmem:[%s944 + $0x68] sm:$0xff]
  %v959 = vld [vmem:[%s944 + $0x70] sm:$0xff]
  %v960 = vld [vmem:[%s944 + $0x78] sm:$0xff]
  %v961 = vld [vmem:[%s944 + $0x80] sm:$0xff]
  %v962 = vld [vmem:[%s944 + $0x88] sm:$0xff]
  %v963 = vld [vmem:[%s944 + $0x90] sm:$0xff]
  %v964 = vld [vmem:[%s944 + $0x98] sm:$0xff]
  %v965 = vld [vmem:[%s944 + $0xa0] sm:$0xff]
  %v966 = vld [vmem:[%s944 + $0xa8] sm:$0xff]
  %v967 = vld [vmem:[%s944 + $0xb0] sm:$0xff]
  %v968 = vld [vmem:[%s944 + $0xb8] sm:$0xff]
  %v969 = vld [vmem:[%s944 + $0xc0] sm:$0xff]
  %v970 = vld [vmem:[%s944 + $0xc8] sm:$0xff]
  %v971 = vld [vmem:[%s944 + $0xd0] sm:$0xff]
  %v972 = vld [vmem:[%s944 + $0xd8] sm:$0xff]
  %v973 = vld [vmem:[%s944 + $0xe0] sm:$0xff]
  %v974 = vld [vmem:[%s944 + $0xe8] sm:$0xff]
  %v975 = vld [vmem:[%s944 + $0xf0] sm:$0xff]
  %v976 = vld [vmem:[%s944 + $0xf8] sm:$0xff]
  %v977 = vld [vmem:[%s944 + $0x100] sm:$0xff]
  %v978 = vld [vmem:[%s944 + $0x108] sm:$0xff]
  %v979 = vld [vmem:[%s944 + $0x110] sm:$0xff]
  %v980 = vld [vmem:[%s944 + $0x118] sm:$0xff]
  %v981 = vld [vmem:[%s944 + $0x120] sm:$0xff]
  %v982 = vld [vmem:[%s944 + $0x128] sm:$0xff]
  %v983 = vld [vmem:[%s944 + $0x130] sm:$0xff]
  %v984 = vld [vmem:[%s944 + $0x138] sm:$0xff]
  %v985 = vld [vmem:[%s944 + $0x140] sm:$0xff]
  %v986 = vld [vmem:[%s944 + $0x148] sm:$0xff]
  %v987 = vld [vmem:[%s944 + $0x150] sm:$0xff]
  %v988 = vld [vmem:[%s944 + $0x158] sm:$0xff]
  %v989 = vld [vmem:[%s944 + $0x160] sm:$0xff]
  %v990 = vld [vmem:[%s944 + $0x168] sm:$0xff]
  %v991 = vld [vmem:[%s944 + $0x170] sm:$0xff]
  %v992 = vld [vmem:[%s944 + $0x178] sm:$0xff]
  %v993 = vld [vmem:[%s944 + $0x180] sm:$0xff]
  %v994 = vld [vmem:[%s944 + $0x188] sm:$0xff]
  %v995 = vld [vmem:[%s944 + $0x190] sm:$0xff]
  %v996 = vld [vmem:[%s944 + $0x198] sm:$0xff]
  %v997 = vld [vmem:[%s944 + $0x1a0] sm:$0xff]
  %v998 = vld [vmem:[%s944 + $0x1a8] sm:$0xff]
  %v999 = vld [vmem:[%s944 + $0x1b0] sm:$0xff]
  %v1000 = vld [vmem:[%s944 + $0x1b8] sm:$0xff]
  %v1001 = vld [vmem:[%s944 + $0x1c0] sm:$0xff]
  %v1002 = vld [vmem:[%s944 + $0x1c8] sm:$0xff]
  %v1003 = vld [vmem:[%s944 + $0x1d0] sm:$0xff]
  %v1004 = vld [vmem:[%s944 + $0x1d8] sm:$0xff]
  %v1005 = vld [vmem:[%s944 + $0x1e0] sm:$0xff]
  %v1006 = vld [vmem:[%s944 + $0x1e8] sm:$0xff]
  %v1007 = vld [vmem:[%s944 + $0x1f0] sm:$0xff]
  %v1008 = vld [vmem:[%s944 + $0x1f8] sm:$0xff]
  %v1009 = vld [vmem:[%s944 + $0x200] sm:$0xff]
  %v1010 = vld [vmem:[%s944 + $0x208] sm:$0xff]
  %v1011 = vld [vmem:[%s944 + $0x210] sm:$0xff]
  %v1012 = vld [vmem:[%s944 + $0x218] sm:$0xff]
  %v1013 = vld [vmem:[%s944 + $0x220] sm:$0xff]
  %v1014 = vld [vmem:[%s944 + $0x228] sm:$0xff]
  %v1015 = vld [vmem:[%s944 + $0x230] sm:$0xff]
  %v1016 = vld [vmem:[%s944 + $0x238] sm:$0xff]
  %v1017 = vld [vmem:[%s944 + $0x240] sm:$0xff]
  %v1018 = vld [vmem:[%s944 + $0x248] sm:$0xff]
  %v1019 = vld [vmem:[%s944 + $0x250] sm:$0xff]
  %v1020 = vld [vmem:[%s944 + $0x258] sm:$0xff]
  %v1021 = vld [vmem:[%s944 + $0x260] sm:$0xff]
  %v1022 = vld [vmem:[%s944 + $0x268] sm:$0xff]
  %v1023 = vld [vmem:[%s944 + $0x270] sm:$0xff]
  %v1024 = vld [vmem:[%s944 + $0x278] sm:$0xff]
  %v1025 = vld [vmem:[%s944 + $0x280] sm:$0xff]
  %v1026 = vld [vmem:[%s944 + $0x288] sm:$0xff]
  %v1027 = vld [vmem:[%s944 + $0x290] sm:$0xff]
  %v1028 = vld [vmem:[%s944 + $0x298] sm:$0xff]
  %v1029 = vld [vmem:[%s944 + $0x2a0] sm:$0xff]
  %v1030 = vld [vmem:[%s944 + $0x2a8] sm:$0xff]
  %v1031 = vld [vmem:[%s944 + $0x2b0] sm:$0xff]
  %v1032 = vld [vmem:[%s944 + $0x2b8] sm:$0xff]
  %v1033 = vld [vmem:[%s944 + $0x2c0] sm:$0xff]
  %v1034 = vld [vmem:[%s944 + $0x2c8] sm:$0xff]
  %v1035 = vld [vmem:[%s944 + $0x2d0] sm:$0xff]
  %v1036 = vld [vmem:[%s944 + $0x2d8] sm:$0xff]
  %v1037 = vld [vmem:[%s944 + $0x2e0] sm:$0xff]
  %v1038 = vld [vmem:[%s944 + $0x2e8] sm:$0xff]
  %v1039 = vld [vmem:[%s944 + $0x2f0] sm:$0xff]
  %v1040 = vld [vmem:[%s944 + $0x2f8] sm:$0xff]
  %v1041 = vld [vmem:[%s944 + $0x300] sm:$0xff]
  %v1042 = vld [vmem:[%s944 + $0x308] sm:$0xff]
  %v1043 = vld [vmem:[%s944 + $0x310] sm:$0xff]
  %v1044 = vld [vmem:[%s944 + $0x318] sm:$0xff]
  %v1045 = vld [vmem:[%s944 + $0x320] sm:$0xff]
  %v1046 = vld [vmem:[%s944 + $0x328] sm:$0xff]
  %v1047 = vld [vmem:[%s944 + $0x330] sm:$0xff]
  %v1048 = vld [vmem:[%s944 + $0x338] sm:$0xff]
  %v1049 = vld [vmem:[%s944 + $0x340] sm:$0xff]
  %v1050 = vld [vmem:[%s944 + $0x348] sm:$0xff]
  %v1051 = vld [vmem:[%s944 + $0x350] sm:$0xff]
  %v1052 = vld [vmem:[%s944 + $0x358] sm:$0xff]
  %v1053 = vld [vmem:[%s944 + $0x360] sm:$0xff]
  %v1054 = vld [vmem:[%s944 + $0x368] sm:$0xff]
  %v1055 = vld [vmem:[%s944 + $0x370] sm:$0xff]
  %v1056 = vld [vmem:[%s944 + $0x378] sm:$0xff]
  %v1057 = vld [vmem:[%s944 + $0x380] sm:$0x7f]
  %v1058 = vld [vmem:[%s944 + $0x388] sm:$0x7f]
  %v1059 = vld [vmem:[%s944 + $0x390] sm:$0x7f]
  %v1060 = vld [vmem:[%s944 + $0x398] sm:$0x7f]
  %v1061 = vld [vmem:[%s944 + $0x3a0] sm:$0x7f]
  %v1062 = vld [vmem:[%s944 + $0x3a8] sm:$0x7f]
  %v1063 = vld [vmem:[%s944 + $0x3b0] sm:$0x7f]
  %1064 = vst [vmem:[#allocation1] ss:$4 sm:$0xff] %v20
  %v1065 = vld.sshfl [vmem:[#allocation1] sm:$0xff pattern:$0x73625140]
  %v1066 = vld.sshfl [vmem:[#allocation1 + $0x8] sm:$0xff pattern:$0x73625140]
  %v1068 = vsel %vm161, %v1066, 0
  %v1071 = vsel %vm164, %v1057, 0
  %v1074 = vsel %vm164, %v1058, 0
  %v1077 = vsel %vm164, %v1059, 0
  %v1080 = vsel %vm164, %v1060, 0
  %v1083 = vsel %vm164, %v1061, 0
  %v1086 = vsel %vm164, %v1062, 0
  %v1089 = vsel %vm164, %v1063, 0
  %1091 = vmatpush.msra.mxu0 %v1050
  %1092 = vmatpush.msra.mxu0 %v1043
  %1093 = vmatpush.msra.mxu0 %v1036
  %1094 = vmatpush.msra.mxu0 %v1029
  %1095 = vmatpush.msra.mxu0 %v1022
  %1096 = vmatpush.msra.mxu0 %v1015
  %1097 = vmatpush.msra.mxu0 %v1008
  %1098 = vmatpush.msra.mxu0 %v1001
  %1099 = vmatpush.msra.mxu0 %v994
  %1100 = vmatpush.msra.mxu0 %v987
  %1101 = vmatpush.msra.mxu0 %v980
  %1102 = vmatpush.msra.mxu0 %v973
  %1103 = vmatpush.msra.mxu0 %v966
  %1104 = vmatpush.msra.mxu0 %v959
  %1105 = vmatpush.msra.mxu0 %v952
  %1106 = vmatpush.msra.mxu0 %v945
  %1107 = vmatmul.f32.gmra.mxu0 %v1065
  %v1108 = vpop.f32.mrf.mxu0
  %v1109 = vadd.f32 0.0, %v1108
  %1110 = vdwg.mxu0
  %1111 = vmatpush.msra.mxu0 0.0
  %1112 = vmatpush.msra.mxu0 0.0
  %1113 = vmatpush.msra.mxu0 0.0
  %1114 = vmatpush.msra.mxu0 0.0
  %1115 = vmatpush.msra.mxu0 0.0
  %1116 = vmatpush.msra.mxu0 0.0
  %1117 = vmatpush.msra.mxu0 0.0
  %1118 = vmatpush.msra.mxu0 0.0
  %1119 = vmatpush.msra.mxu0 0.0
  %1120 = vmatpush.msra.mxu0 0.0
  %1121 = vmatpush.msra.mxu0 0.0
  %1122 = vmatpush.msra.mxu0 0.0
  %1123 = vmatpush.msra.mxu0 0.0
  %1124 = vmatpush.msra.mxu0 0.0
  %1125 = vmatpush.msra.mxu0 0.0
  %1126 = vmatpush.msra.mxu0 %v1071
  %1127 = vmatmul.f32.gmra.mxu0 %v1068
  %v1128 = vpop.f32.mrf.mxu0
  %v1129 = vadd.f32 %v1109, %v1128
  %1130 = vdwg.mxu0
  %1131 = vmatpush.msra.mxu0 %v1051
  %1132 = vmatpush.msra.mxu0 %v1044
  %1133 = vmatpush.msra.mxu0 %v1037
  %1134 = vmatpush.msra.mxu0 %v1030
  %1135 = vmatpush.msra.mxu0 %v1023
  %1136 = vmatpush.msra.mxu0 %v1016
  %1137 = vmatpush.msra.mxu0 %v1009
  %1138 = vmatpush.msra.mxu0 %v1002
  %1139 = vmatpush.msra.mxu0 %v995
  %1140 = vmatpush.msra.mxu0 %v988
  %1141 = vmatpush.msra.mxu0 %v981
  %1142 = vmatpush.msra.mxu0 %v974
  %1143 = vmatpush.msra.mxu0 %v967
  %1144 = vmatpush.msra.mxu0 %v960
  %1145 = vmatpush.msra.mxu0 %v953
  %1146 = vmatpush.msra.mxu0 %v946
  %1147 = vmatmul.f32.gmra.mxu0 %v1065
  %v1148 = vpop.f32.mrf.mxu0
  %v1149 = vadd.f32 0.0, %v1148
  %1150 = vdwg.mxu0
  %1151 = vmatpush.msra.mxu0 0.0
  %1152 = vmatpush.msra.mxu0 0.0
  %1153 = vmatpush.msra.mxu0 0.0
  %1154 = vmatpush.msra.mxu0 0.0
  %1155 = vmatpush.msra.mxu0 0.0
  %1156 = vmatpush.msra.mxu0 0.0
  %1157 = vmatpush.msra.mxu0 0.0
  %1158 = vmatpush.msra.mxu0 0.0
  %1159 = vmatpush.msra.mxu0 0.0
  %1160 = vmatpush.msra.mxu0 0.0
  %1161 = vmatpush.msra.mxu0 0.0
  %1162 = vmatpush.msra.mxu0 0.0
  %1163 = vmatpush.msra.mxu0 0.0
  %1164 = vmatpush.msra.mxu0 0.0
  %1165 = vmatpush.msra.mxu0 0.0
  %1166 = vmatpush.msra.mxu0 %v1074
  %1167 = vmatmul.f32.gmra.mxu0 %v1068
  %v1168 = vpop.f32.mrf.mxu0
  %v1169 = vadd.f32 %v1149, %v1168
  %1170 = vdwg.mxu0
  %1171 = vmatpush.msra.mxu0 %v1052
  %1172 = vmatpush.msra.mxu0 %v1045
  %1173 = vmatpush.msra.mxu0 %v1038
  %1174 = vmatpush.msra.mxu0 %v1031
  %1175 = vmatpush.msra.mxu0 %v1024
  %1176 = vmatpush.msra.mxu0 %v1017
  %1177 = vmatpush.msra.mxu0 %v1010
  %1178 = vmatpush.msra.mxu0 %v1003
  %1179 = vmatpush.msra.mxu0 %v996
  %1180 = vmatpush.msra.mxu0 %v989
  %1181 = vmatpush.msra.mxu0 %v982
  %1182 = vmatpush.msra.mxu0 %v975
  %1183 = vmatpush.msra.mxu0 %v968
  %1184 = vmatpush.msra.mxu0 %v961
  %1185 = vmatpush.msra.mxu0 %v954
  %1186 = vmatpush.msra.mxu0 %v947
  %1187 = vmatmul.f32.gmra.mxu0 %v1065
  %v1188 = vpop.f32.mrf.mxu0
  %v1189 = vadd.f32 0.0, %v1188
  %1190 = vdwg.mxu0
  %1191 = vmatpush.msra.mxu0 0.0
  %1192 = vmatpush.msra.mxu0 0.0
  %1193 = vmatpush.msra.mxu0 0.0
  %1194 = vmatpush.msra.mxu0 0.0
  %1195 = vmatpush.msra.mxu0 0.0
  %1196 = vmatpush.msra.mxu0 0.0
  %1197 = vmatpush.msra.mxu0 0.0
  %1198 = vmatpush.msra.mxu0 0.0
  %1199 = vmatpush.msra.mxu0 0.0
  %1200 = vmatpush.msra.mxu0 0.0
  %1201 = vmatpush.msra.mxu0 0.0
  %1202 = vmatpush.msra.mxu0 0.0
  %1203 = vmatpush.msra.mxu0 0.0
  %1204 = vmatpush.msra.mxu0 0.0
  %1205 = vmatpush.msra.mxu0 0.0
  %1206 = vmatpush.msra.mxu0 %v1077
  %1207 = vmatmul.f32.gmra.mxu0 %v1068
  %v1208 = vpop.f32.mrf.mxu0
  %v1209 = vadd.f32 %v1189, %v1208
  %1210 = vdwg.mxu0
  %1211 = vmatpush.msra.mxu0 %v1053
  %1212 = vmatpush.msra.mxu0 %v1046
  %1213 = vmatpush.msra.mxu0 %v1039
  %1214 = vmatpush.msra.mxu0 %v1032
  %1215 = vmatpush.msra.mxu0 %v1025
  %1216 = vmatpush.msra.mxu0 %v1018
  %1217 = vmatpush.msra.mxu0 %v1011
  %1218 = vmatpush.msra.mxu0 %v1004
  %1219 = vmatpush.msra.mxu0 %v997
  %1220 = vmatpush.msra.mxu0 %v990
  %1221 = vmatpush.msra.mxu0 %v983
  %1222 = vmatpush.msra.mxu0 %v976
  %1223 = vmatpush.msra.mxu0 %v969
  %1224 = vmatpush.msra.mxu0 %v962
  %1225 = vmatpush.msra.mxu0 %v955
  %1226 = vmatpush.msra.mxu0 %v948
  %1227 = vmatmul.f32.gmra.mxu0 %v1065
  %v1228 = vpop.f32.mrf.mxu0
  %v1229 = vadd.f32 0.0, %v1228
  %1230 = vdwg.mxu0
  %1231 = vmatpush.msra.mxu0 0.0
  %1232 = vmatpush.msra.mxu0 0.0
  %1233 = vmatpush.msra.mxu0 0.0
  %1234 = vmatpush.msra.mxu0 0.0
  %1235 = vmatpush.msra.mxu0 0.0
  %1236 = vmatpush.msra.mxu0 0.0
  %1237 = vmatpush.msra.mxu0 0.0
  %1238 = vmatpush.msra.mxu0 0.0
  %1239 = vmatpush.msra.mxu0 0.0
  %1240 = vmatpush.msra.mxu0 0.0
  %1241 = vmatpush.msra.mxu0 0.0
  %1242 = vmatpush.msra.mxu0 0.0
  %1243 = vmatpush.msra.mxu0 0.0
  %1244 = vmatpush.msra.mxu0 0.0
  %1245 = vmatpush.msra.mxu0 0.0
  %1246 = vmatpush.msra.mxu0 %v1080
  %1247 = vmatmul.f32.gmra.mxu0 %v1068
  %v1248 = vpop.f32.mrf.mxu0
  %v1249 = vadd.f32 %v1229, %v1248
  %1250 = vdwg.mxu0
  %1251 = vmatpush.msra.mxu0 %v1054
  %1252 = vmatpush.msra.mxu0 %v1047
  %1253 = vmatpush.msra.mxu0 %v1040
  %1254 = vmatpush.msra.mxu0 %v1033
  %1255 = vmatpush.msra.mxu0 %v1026
  %1256 = vmatpush.msra.mxu0 %v1019
  %1257 = vmatpush.msra.mxu0 %v1012
  %1258 = vmatpush.msra.mxu0 %v1005
  %1259 = vmatpush.msra.mxu0 %v998
  %1260 = vmatpush.msra.mxu0 %v991
  %1261 = vmatpush.msra.mxu0 %v984
  %1262 = vmatpush.msra.mxu0 %v977
  %1263 = vmatpush.msra.mxu0 %v970
  %1264 = vmatpush.msra.mxu0 %v963
  %1265 = vmatpush.msra.mxu0 %v956
  %1266 = vmatpush.msra.mxu0 %v949
  %1267 = vmatmul.f32.gmra.mxu0 %v1065
  %v1268 = vpop.f32.mrf.mxu0
  %v1269 = vadd.f32 0.0, %v1268
  %1270 = vdwg.mxu0
  %1271 = vmatpush.msra.mxu0 0.0
  %1272 = vmatpush.msra.mxu0 0.0
  %1273 = vmatpush.msra.mxu0 0.0
  %1274 = vmatpush.msra.mxu0 0.0
  %1275 = vmatpush.msra.mxu0 0.0
  %1276 = vmatpush.msra.mxu0 0.0
  %1277 = vmatpush.msra.mxu0 0.0
  %1278 = vmatpush.msra.mxu0 0.0
  %1279 = vmatpush.msra.mxu0 0.0
  %1280 = vmatpush.msra.mxu0 0.0
  %1281 = vmatpush.msra.mxu0 0.0
  %1282 = vmatpush.msra.mxu0 0.0
  %1283 = vmatpush.msra.mxu0 0.0
  %1284 = vmatpush.msra.mxu0 0.0
  %1285 = vmatpush.msra.mxu0 0.0
  %1286 = vmatpush.msra.mxu0 %v1083
  %1287 = vmatmul.f32.gmra.mxu0 %v1068
  %v1288 = vpop.f32.mrf.mxu0
  %v1289 = vadd.f32 %v1269, %v1288
  %1290 = vdwg.mxu0
  %1291 = vmatpush.msra.mxu0 %v1055
  %1292 = vmatpush.msra.mxu0 %v1048
  %1293 = vmatpush.msra.mxu0 %v1041
  %1294 = vmatpush.msra.mxu0 %v1034
  %1295 = vmatpush.msra.mxu0 %v1027
  %1296 = vmatpush.msra.mxu0 %v1020
  %1297 = vmatpush.msra.mxu0 %v1013
  %1298 = vmatpush.msra.mxu0 %v1006
  %1299 = vmatpush.msra.mxu0 %v999
  %1300 = vmatpush.msra.mxu0 %v992
  %1301 = vmatpush.msra.mxu0 %v985
  %1302 = vmatpush.msra.mxu0 %v978
  %1303 = vmatpush.msra.mxu0 %v971
  %1304 = vmatpush.msra.mxu0 %v964
  %1305 = vmatpush.msra.mxu0 %v957
  %1306 = vmatpush.msra.mxu0 %v950
  %1307 = vmatmul.f32.gmra.mxu0 %v1065
  %v1308 = vpop.f32.mrf.mxu0
  %v1309 = vadd.f32 0.0, %v1308
  %1310 = vdwg.mxu0
  %1311 = vmatpush.msra.mxu0 0.0
  %1312 = vmatpush.msra.mxu0 0.0
  %1313 = vmatpush.msra.mxu0 0.0
  %1314 = vmatpush.msra.mxu0 0.0
  %1315 = vmatpush.msra.mxu0 0.0
  %1316 = vmatpush.msra.mxu0 0.0
  %1317 = vmatpush.msra.mxu0 0.0
  %1318 = vmatpush.msra.mxu0 0.0
  %1319 = vmatpush.msra.mxu0 0.0
  %1320 = vmatpush.msra.mxu0 0.0
  %1321 = vmatpush.msra.mxu0 0.0
  %1322 = vmatpush.msra.mxu0 0.0
  %1323 = vmatpush.msra.mxu0 0.0
  %1324 = vmatpush.msra.mxu0 0.0
  %1325 = vmatpush.msra.mxu0 0.0
  %1326 = vmatpush.msra.mxu0 %v1086
  %1327 = vmatmul.f32.gmra.mxu0 %v1068
  %v1328 = vpop.f32.mrf.mxu0
  %v1329 = vadd.f32 %v1309, %v1328
  %1330 = vdwg.mxu0
  %1331 = vmatpush.msra.mxu0 %v1056
  %1332 = vmatpush.msra.mxu0 %v1049
  %1333 = vmatpush.msra.mxu0 %v1042
  %1334 = vmatpush.msra.mxu0 %v1035
  %1335 = vmatpush.msra.mxu0 %v1028
  %1336 = vmatpush.msra.mxu0 %v1021
  %1337 = vmatpush.msra.mxu0 %v1014
  %1338 = vmatpush.msra.mxu0 %v1007
  %1339 = vmatpush.msra.mxu0 %v1000
  %1340 = vmatpush.msra.mxu0 %v993
  %1341 = vmatpush.msra.mxu0 %v986
  %1342 = vmatpush.msra.mxu0 %v979
  %1343 = vmatpush.msra.mxu0 %v972
  %1344 = vmatpush.msra.mxu0 %v965
  %1345 = vmatpush.msra.mxu0 %v958
  %1346 = vmatpush.msra.mxu0 %v951
  %1347 = vmatmul.f32.gmra.mxu0 %v1065
  %v1348 = vpop.f32.mrf.mxu0
  %v1349 = vadd.f32 0.0, %v1348
  %1350 = vdwg.mxu0
  %1351 = vmatpush.msra.mxu0 0.0
  %1352 = vmatpush.msra.mxu0 0.0
  %1353 = vmatpush.msra.mxu0 0.0
  %1354 = vmatpush.msra.mxu0 0.0
  %1355 = vmatpush.msra.mxu0 0.0
  %1356 = vmatpush.msra.mxu0 0.0
  %1357 = vmatpush.msra.mxu0 0.0
  %1358 = vmatpush.msra.mxu0 0.0
  %1359 = vmatpush.msra.mxu0 0.0
  %1360 = vmatpush.msra.mxu0 0.0
  %1361 = vmatpush.msra.mxu0 0.0
  %1362 = vmatpush.msra.mxu0 0.0
  %1363 = vmatpush.msra.mxu0 0.0
  %1364 = vmatpush.msra.mxu0 0.0
  %1365 = vmatpush.msra.mxu0 0.0
  %1366 = vmatpush.msra.mxu0 %v1089
  %1367 = vmatmul.f32.gmra.mxu0 %v1068
  %v1368 = vpop.f32.mrf.mxu0
  %v1369 = vadd.f32 %v1349, %v1368
  %1370 = vdwg.mxu0
  %v1378 = vrot.slane %v1169, 6
  %v1379 = vrot.slane %v1209, 4
  %v1380 = vrot.slane %v1249, 2
  %v1381 = vrot.slane %v1329, 6
  %v1382 = vrot.slane %v1369, 4
  %v1383 = vsel %vm478, %v1129, %v1378
  %v1384 = vsel %vm480, %v1379, %v1380
  %v1385 = vsel %vm482, %v1383, %v1384
  %v1386 = vsel %vm478, %v1289, %v1381
  %v1387 = vsel %vm482, %v1386, %v1382
  %v1390 = vadd.f32 %v942, %v1385
  %v1391 = vadd.f32 %v943, %v1387
  %v1392 = vld [vmem:[%s4] sm:$0xff]
  %v1393 = vld [vmem:[%s4 + $0x8] sm:$0xff]
  %vm1394 = vcmask 130048
  %v1396 = vsel %vm1394, %v1392, 0
  %v1399 = vsel %vm1394, %v1393, 0
  %1401 = vmatpush.msra.mxu0 0.0
  %1402 = vmatpush.msra.mxu0 0.0
  %1403 = vmatpush.msra.mxu0 0.0
  %1404 = vmatpush.msra.mxu0 0.0
  %1405 = vmatpush.msra.mxu0 0.0
  %1406 = vmatpush.msra.mxu0 0.0
  %1407 = vmatpush.msra.mxu0 0.0
  %1408 = vmatpush.msra.mxu0 0.0
  %1409 = vmatpush.msra.mxu0 0.0
  %1410 = vmatpush.msra.mxu0 0.0
  %1411 = vmatpush.msra.mxu0 0.0
  %1412 = vmatpush.msra.mxu0 0.0
  %1413 = vmatpush.msra.mxu0 0.0
  %1414 = vmatpush.msra.mxu0 0.0
  %1415 = vmatpush.msra.mxu0 %v28
  %1416 = vmatpush.msra.mxu0 %v21
  %1417 = vmatmul.f32.gmra.mxu0 %v1396
  %v1418 = vpop.f32.mrf.mxu0
  %v1419 = vadd.f32 0.0, %v1418
  %1420 = vmatmul.f32.gmra.mxu0 %v1399
  %v1421 = vpop.f32.mrf.mxu0
  %v1422 = vadd.f32 0.0, %v1421
  %1423 = vdwg.mxu0
  %1424 = vmatpush.msra.mxu0 0.0
  %1425 = vmatpush.msra.mxu0 0.0
  %1426 = vmatpush.msra.mxu0 0.0
  %1427 = vmatpush.msra.mxu0 0.0
  %1428 = vmatpush.msra.mxu0 0.0
  %1429 = vmatpush.msra.mxu0 0.0
  %1430 = vmatpush.msra.mxu0 0.0
  %1431 = vmatpush.msra.mxu0 0.0
  %1432 = vmatpush.msra.mxu0 0.0
  %1433 = vmatpush.msra.mxu0 0.0
  %1434 = vmatpush.msra.mxu0 0.0
  %1435 = vmatpush.msra.mxu0 0.0
  %1436 = vmatpush.msra.mxu0 0.0
  %1437 = vmatpush.msra.mxu0 0.0
  %1438 = vmatpush.msra.mxu0 %v29
  %1439 = vmatpush.msra.mxu0 %v22
  %1440 = vmatmul.f32.gmra.mxu0 %v1396
  %v1441 = vpop.f32.mrf.mxu0
  %v1442 = vadd.f32 0.0, %v1441
  %1443 = vmatmul.f32.gmra.mxu0 %v1399
  %v1444 = vpop.f32.mrf.mxu0
  %v1445 = vadd.f32 0.0, %v1444
  %1446 = vdwg.mxu0
  %1447 = vmatpush.msra.mxu0 0.0
  %1448 = vmatpush.msra.mxu0 0.0
  %1449 = vmatpush.msra.mxu0 0.0
  %1450 = vmatpush.msra.mxu0 0.0
  %1451 = vmatpush.msra.mxu0 0.0
  %1452 = vmatpush.msra.mxu0 0.0
  %1453 = vmatpush.msra.mxu0 0.0
  %1454 = vmatpush.msra.mxu0 0.0
  %1455 = vmatpush.msra.mxu0 0.0
  %1456 = vmatpush.msra.mxu0 0.0
  %1457 = vmatpush.msra.mxu0 0.0
  %1458 = vmatpush.msra.mxu0 0.0
  %1459 = vmatpush.msra.mxu0 0.0
  %1460 = vmatpush.msra.mxu0 0.0
  %1461 = vmatpush.msra.mxu0 %v30
  %1462 = vmatpush.msra.mxu0 %v23
  %1463 = vmatmul.f32.gmra.mxu0 %v1396
  %v1464 = vpop.f32.mrf.mxu0
  %v1465 = vadd.f32 0.0, %v1464
  %1466 = vmatmul.f32.gmra.mxu0 %v1399
  %v1467 = vpop.f32.mrf.mxu0
  %v1468 = vadd.f32 0.0, %v1467
  %1469 = vdwg.mxu0
  %1470 = vmatpush.msra.mxu0 0.0
  %1471 = vmatpush.msra.mxu0 0.0
  %1472 = vmatpush.msra.mxu0 0.0
  %1473 = vmatpush.msra.mxu0 0.0
  %1474 = vmatpush.msra.mxu0 0.0
  %1475 = vmatpush.msra.mxu0 0.0
  %1476 = vmatpush.msra.mxu0 0.0
  %1477 = vmatpush.msra.mxu0 0.0
  %1478 = vmatpush.msra.mxu0 0.0
  %1479 = vmatpush.msra.mxu0 0.0
  %1480 = vmatpush.msra.mxu0 0.0
  %1481 = vmatpush.msra.mxu0 0.0
  %1482 = vmatpush.msra.mxu0 0.0
  %1483 = vmatpush.msra.mxu0 0.0
  %1484 = vmatpush.msra.mxu0 %v31
  %1485 = vmatpush.msra.mxu0 %v24
  %1486 = vmatmul.f32.gmra.mxu0 %v1396
  %v1487 = vpop.f32.mrf.mxu0
  %v1488 = vadd.f32 0.0, %v1487
  %1489 = vmatmul.f32.gmra.mxu0 %v1399
  %v1490 = vpop.f32.mrf.mxu0
  %v1491 = vadd.f32 0.0, %v1490
  %1492 = vdwg.mxu0
  %1493 = vmatpush.msra.mxu0 0.0
  %1494 = vmatpush.msra.mxu0 0.0
  %1495 = vmatpush.msra.mxu0 0.0
  %1496 = vmatpush.msra.mxu0 0.0
  %1497 = vmatpush.msra.mxu0 0.0
  %1498 = vmatpush.msra.mxu0 0.0
  %1499 = vmatpush.msra.mxu0 0.0
  %1500 = vmatpush.msra.mxu0 0.0
  %1501 = vmatpush.msra.mxu0 0.0
  %1502 = vmatpush.msra.mxu0 0.0
  %1503 = vmatpush.msra.mxu0 0.0
  %1504 = vmatpush.msra.mxu0 0.0
  %1505 = vmatpush.msra.mxu0 0.0
  %1506 = vmatpush.msra.mxu0 0.0
  %1507 = vmatpush.msra.mxu0 %v32
  %1508 = vmatpush.msra.mxu0 %v25
  %1509 = vmatmul.f32.gmra.mxu0 %v1396
  %v1510 = vpop.f32.mrf.mxu0
  %v1511 = vadd.f32 0.0, %v1510
  %1512 = vmatmul.f32.gmra.mxu0 %v1399
  %v1513 = vpop.f32.mrf.mxu0
  %v1514 = vadd.f32 0.0, %v1513
  %1515 = vdwg.mxu0
  %1516 = vmatpush.msra.mxu0 0.0
  %1517 = vmatpush.msra.mxu0 0.0
  %1518 = vmatpush.msra.mxu0 0.0
  %1519 = vmatpush.msra.mxu0 0.0
  %1520 = vmatpush.msra.mxu0 0.0
  %1521 = vmatpush.msra.mxu0 0.0
  %1522 = vmatpush.msra.mxu0 0.0
  %1523 = vmatpush.msra.mxu0 0.0
  %1524 = vmatpush.msra.mxu0 0.0
  %1525 = vmatpush.msra.mxu0 0.0
  %1526 = vmatpush.msra.mxu0 0.0
  %1527 = vmatpush.msra.mxu0 0.0
  %1528 = vmatpush.msra.mxu0 0.0
  %1529 = vmatpush.msra.mxu0 0.0
  %1530 = vmatpush.msra.mxu0 %v33
  %1531 = vmatpush.msra.mxu0 %v26
  %1532 = vmatmul.f32.gmra.mxu0 %v1396
  %v1533 = vpop.f32.mrf.mxu0
  %v1534 = vadd.f32 0.0, %v1533
  %1535 = vmatmul.f32.gmra.mxu0 %v1399
  %v1536 = vpop.f32.mrf.mxu0
  %v1537 = vadd.f32 0.0, %v1536
  %1538 = vdwg.mxu0
  %1539 = vmatpush.msra.mxu0 0.0
  %1540 = vmatpush.msra.mxu0 0.0
  %1541 = vmatpush.msra.mxu0 0.0
  %1542 = vmatpush.msra.mxu0 0.0
  %1543 = vmatpush.msra.mxu0 0.0
  %1544 = vmatpush.msra.mxu0 0.0
  %1545 = vmatpush.msra.mxu0 0.0
  %1546 = vmatpush.msra.mxu0 0.0
  %1547 = vmatpush.msra.mxu0 0.0
  %1548 = vmatpush.msra.mxu0 0.0
  %1549 = vmatpush.msra.mxu0 0.0
  %1550 = vmatpush.msra.mxu0 0.0
  %1551 = vmatpush.msra.mxu0 0.0
  %1552 = vmatpush.msra.mxu0 0.0
  %1553 = vmatpush.msra.mxu0 %v34
  %1554 = vmatpush.msra.mxu0 %v27
  %1555 = vmatmul.f32.gmra.mxu0 %v1396
  %v1556 = vpop.f32.mrf.mxu0
  %v1557 = vadd.f32 0.0, %v1556
  %1558 = vmatmul.f32.gmra.mxu0 %v1399
  %v1559 = vpop.f32.mrf.mxu0
  %v1560 = vadd.f32 0.0, %v1559
  %1561 = vdwg.mxu0
  %s1562 = scalar_lea.vmem %s4, 16
  %v1563 = vld [vmem:[%s1562] sm:$0xff]
  %v1564 = vld [vmem:[%s1562 + $0x8] sm:$0xff]
  %v1566 = vsel %vm1394, %v1563, 0
  %v1569 = vsel %vm1394, %v1564, 0
  %1571 = vmatpush.msra.mxu0 0.0
  %1572 = vmatpush.msra.mxu0 0.0
  %1573 = vmatpush.msra.mxu0 0.0
  %1574 = vmatpush.msra.mxu0 0.0
  %1575 = vmatpush.msra.mxu0 0.0
  %1576 = vmatpush.msra.mxu0 0.0
  %1577 = vmatpush.msra.mxu0 0.0
  %1578 = vmatpush.msra.mxu0 0.0
  %1579 = vmatpush.msra.mxu0 0.0
  %1580 = vmatpush.msra.mxu0 0.0
  %1581 = vmatpush.msra.mxu0 0.0
  %1582 = vmatpush.msra.mxu0 0.0
  %1583 = vmatpush.msra.mxu0 0.0
  %1584 = vmatpush.msra.mxu0 0.0
  %1585 = vmatpush.msra.mxu0 %v28
  %1586 = vmatpush.msra.mxu0 %v21
  %1587 = vmatmul.f32.gmra.mxu0 %v1566
  %v1588 = vpop.f32.mrf.mxu0
  %v1589 = vadd.f32 0.0, %v1588
  %1590 = vmatmul.f32.gmra.mxu0 %v1569
  %v1591 = vpop.f32.mrf.mxu0
  %v1592 = vadd.f32 0.0, %v1591
  %1593 = vdwg.mxu0
  %1594 = vmatpush.msra.mxu0 0.0
  %1595 = vmatpush.msra.mxu0 0.0
  %1596 = vmatpush.msra.mxu0 0.0
  %1597 = vmatpush.msra.mxu0 0.0
  %1598 = vmatpush.msra.mxu0 0.0
  %1599 = vmatpush.msra.mxu0 0.0
  %1600 = vmatpush.msra.mxu0 0.0
  %1601 = vmatpush.msra.mxu0 0.0
  %1602 = vmatpush.msra.mxu0 0.0
  %1603 = vmatpush.msra.mxu0 0.0
  %1604 = vmatpush.msra.mxu0 0.0
  %1605 = vmatpush.msra.mxu0 0.0
  %1606 = vmatpush.msra.mxu0 0.0
  %1607 = vmatpush.msra.mxu0 0.0
  %1608 = vmatpush.msra.mxu0 %v29
  %1609 = vmatpush.msra.mxu0 %v22
  %1610 = vmatmul.f32.gmra.mxu0 %v1566
  %v1611 = vpop.f32.mrf.mxu0
  %v1612 = vadd.f32 0.0, %v1611
  %1613 = vmatmul.f32.gmra.mxu0 %v1569
  %v1614 = vpop.f32.mrf.mxu0
  %v1615 = vadd.f32 0.0, %v1614
  %1616 = vdwg.mxu0
  %1617 = vmatpush.msra.mxu0 0.0
  %1618 = vmatpush.msra.mxu0 0.0
  %1619 = vmatpush.msra.mxu0 0.0
  %1620 = vmatpush.msra.mxu0 0.0
  %1621 = vmatpush.msra.mxu0 0.0
  %1622 = vmatpush.msra.mxu0 0.0
  %1623 = vmatpush.msra.mxu0 0.0
  %1624 = vmatpush.msra.mxu0 0.0
  %1625 = vmatpush.msra.mxu0 0.0
  %1626 = vmatpush.msra.mxu0 0.0
  %1627 = vmatpush.msra.mxu0 0.0
  %1628 = vmatpush.msra.mxu0 0.0
  %1629 = vmatpush.msra.mxu0 0.0
  %1630 = vmatpush.msra.mxu0 0.0
  %1631 = vmatpush.msra.mxu0 %v30
  %1632 = vmatpush.msra.mxu0 %v23
  %1633 = vmatmul.f32.gmra.mxu0 %v1566
  %v1634 = vpop.f32.mrf.mxu0
  %v1635 = vadd.f32 0.0, %v1634
  %1636 = vmatmul.f32.gmra.mxu0 %v1569
  %v1637 = vpop.f32.mrf.mxu0
  %v1638 = vadd.f32 0.0, %v1637
  %1639 = vdwg.mxu0
  %1640 = vmatpush.msra.mxu0 0.0
  %1641 = vmatpush.msra.mxu0 0.0
  %1642 = vmatpush.msra.mxu0 0.0
  %1643 = vmatpush.msra.mxu0 0.0
  %1644 = vmatpush.msra.mxu0 0.0
  %1645 = vmatpush.msra.mxu0 0.0
  %1646 = vmatpush.msra.mxu0 0.0
  %1647 = vmatpush.msra.mxu0 0.0
  %1648 = vmatpush.msra.mxu0 0.0
  %1649 = vmatpush.msra.mxu0 0.0
  %1650 = vmatpush.msra.mxu0 0.0
  %1651 = vmatpush.msra.mxu0 0.0
  %1652 = vmatpush.msra.mxu0 0.0
  %1653 = vmatpush.msra.mxu0 0.0
  %1654 = vmatpush.msra.mxu0 %v31
  %1655 = vmatpush.msra.mxu0 %v24
  %1656 = vmatmul.f32.gmra.mxu0 %v1566
  %v1657 = vpop.f32.mrf.mxu0
  %v1658 = vadd.f32 0.0, %v1657
  %1659 = vmatmul.f32.gmra.mxu0 %v1569
  %v1660 = vpop.f32.mrf.mxu0
  %v1661 = vadd.f32 0.0, %v1660
  %1662 = vdwg.mxu0
  %1663 = vmatpush.msra.mxu0 0.0
  %1664 = vmatpush.msra.mxu0 0.0
  %1665 = vmatpush.msra.mxu0 0.0
  %1666 = vmatpush.msra.mxu0 0.0
  %1667 = vmatpush.msra.mxu0 0.0
  %1668 = vmatpush.msra.mxu0 0.0
  %1669 = vmatpush.msra.mxu0 0.0
  %1670 = vmatpush.msra.mxu0 0.0
  %1671 = vmatpush.msra.mxu0 0.0
  %1672 = vmatpush.msra.mxu0 0.0
  %1673 = vmatpush.msra.mxu0 0.0
  %1674 = vmatpush.msra.mxu0 0.0
  %1675 = vmatpush.msra.mxu0 0.0
  %1676 = vmatpush.msra.mxu0 0.0
  %1677 = vmatpush.msra.mxu0 %v32
  %1678 = vmatpush.msra.mxu0 %v25
  %1679 = vmatmul.f32.gmra.mxu0 %v1566
  %v1680 = vpop.f32.mrf.mxu0
  %v1681 = vadd.f32 0.0, %v1680
  %1682 = vmatmul.f32.gmra.mxu0 %v1569
  %v1683 = vpop.f32.mrf.mxu0
  %v1684 = vadd.f32 0.0, %v1683
  %1685 = vdwg.mxu0
  %1686 = vmatpush.msra.mxu0 0.0
  %1687 = vmatpush.msra.mxu0 0.0
  %1688 = vmatpush.msra.mxu0 0.0
  %1689 = vmatpush.msra.mxu0 0.0
  %1690 = vmatpush.msra.mxu0 0.0
  %1691 = vmatpush.msra.mxu0 0.0
  %1692 = vmatpush.msra.mxu0 0.0
  %1693 = vmatpush.msra.mxu0 0.0
  %1694 = vmatpush.msra.mxu0 0.0
  %1695 = vmatpush.msra.mxu0 0.0
  %1696 = vmatpush.msra.mxu0 0.0
  %1697 = vmatpush.msra.mxu0 0.0
  %1698 = vmatpush.msra.mxu0 0.0
  %1699 = vmatpush.msra.mxu0 0.0
  %1700 = vmatpush.msra.mxu0 %v33
  %1701 = vmatpush.msra.mxu0 %v26
  %1702 = vmatmul.f32.gmra.mxu0 %v1566
  %v1703 = vpop.f32.mrf.mxu0
  %v1704 = vadd.f32 0.0, %v1703
  %1705 = vmatmul.f32.gmra.mxu0 %v1569
  %v1706 = vpop.f32.mrf.mxu0
  %v1707 = vadd.f32 0.0, %v1706
  %1708 = vdwg.mxu0
  %1709 = vmatpush.msra.mxu0 0.0
  %1710 = vmatpush.msra.mxu0 0.0
  %1711 = vmatpush.msra.mxu0 0.0
  %1712 = vmatpush.msra.mxu0 0.0
  %1713 = vmatpush.msra.mxu0 0.0
  %1714 = vmatpush.msra.mxu0 0.0
  %1715 = vmatpush.msra.mxu0 0.0
  %1716 = vmatpush.msra.mxu0 0.0
  %1717 = vmatpush.msra.mxu0 0.0
  %1718 = vmatpush.msra.mxu0 0.0
  %1719 = vmatpush.msra.mxu0 0.0
  %1720 = vmatpush.msra.mxu0 0.0
  %1721 = vmatpush.msra.mxu0 0.0
  %1722 = vmatpush.msra.mxu0 0.0
  %1723 = vmatpush.msra.mxu0 %v34
  %1724 = vmatpush.msra.mxu0 %v27
  %1725 = vmatmul.f32.gmra.mxu0 %v1566
  %v1726 = vpop.f32.mrf.mxu0
  %v1727 = vadd.f32 0.0, %v1726
  %1728 = vmatmul.f32.gmra.mxu0 %v1569
  %v1729 = vpop.f32.mrf.mxu0
  %v1730 = vadd.f32 0.0, %v1729
  %1731 = vdwg.mxu0
  %v1734 = vperm.slane %v488, 0
  %v1735 = vperm.slane %v488, 2
  %v1736 = vperm.slane %v488, 4
  %v1737 = vperm.slane %v488, 6
  %v1738 = vperm.slane %v489, 0
  %v1739 = vperm.slane %v489, 2
  %v1740 = vperm.slane %v489, 4
  %v1748 = vmul.f32 %v1419, %v1734
  %v1749 = vmul.f32 %v1442, %v1735
  %v1750 = vmul.f32 %v1465, %v1736
  %v1751 = vmul.f32 %v1488, %v1737
  %v1752 = vmul.f32 %v1511, %v1738
  %v1753 = vmul.f32 %v1534, %v1739
  %v1754 = vmul.f32 %v1557, %v1740
  %v1757 = vperm.slane %v939, 0
  %v1758 = vperm.slane %v939, 2
  %v1759 = vperm.slane %v939, 4
  %v1760 = vperm.slane %v939, 6
  %v1761 = vperm.slane %v940, 0
  %v1762 = vperm.slane %v940, 2
  %v1763 = vperm.slane %v940, 4
  %v1771 = vmul.f32 %v1419, %v1757
  %v1772 = vmul.f32 %v1442, %v1758
  %v1773 = vmul.f32 %v1465, %v1759
  %v1774 = vmul.f32 %v1488, %v1760
  %v1775 = vmul.f32 %v1511, %v1761
  %v1776 = vmul.f32 %v1534, %v1762
  %v1777 = vmul.f32 %v1557, %v1763
  %v1785 = vrot.slane %v1771, 1
  %v1786 = vrot.slane %v1772, 1
  %v1787 = vrot.slane %v1773, 1
  %v1788 = vrot.slane %v1774, 1
  %v1789 = vrot.slane %v1775, 1
  %v1790 = vrot.slane %v1776, 1
  %v1791 = vrot.slane %v1777, 1
  %v1799 = vadd.f32 %v1748, %v1785
  %v1800 = vadd.f32 %v1749, %v1786
  %v1801 = vadd.f32 %v1750, %v1787
  %v1802 = vadd.f32 %v1751, %v1788
  %v1803 = vadd.f32 %v1752, %v1789
  %v1804 = vadd.f32 %v1753, %v1790
  %v1805 = vadd.f32 %v1754, %v1791
  %v1808 = vperm.slane %v1390, 0
  %v1809 = vperm.slane %v1390, 2
  %v1810 = vperm.slane %v1390, 4
  %v1811 = vperm.slane %v1390, 6
  %v1812 = vperm.slane %v1391, 0
  %v1813 = vperm.slane %v1391, 2
  %v1814 = vperm.slane %v1391, 4
  %v1822 = vmul.f32 %v1419, %v1808
  %v1823 = vmul.f32 %v1442, %v1809
  %v1824 = vmul.f32 %v1465, %v1810
  %v1825 = vmul.f32 %v1488, %v1811
  %v1826 = vmul.f32 %v1511, %v1812
  %v1827 = vmul.f32 %v1534, %v1813
  %v1828 = vmul.f32 %v1557, %v1814
  %v1836 = vrot.slane %v1822, 2
  %v1837 = vrot.slane %v1823, 2
  %v1838 = vrot.slane %v1824, 2
  %v1839 = vrot.slane %v1825, 2
  %v1840 = vrot.slane %v1826, 2
  %v1841 = vrot.slane %v1827, 2
  %v1842 = vrot.slane %v1828, 2
  %v1850 = vadd.f32 %v1799, %v1836
  %v1851 = vadd.f32 %v1800, %v1837
  %v1852 = vadd.f32 %v1801, %v1838
  %v1853 = vadd.f32 %v1802, %v1839
  %v1854 = vadd.f32 %v1803, %v1840
  %v1855 = vadd.f32 %v1804, %v1841
  %v1856 = vadd.f32 %v1805, %v1842
  %v1864 = vrot.slane %v1419, 3
  %v1865 = vrot.slane %v1442, 3
  %v1866 = vrot.slane %v1465, 3
  %v1867 = vrot.slane %v1488, 3
  %v1868 = vrot.slane %v1511, 3
  %v1869 = vrot.slane %v1534, 3
  %v1870 = vrot.slane %v1557, 3
  %v1878 = vadd.f32 %v1850, %v1864
  %v1879 = vadd.f32 %v1851, %v1865
  %v1880 = vadd.f32 %v1852, %v1866
  %v1881 = vadd.f32 %v1853, %v1867
  %v1882 = vadd.f32 %v1854, %v1868
  %v1883 = vadd.f32 %v1855, %v1869
  %v1884 = vadd.f32 %v1856, %v1870
  %v1885 = vperm.slane %v488, 1
  %v1886 = vperm.slane %v488, 3
  %v1887 = vperm.slane %v488, 5
  %v1888 = vperm.slane %v488, 7
  %v1889 = vperm.slane %v489, 1
  %v1890 = vperm.slane %v489, 3
  %v1891 = vperm.slane %v489, 5
  %v1899 = vmul.f32 %v1589, %v1885
  %v1900 = vmul.f32 %v1612, %v1886
  %v1901 = vmul.f32 %v1635, %v1887
  %v1902 = vmul.f32 %v1658, %v1888
  %v1903 = vmul.f32 %v1681, %v1889
  %v1904 = vmul.f32 %v1704, %v1890
  %v1905 = vmul.f32 %v1727, %v1891
  %v1906 = vperm.slane %v939, 1
  %v1907 = vperm.slane %v939, 3
  %v1908 = vperm.slane %v939, 5
  %v1909 = vperm.slane %v939, 7
  %v1910 = vperm.slane %v940, 1
  %v1911 = vperm.slane %v940, 3
  %v1912 = vperm.slane %v940, 5
  %v1920 = vmul.f32 %v1589, %v1906
  %v1921 = vmul.f32 %v1612, %v1907
  %v1922 = vmul.f32 %v1635, %v1908
  %v1923 = vmul.f32 %v1658, %v1909
  %v1924 = vmul.f32 %v1681, %v1910
  %v1925 = vmul.f32 %v1704, %v1911
  %v1926 = vmul.f32 %v1727, %v1912
  %v1934 = vrot.slane %v1920, 1
  %v1935 = vrot.slane %v1921, 1
  %v1936 = vrot.slane %v1922, 1
  %v1937 = vrot.slane %v1923, 1
  %v1938 = vrot.slane %v1924, 1
  %v1939 = vrot.slane %v1925, 1
  %v1940 = vrot.slane %v1926, 1
  %v1948 = vadd.f32 %v1899, %v1934
  %v1949 = vadd.f32 %v1900, %v1935
  %v1950 = vadd.f32 %v1901, %v1936
  %v1951 = vadd.f32 %v1902, %v1937
  %v1952 = vadd.f32 %v1903, %v1938
  %v1953 = vadd.f32 %v1904, %v1939
  %v1954 = vadd.f32 %v1905, %v1940
  %v1955 = vperm.slane %v1390, 1
  %v1956 = vperm.slane %v1390, 3
  %v1957 = vperm.slane %v1390, 5
  %v1958 = vperm.slane %v1390, 7
  %v1959 = vperm.slane %v1391, 1
  %v1960 = vperm.slane %v1391, 3
  %v1961 = vperm.slane %v1391, 5
  %v1969 = vmul.f32 %v1589, %v1955
  %v1970 = vmul.f32 %v1612, %v1956
  %v1971 = vmul.f32 %v1635, %v1957
  %v1972 = vmul.f32 %v1658, %v1958
  %v1973 = vmul.f32 %v1681, %v1959
  %v1974 = vmul.f32 %v1704, %v1960
  %v1975 = vmul.f32 %v1727, %v1961
  %v1983 = vrot.slane %v1969, 2
  %v1984 = vrot.slane %v1970, 2
  %v1985 = vrot.slane %v1971, 2
  %v1986 = vrot.slane %v1972, 2
  %v1987 = vrot.slane %v1973, 2
  %v1988 = vrot.slane %v1974, 2
  %v1989 = vrot.slane %v1975, 2
  %v1997 = vadd.f32 %v1948, %v1983
  %v1998 = vadd.f32 %v1949, %v1984
  %v1999 = vadd.f32 %v1950, %v1985
  %v2000 = vadd.f32 %v1951, %v1986
  %v2001 = vadd.f32 %v1952, %v1987
  %v2002 = vadd.f32 %v1953, %v1988
  %v2003 = vadd.f32 %v1954, %v1989
  %v2011 = vrot.slane %v1589, 3
  %v2012 = vrot.slane %v1612, 3
  %v2013 = vrot.slane %v1635, 3
  %v2014 = vrot.slane %v1658, 3
  %v2015 = vrot.slane %v1681, 3
  %v2016 = vrot.slane %v1704, 3
  %v2017 = vrot.slane %v1727, 3
  %v2025 = vadd.f32 %v1997, %v2011
  %v2026 = vadd.f32 %v1998, %v2012
  %v2027 = vadd.f32 %v1999, %v2013
  %v2028 = vadd.f32 %v2000, %v2014
  %v2029 = vadd.f32 %v2001, %v2015
  %v2030 = vadd.f32 %v2002, %v2016
  %v2031 = vadd.f32 %v2003, %v2017
  %v2039 = vrot.slane %v2025, 7
  %v2040 = vrot.slane %v2026, 7
  %v2041 = vrot.slane %v2027, 7
  %v2042 = vrot.slane %v2028, 7
  %v2043 = vrot.slane %v2029, 7
  %v2044 = vrot.slane %v2030, 7
  %v2045 = vrot.slane %v2031, 7
  %vm2053 = vcmask 1040384
  %v2054 = vsel %vm2053, %v1878, %v2039
  %v2055 = vsel %vm2053, %v1879, %v2040
  %v2056 = vsel %vm2053, %v1880, %v2041
  %v2057 = vsel %vm2053, %v1881, %v2042
  %v2058 = vsel %vm2053, %v1882, %v2043
  %v2059 = vsel %vm2053, %v1883, %v2044
  %v2060 = vsel %vm2053, %v1884, %v2045
  %v2068 = vrot.slane %v2055, 6
  %v2069 = vrot.slane %v2056, 4
  %v2070 = vrot.slane %v2057, 2
  %v2071 = vrot.slane %v2059, 6
  %v2072 = vrot.slane %v2060, 4
  %v2073 = vsel %vm478, %v2054, %v2068
  %v2074 = vsel %vm480, %v2069, %v2070
  %v2075 = vsel %vm482, %v2073, %v2074
  %v2076 = vsel %vm478, %v2058, %v2071
  %v2077 = vsel %vm482, %v2076, %v2072
  %2080 = vst [vmem:[%s5] sm:$0xff] %v2075
  %vm2081 = vcmask 1043458
  %vm2082 = vmor %vm2081, %vm478
  %vm2083 = vcmask 78852
  %vm2084 = vmor %vm2083, %vm2082
  %2085 = vst.msk [vmem:[%s5 + $0x8] sm:$0x3f] %vm2084, %v2077
  %v2093 = vrot.slane %v1878, 4
  %v2094 = vrot.slane %v1879, 4
  %v2095 = vrot.slane %v1880, 4
  %v2096 = vrot.slane %v1881, 4
  %v2097 = vrot.slane %v1882, 4
  %v2098 = vrot.slane %v1883, 4
  %v2099 = vrot.slane %v1884, 4
  %v2107 = vrot.slane %v2025, 3
  %v2108 = vrot.slane %v2026, 3
  %v2109 = vrot.slane %v2027, 3
  %v2110 = vrot.slane %v2028, 3
  %v2111 = vrot.slane %v2029, 3
  %v2112 = vrot.slane %v2030, 3
  %v2113 = vrot.slane %v2031, 3
  %v2121 = vsel %vm2053, %v2093, %v2107
  %v2122 = vsel %vm2053, %v2094, %v2108
  %v2123 = vsel %vm2053, %v2095, %v2109
  %v2124 = vsel %vm2053, %v2096, %v2110
  %v2125 = vsel %vm2053, %v2097, %v2111
  %v2126 = vsel %vm2053, %v2098, %v2112
  %v2127 = vsel %vm2053, %v2099, %v2113
  %v2135 = vrot.slane %v2122, 6
  %v2136 = vrot.slane %v2123, 4
  %v2137 = vrot.slane %v2124, 2
  %v2138 = vrot.slane %v2126, 6
  %v2139 = vrot.slane %v2127, 4
  %v2140 = vsel %vm478, %v2121, %v2135
  %v2141 = vsel %vm480, %v2136, %v2137
  %v2142 = vsel %vm482, %v2140, %v2141
  %v2143 = vsel %vm478, %v2125, %v2138
  %v2144 = vsel %vm482, %v2143, %v2139
  %s2147 = scalar_lea.vmem %s5, 14
  %2148 = vst [vmem:[%s2147] sm:$0xff] %v2142
  %2149 = vst.msk [vmem:[%s2147 + $0x8] sm:$0x3f] %vm2084, %v2144
  %v2150 = vmul.f32 %v1422, %v1734
  %v2151 = vmul.f32 %v1445, %v1735
  %v2152 = vmul.f32 %v1468, %v1736
  %v2153 = vmul.f32 %v1491, %v1737
  %v2154 = vmul.f32 %v1514, %v1738
  %v2155 = vmul.f32 %v1537, %v1739
  %v2156 = vmul.f32 %v1560, %v1740
  %v2157 = vmul.f32 %v1422, %v1757
  %v2158 = vmul.f32 %v1445, %v1758
  %v2159 = vmul.f32 %v1468, %v1759
  %v2160 = vmul.f32 %v1491, %v1760
  %v2161 = vmul.f32 %v1514, %v1761
  %v2162 = vmul.f32 %v1537, %v1762
  %v2163 = vmul.f32 %v1560, %v1763
  %v2171 = vrot.slane %v2157, 1
  %v2172 = vrot.slane %v2158, 1
  %v2173 = vrot.slane %v2159, 1
  %v2174 = vrot.slane %v2160, 1
  %v2175 = vrot.slane %v2161, 1
  %v2176 = vrot.slane %v2162, 1
  %v2177 = vrot.slane %v2163, 1
  %v2185 = vadd.f32 %v2150, %v2171
  %v2186 = vadd.f32 %v2151, %v2172
  %v2187 = vadd.f32 %v2152, %v2173
  %v2188 = vadd.f32 %v2153, %v2174
  %v2189 = vadd.f32 %v2154, %v2175
  %v2190 = vadd.f32 %v2155, %v2176
  %v2191 = vadd.f32 %v2156, %v2177
  %v2192 = vmul.f32 %v1422, %v1808
  %v2193 = vmul.f32 %v1445, %v1809
  %v2194 = vmul.f32 %v1468, %v1810
  %v2195 = vmul.f32 %v1491, %v1811
  %v2196 = vmul.f32 %v1514, %v1812
  %v2197 = vmul.f32 %v1537, %v1813
  %v2198 = vmul.f32 %v1560, %v1814
  %v2206 = vrot.slane %v2192, 2
  %v2207 = vrot.slane %v2193, 2
  %v2208 = vrot.slane %v2194, 2
  %v2209 = vrot.slane %v2195, 2
  %v2210 = vrot.slane %v2196, 2
  %v2211 = vrot.slane %v2197, 2
  %v2212 = vrot.slane %v2198, 2
  %v2220 = vadd.f32 %v2185, %v2206
  %v2221 = vadd.f32 %v2186, %v2207
  %v2222 = vadd.f32 %v2187, %v2208
  %v2223 = vadd.f32 %v2188, %v2209
  %v2224 = vadd.f32 %v2189, %v2210
  %v2225 = vadd.f32 %v2190, %v2211
  %v2226 = vadd.f32 %v2191, %v2212
  %v2234 = vrot.slane %v1422, 3
  %v2235 = vrot.slane %v1445, 3
  %v2236 = vrot.slane %v1468, 3
  %v2237 = vrot.slane %v1491, 3
  %v2238 = vrot.slane %v1514, 3
  %v2239 = vrot.slane %v1537, 3
  %v2240 = vrot.slane %v1560, 3
  %v2248 = vadd.f32 %v2220, %v2234
  %v2249 = vadd.f32 %v2221, %v2235
  %v2250 = vadd.f32 %v2222, %v2236
  %v2251 = vadd.f32 %v2223, %v2237
  %v2252 = vadd.f32 %v2224, %v2238
  %v2253 = vadd.f32 %v2225, %v2239
  %v2254 = vadd.f32 %v2226, %v2240
  %v2255 = vmul.f32 %v1592, %v1885
  %v2256 = vmul.f32 %v1615, %v1886
  %v2257 = vmul.f32 %v1638, %v1887
  %v2258 = vmul.f32 %v1661, %v1888
  %v2259 = vmul.f32 %v1684, %v1889
  %v2260 = vmul.f32 %v1707, %v1890
  %v2261 = vmul.f32 %v1730, %v1891
  %v2262 = vmul.f32 %v1592, %v1906
  %v2263 = vmul.f32 %v1615, %v1907
  %v2264 = vmul.f32 %v1638, %v1908
  %v2265 = vmul.f32 %v1661, %v1909
  %v2266 = vmul.f32 %v1684, %v1910
  %v2267 = vmul.f32 %v1707, %v1911
  %v2268 = vmul.f32 %v1730, %v1912
  %v2276 = vrot.slane %v2262, 1
  %v2277 = vrot.slane %v2263, 1
  %v2278 = vrot.slane %v2264, 1
  %v2279 = vrot.slane %v2265, 1
  %v2280 = vrot.slane %v2266, 1
  %v2281 = vrot.slane %v2267, 1
  %v2282 = vrot.slane %v2268, 1
  %v2290 = vadd.f32 %v2255, %v2276
  %v2291 = vadd.f32 %v2256, %v2277
  %v2292 = vadd.f32 %v2257, %v2278
  %v2293 = vadd.f32 %v2258, %v2279
  %v2294 = vadd.f32 %v2259, %v2280
  %v2295 = vadd.f32 %v2260, %v2281
  %v2296 = vadd.f32 %v2261, %v2282
  %v2297 = vmul.f32 %v1592, %v1955
  %v2298 = vmul.f32 %v1615, %v1956
  %v2299 = vmul.f32 %v1638, %v1957
  %v2300 = vmul.f32 %v1661, %v1958
  %v2301 = vmul.f32 %v1684, %v1959
  %v2302 = vmul.f32 %v1707, %v1960
  %v2303 = vmul.f32 %v1730, %v1961
  %v2311 = vrot.slane %v2297, 2
  %v2312 = vrot.slane %v2298, 2
  %v2313 = vrot.slane %v2299, 2
  %v2314 = vrot.slane %v2300, 2
  %v2315 = vrot.slane %v2301, 2
  %v2316 = vrot.slane %v2302, 2
  %v2317 = vrot.slane %v2303, 2
  %v2325 = vadd.f32 %v2290, %v2311
  %v2326 = vadd.f32 %v2291, %v2312
  %v2327 = vadd.f32 %v2292, %v2313
  %v2328 = vadd.f32 %v2293, %v2314
  %v2329 = vadd.f32 %v2294, %v2315
  %v2330 = vadd.f32 %v2295, %v2316
  %v2331 = vadd.f32 %v2296, %v2317
  %v2339 = vrot.slane %v1592, 3
  %v2340 = vrot.slane %v1615, 3
  %v2341 = vrot.slane %v1638, 3
  %v2342 = vrot.slane %v1661, 3
  %v2343 = vrot.slane %v1684, 3
  %v2344 = vrot.slane %v1707, 3
  %v2345 = vrot.slane %v1730, 3
  %v2353 = vadd.f32 %v2325, %v2339
  %v2354 = vadd.f32 %v2326, %v2340
  %v2355 = vadd.f32 %v2327, %v2341
  %v2356 = vadd.f32 %v2328, %v2342
  %v2357 = vadd.f32 %v2329, %v2343
  %v2358 = vadd.f32 %v2330, %v2344
  %v2359 = vadd.f32 %v2331, %v2345
  %v2367 = vrot.slane %v2353, 7
  %v2368 = vrot.slane %v2354, 7
  %v2369 = vrot.slane %v2355, 7
  %v2370 = vrot.slane %v2356, 7
  %v2371 = vrot.slane %v2357, 7
  %v2372 = vrot.slane %v2358, 7
  %v2373 = vrot.slane %v2359, 7
  %v2381 = vsel %vm2053, %v2248, %v2367
  %v2382 = vsel %vm2053, %v2249, %v2368
  %v2383 = vsel %vm2053, %v2250, %v2369
  %v2384 = vsel %vm2053, %v2251, %v2370
  %v2385 = vsel %vm2053, %v2252, %v2371
  %v2386 = vsel %vm2053, %v2253, %v2372
  %v2387 = vsel %vm2053, %v2254, %v2373
  %v2395 = vrot.slane %v2382, 6
  %v2396 = vrot.slane %v2383, 4
  %v2397 = vrot.slane %v2384, 2
  %v2398 = vrot.slane %v2386, 6
  %v2399 = vrot.slane %v2387, 4
  %v2400 = vsel %vm478, %v2381, %v2395
  %v2401 = vsel %vm480, %v2396, %v2397
  %v2402 = vsel %vm482, %v2400, %v2401
  %v2403 = vsel %vm478, %v2385, %v2398
  %v2404 = vsel %vm482, %v2403, %v2399
  %s2407 = scalar_lea.vmem %s5, 28
  %2408 = vst [vmem:[%s2407] sm:$0xff] %v2402
  %2409 = vst.msk [vmem:[%s2407 + $0x8] sm:$0x3f] %vm2084, %v2404
  // Predicated region
  $region22: #{fwd.3} parent=0 // pred_check
    _
  $region23: #{fwd.3} parent=0 // pred_check_branch
    %2411 = sbr.rel (0) target = $region25
  $region24: #{fwd.3} parent=0 // pred_region
    _
  $region25: #{fwd.3} parent=0 // pred_fallthru
    _
  // Predicated region
  $region26: #{fwd.3} parent=0 // pred_check
    _
  $region27: #{fwd.3} parent=0 // pred_check_branch
    %2413 = sbr.rel (0) target = $region29
  $region28: #{fwd.3} parent=0 // pred_region
    _
  $region29: #{fwd.3} parent=0 // pred_fallthru
    _

</llo_original>
